<compile_context>
chip_gen: v7x
topology: tpu7x:2x2x1
jax: 0.10.0
libtpu: 0.0.40
codegen_flags: <defaults>
</compile_context>

<pallas_src>
import jax
import jax.numpy as jnp
from jax import lax
from jax.experimental import pallas as pl
from jax.experimental.pallas import tpu as pltpu


def pointer_net_kernel(x_ref, gum_ref,
                       wie_ref, whe_ref, be_ref,
                       wid_ref, whd_ref, bd_ref,
                       idx_ref,
                       xw_ref, enc_ref):
    S, B, _ = gum_ref.shape          # gumbel: (steps, B, S)
    H = whe_ref.shape[0]
    f32 = jnp.float32
    bf16 = jnp.bfloat16

    # Hoisted (tiny) weight loads; recurrent weights stay resident as bf16.
    whe = whe_ref[...]                                    # (H, 4H) bf16
    wid = wid_ref[...]                                    # (H, 4H) bf16
    whd = whd_ref[...]                                    # (H, 4H) bf16
    bd_full = jnp.broadcast_to(bd_ref[...], (B, 4 * H))   # bias broadcast hoisted
    col_iota = lax.broadcasted_iota(jnp.int32, (B, S), 1)

    # ---- encoder input projection hoisted out of the recurrence ------------
    # one (S*B, D) @ (D, 4H) matmul (bf16 in, f32 accumulate) + bias, in VMEM.
    xw_ref[...] = (jnp.dot(x_ref[...].astype(bf16), wie_ref[...],
                           preferred_element_type=f32)
                   + be_ref[...])                         # (S*B, 4H) f32

    def lstm_gates(gates, c):
        # PyTorch gate order (i, f, g, o).  With H=32 these are 32-lane slices
        # of a 128-lane vreg; negligible at this size (make 4H lane-aligned or
        # reshape gates to (B,4,H) only if H is scaled up).
        i = jax.nn.sigmoid(gates[:, 0 * H:1 * H])
        f = jax.nn.sigmoid(gates[:, 1 * H:2 * H])
        g = jnp.tanh(gates[:, 2 * H:3 * H])
        o = jax.nn.sigmoid(gates[:, 3 * H:4 * H])
        c_new = f * c + i * g
        h_new = o * jnp.tanh(c_new)
        return h_new, c_new

    # ---------------- encoder LSTM (fully unrolled, S static) ---------------
    h = jnp.zeros((B, H), f32)
    c = jnp.zeros((B, H), f32)
    for t in range(S):
        gates = (xw_ref[t * B:(t + 1) * B, :]
                 + jnp.dot(h.astype(bf16), whe, preferred_element_type=f32))
        h, c = lstm_gates(gates, c)
        enc_ref[:, t:t + 1, :] = h[:, None, :]            # (B,1,H) VMEM store

    # ---------------- decoder LSTMCell + pointer sampling -------------------
    dec_h, dec_c = h, c                                   # (h[-1], c[-1])
    dec_in = jnp.zeros((B, H), f32)
    mask = jnp.zeros((B, S), f32)
    for t in range(S):
        gates = (jnp.dot(dec_in.astype(bf16), wid, preferred_element_type=f32)
                 + jnp.dot(dec_h.astype(bf16), whd, preferred_element_type=f32)
                 + bd_full)
        dec_h, dec_c = lstm_gates(gates, dec_c)

        enc = enc_ref[...]                                # (B, S, H) from VMEM
        # scores[b, s] = <enc[b, s, :], dec_h[b, :]>
        # TODO(synk): for large H move this lane-reduce onto the MXU (batched
        # dot / enc stored transposed); at H=32 the VPU/XLU reduce is fine.
        scores = jnp.sum(enc * dec_h[:, None, :], axis=-1)           # (B, S)
        scores = jnp.where(mask > 0.0, f32(-1e30), scores)           # masked_fill

        # multinomial(softmax(scores)) == argmax(scores + gumbel)
        combined = scores + gum_ref[t]                               # (B, S)
        # max + first-index select (kept instead of jnp.argmax for guaranteed
        # Mosaic lowering; identical lowest-index tie-break).
        mx = jnp.max(combined, axis=1, keepdims=True)
        idx = jnp.min(jnp.where(combined >= mx, col_iota, S), axis=1)  # (B,)

        onehot = (col_iota == idx[:, None]).astype(f32)              # (B, S)
        mask = jnp.maximum(mask, onehot)
        dec_in = jnp.sum(onehot[:, :, None] * enc, axis=1)           # (B, H)

        idx_ref[t:t + 1, :] = idx[None, :]                # record step t


def pointer_net_forward(x, gumbel, params):
    """x: (B,S,D) f32, gumbel: (S,B,S) f32  ->  (B,S) int32 pointer indices."""
    B, S, D = x.shape
    H = params["w_hh_enc_t"].shape[0]
    bf16 = jnp.bfloat16

    # time-major + flattened so the encoder input projection is one matmul
    x_tm = jnp.transpose(x, (1, 0, 2)).reshape(S * B, D)

    inputs = (x_tm, gumbel,
              params["w_ih_enc_t"].astype(bf16), params["w_hh_enc_t"].astype(bf16),
              params["b_enc"],
              params["w_ih_dec_t"].astype(bf16), params["w_hh_dec_t"].astype(bf16),
              params["b_dec"])
    vmem = pl.BlockSpec(memory_space=pltpu.MemorySpace.VMEM)

    idx_tm = pl.pallas_call(
        pointer_net_kernel,
        out_shape=jax.ShapeDtypeStruct((S, B), jnp.int32),
        in_specs=[vmem] * len(inputs),
        out_specs=vmem,
        scratch_shapes=[pltpu.VMEM((S * B, 4 * H), jnp.float32),   # hoisted x @ W_ih
                        pltpu.VMEM((B, S, H), jnp.float32)],       # encoder outputs
        compiler_params=pltpu.CompilerParams(vmem_limit_bytes=32 * 1024 * 1024),
    )(*inputs)
    return idx_tm.T                                       # (B, S)


def init_params(key, input_dim, hidden_dim):
    """Deterministic init matching PyTorch LSTM/LSTMCell parameter shapes."""
    H = hidden_dim
    bound = 1.0 / (H ** 0.5)
    ks = jax.random.split(key, 8)
    u = lambda k, shape: jax.random.uniform(k, shape, jnp.float32, -bound, bound)
    w_ih_enc = u(ks[0], (4 * H, input_dim))
    w_hh_enc = u(ks[1], (4 * H, H))
    b_ih_enc = u(ks[2], (4 * H,))
    b_hh_enc = u(ks[3], (4 * H,))
    w_ih_dec = u(ks[4], (4 * H, H))
    w_hh_dec = u(ks[5], (4 * H, H))
    b_ih_dec = u(ks[6], (4 * H,))
    b_hh_dec = u(ks[7], (4 * H,))
    # NOTE: self.pointer / self.attn exist in __init__ but are unused in forward.
    return {
        "w_ih_enc_t": w_ih_enc.T,                        # (D, 4H)
        "w_hh_enc_t": w_hh_enc.T,                        # (H, 4H)
        "b_enc": (b_ih_enc + b_hh_enc).reshape(1, 4 * H),
        "w_ih_dec_t": w_ih_dec.T,                        # (H, 4H)
        "w_hh_dec_t": w_hh_dec.T,                        # (H, 4H)
        "b_dec": (b_ih_dec + b_hh_dec).reshape(1, 4 * H),
    }


if __name__ == "__main__":
    B, S, D, H = 2, 8, 4, 32
    key = jax.random.PRNGKey(0)
    k_x, k_p, k_g = jax.random.split(key, 3)

    x = jax.random.normal(k_x, (B, S, D), jnp.float32)
    params = init_params(k_p, D, H)
    # One (B, S) slab of Gumbel noise per decode step -> multinomial sampling.
    gumbel = jax.random.gumbel(k_g, (S, B, S), jnp.float32)

    indices = jax.jit(pointer_net_forward)(x, gumbel, params)
    indices = jax.block_until_ready(indices)

    # Each row must be a permutation of 0..S-1 (mask forbids resampling).
    assert indices.shape == (B, S)
    for b in range(B):
        assert sorted(indices[b].tolist()) == list(range(S)), indices[b]

    print("KERNEL_OK")
</pallas_src>

<mosaic_0001>
module attributes {stable_mosaic.version = 11 : i64} {
  func.func @pointer_net_kernel(%arg0: memref<16x4xf32, #tpu.memory_space<vmem>>, %arg1: memref<8x2x8xf32, #tpu.memory_space<vmem>>, %arg2: memref<4x128xbf16, #tpu.memory_space<vmem>>, %arg3: memref<32x128xbf16, #tpu.memory_space<vmem>>, %arg4: memref<1x128xf32, #tpu.memory_space<vmem>>, %arg5: memref<32x128xbf16, #tpu.memory_space<vmem>>, %arg6: memref<32x128xbf16, #tpu.memory_space<vmem>>, %arg7: memref<1x128xf32, #tpu.memory_space<vmem>>, %arg8: memref<8x2xi32, #tpu.memory_space<vmem>>, %arg9: memref<16x128xf32, #tpu.memory_space<vmem>>, %arg10: memref<2x8x32xf32, #tpu.memory_space<vmem>>) attributes {dimension_semantics = [], scalar_prefetch = 0 : i64, scratch_operands = 2 : i64, tpu.core_type = #tpu.core_type<tc>} {
    %c0 = arith.constant 0 : index
    %c0_0 = arith.constant 0 : index
    %0 = vector.load %arg3[%c0, %c0_0] : memref<32x128xbf16, #tpu.memory_space<vmem>>, vector<32x128xbf16>
    %c0_1 = arith.constant 0 : index
    %c0_2 = arith.constant 0 : index
    %1 = vector.load %arg5[%c0_1, %c0_2] : memref<32x128xbf16, #tpu.memory_space<vmem>>, vector<32x128xbf16>
    %c0_3 = arith.constant 0 : index
    %c0_4 = arith.constant 0 : index
    %2 = vector.load %arg6[%c0_3, %c0_4] : memref<32x128xbf16, #tpu.memory_space<vmem>>, vector<32x128xbf16>
    %c0_5 = arith.constant 0 : index
    %c0_6 = arith.constant 0 : index
    %3 = vector.load %arg7[%c0_5, %c0_6] : memref<1x128xf32, #tpu.memory_space<vmem>>, vector<1x128xf32>
    %4 = vector.shape_cast %3 : vector<1x128xf32> to vector<1x128xf32>
    %5 = vector.broadcast %4 : vector<1x128xf32> to vector<2x128xf32>
    %6 = tpu.iota {dimensions = array<i32: 1>} : vector<2x8xi32>
    %c0_7 = arith.constant 0 : index
    %c0_8 = arith.constant 0 : index
    %7 = vector.load %arg0[%c0_7, %c0_8] : memref<16x4xf32, #tpu.memory_space<vmem>>, vector<16x4xf32>
    %8 = arith.truncf %7 : vector<16x4xf32> to vector<16x4xbf16>
    %c0_9 = arith.constant 0 : index
    %c0_10 = arith.constant 0 : index
    %9 = vector.load %arg2[%c0_9, %c0_10] : memref<4x128xbf16, #tpu.memory_space<vmem>>, vector<4x128xbf16>
    %cst = arith.constant dense<0.000000e+00> : vector<16x128xf32>
    %10 = tpu.matmul %8, %9, %cst {dimension_numbers = #tpu.dot_dimension_numbers<[1], [0], [0], [1], [0, 0, 1, 1], [], []>} : vector<16x4xbf16>, vector<4x128xbf16>, vector<16x128xf32> -> vector<16x128xf32>
    %c0_11 = arith.constant 0 : index
    %c0_12 = arith.constant 0 : index
    %11 = vector.load %arg4[%c0_11, %c0_12] : memref<1x128xf32, #tpu.memory_space<vmem>>, vector<1x128xf32>
    %12 = vector.broadcast %11 : vector<1x128xf32> to vector<16x128xf32>
    %13 = arith.addf %10, %12 : vector<16x128xf32>
    %c0_13 = arith.constant 0 : index
    %c0_14 = arith.constant 0 : index
    %14 = vector.load %arg9[%c0_13, %c0_14] : memref<16x128xf32, #tpu.memory_space<vmem>>, vector<16x128xf32>
    tpu.vector_store %arg9[%c0_13, %c0_14], %13 {strides = array<i32>} : memref<16x128xf32, #tpu.memory_space<vmem>>, vector<16x128xf32>,
    %cst_15 = arith.constant 0.000000e+00 : f32
    %15 = vector.broadcast %cst_15 : f32 to vector<2x32xf32>
    %cst_16 = arith.constant 0.000000e+00 : f32
    %16 = vector.broadcast %cst_16 : f32 to vector<2x32xf32>
    %c0_17 = arith.constant 0 : index
    %c0_18 = arith.constant 0 : index
    %17 = vector.load %arg9[%c0_17, %c0_18] : memref<16x128xf32, #tpu.memory_space<vmem>>, vector<2x128xf32>
    %18 = arith.truncf %15 : vector<2x32xf32> to vector<2x32xbf16>
    %cst_19 = arith.constant dense<0.000000e+00> : vector<2x128xf32>
    %19 = tpu.matmul %18, %0, %cst_19 {dimension_numbers = #tpu.dot_dimension_numbers<[1], [0], [0], [1], [0, 0, 1, 1], [], []>} : vector<2x32xbf16>, vector<32x128xbf16>, vector<2x128xf32> -> vector<2x128xf32>
    %20 = arith.addf %17, %19 : vector<2x128xf32>
    %21 = vector.extract_strided_slice %20 {offsets = [0, 0], sizes = [2, 32], strides = [1, 1]} : vector<2x128xf32> to vector<2x32xf32>
    %22 = arith.negf %21 : vector<2x32xf32>
    %23 = math.exp %22 : vector<2x32xf32>
    %cst_20 = arith.constant 1.000000e+00 : f32
    %24 = vector.broadcast %cst_20 : f32 to vector<2x32xf32>
    %25 = arith.addf %24, %23 : vector<2x32xf32>
    %26 = arith.divf %24, %25 : vector<2x32xf32>
    %27 = vector.extract_strided_slice %20 {offsets = [0, 32], sizes = [2, 32], strides = [1, 1]} : vector<2x128xf32> to vector<2x32xf32>
    %28 = arith.negf %27 : vector<2x32xf32>
    %29 = math.exp %28 : vector<2x32xf32>
    %cst_21 = arith.constant 1.000000e+00 : f32
    %30 = vector.broadcast %cst_21 : f32 to vector<2x32xf32>
    %31 = arith.addf %30, %29 : vector<2x32xf32>
    %32 = arith.divf %30, %31 : vector<2x32xf32>
    %33 = vector.extract_strided_slice %20 {offsets = [0, 64], sizes = [2, 32], strides = [1, 1]} : vector<2x128xf32> to vector<2x32xf32>
    %34 = math.tanh %33 : vector<2x32xf32>
    %35 = vector.extract_strided_slice %20 {offsets = [0, 96], sizes = [2, 32], strides = [1, 1]} : vector<2x128xf32> to vector<2x32xf32>
    %36 = arith.negf %35 : vector<2x32xf32>
    %37 = math.exp %36 : vector<2x32xf32>
    %cst_22 = arith.constant 1.000000e+00 : f32
    %38 = vector.broadcast %cst_22 : f32 to vector<2x32xf32>
    %39 = arith.addf %38, %37 : vector<2x32xf32>
    %40 = arith.divf %38, %39 : vector<2x32xf32>
    %41 = arith.mulf %32, %16 : vector<2x32xf32>
    %42 = arith.mulf %26, %34 : vector<2x32xf32>
    %43 = arith.addf %41, %42 : vector<2x32xf32>
    %44 = math.tanh %43 : vector<2x32xf32>
    %45 = arith.mulf %40, %44 : vector<2x32xf32>
    %46 = vector.shape_cast %45 : vector<2x32xf32> to vector<2x1x32xf32>
    %c0_23 = arith.constant 0 : index
    %c0_24 = arith.constant 0 : index
    %c0_25 = arith.constant 0 : index
    %47 = vector.load %arg10[%c0_23, %c0_24, %c0_25] : memref<2x8x32xf32, #tpu.memory_space<vmem>>, vector<2x1x32xf32>
    tpu.vector_store %arg10[%c0_23, %c0_24, %c0_25], %46 {strides = array<i32>} : memref<2x8x32xf32, #tpu.memory_space<vmem>>, vector<2x1x32xf32>,
    %c2 = arith.constant 2 : index
    %c0_26 = arith.constant 0 : index
    %48 = vector.load %arg9[%c2, %c0_26] : memref<16x128xf32, #tpu.memory_space<vmem>>, vector<2x128xf32>
    %49 = arith.truncf %45 : vector<2x32xf32> to vector<2x32xbf16>
    %cst_27 = arith.constant dense<0.000000e+00> : vector<2x128xf32>
    %50 = tpu.matmul %49, %0, %cst_27 {dimension_numbers = #tpu.dot_dimension_numbers<[1], [0], [0], [1], [0, 0, 1, 1], [], []>} : vector<2x32xbf16>, vector<32x128xbf16>, vector<2x128xf32> -> vector<2x128xf32>
    %51 = arith.addf %48, %50 : vector<2x128xf32>
    %52 = vector.extract_strided_slice %51 {offsets = [0, 0], sizes = [2, 32], strides = [1, 1]} : vector<2x128xf32> to vector<2x32xf32>
    %53 = arith.negf %52 : vector<2x32xf32>
    %54 = math.exp %53 : vector<2x32xf32>
    %cst_28 = arith.constant 1.000000e+00 : f32
    %55 = vector.broadcast %cst_28 : f32 to vector<2x32xf32>
    %56 = arith.addf %55, %54 : vector<2x32xf32>
    %57 = arith.divf %55, %56 : vector<2x32xf32>
    %58 = vector.extract_strided_slice %51 {offsets = [0, 32], sizes = [2, 32], strides = [1, 1]} : vector<2x128xf32> to vector<2x32xf32>
    %59 = arith.negf %58 : vector<2x32xf32>
    %60 = math.exp %59 : vector<2x32xf32>
    %cst_29 = arith.constant 1.000000e+00 : f32
    %61 = vector.broadcast %cst_29 : f32 to vector<2x32xf32>
    %62 = arith.addf %61, %60 : vector<2x32xf32>
    %63 = arith.divf %61, %62 : vector<2x32xf32>
    %64 = vector.extract_strided_slice %51 {offsets = [0, 64], sizes = [2, 32], strides = [1, 1]} : vector<2x128xf32> to vector<2x32xf32>
    %65 = math.tanh %64 : vector<2x32xf32>
    %66 = vector.extract_strided_slice %51 {offsets = [0, 96], sizes = [2, 32], strides = [1, 1]} : vector<2x128xf32> to vector<2x32xf32>
    %67 = arith.negf %66 : vector<2x32xf32>
    %68 = math.exp %67 : vector<2x32xf32>
    %cst_30 = arith.constant 1.000000e+00 : f32
    %69 = vector.broadcast %cst_30 : f32 to vector<2x32xf32>
    %70 = arith.addf %69, %68 : vector<2x32xf32>
    %71 = arith.divf %69, %70 : vector<2x32xf32>
    %72 = arith.mulf %63, %43 : vector<2x32xf32>
    %73 = arith.mulf %57, %65 : vector<2x32xf32>
    %74 = arith.addf %72, %73 : vector<2x32xf32>
    %75 = math.tanh %74 : vector<2x32xf32>
    %76 = arith.mulf %71, %75 : vector<2x32xf32>
    %77 = vector.shape_cast %76 : vector<2x32xf32> to vector<2x1x32xf32>
    %c0_31 = arith.constant 0 : index
    %c1 = arith.constant 1 : index
    %c0_32 = arith.constant 0 : index
    %78 = vector.load %arg10[%c0_31, %c1, %c0_32] : memref<2x8x32xf32, #tpu.memory_space<vmem>>, vector<2x1x32xf32>
    tpu.vector_store %arg10[%c0_31, %c1, %c0_32], %77 {strides = array<i32>} : memref<2x8x32xf32, #tpu.memory_space<vmem>>, vector<2x1x32xf32>,
    %c4 = arith.constant 4 : index
    %c0_33 = arith.constant 0 : index
    %79 = vector.load %arg9[%c4, %c0_33] : memref<16x128xf32, #tpu.memory_space<vmem>>, vector<2x128xf32>
    %80 = arith.truncf %76 : vector<2x32xf32> to vector<2x32xbf16>
    %cst_34 = arith.constant dense<0.000000e+00> : vector<2x128xf32>
    %81 = tpu.matmul %80, %0, %cst_34 {dimension_numbers = #tpu.dot_dimension_numbers<[1], [0], [0], [1], [0, 0, 1, 1], [], []>} : vector<2x32xbf16>, vector<32x128xbf16>, vector<2x128xf32> -> vector<2x128xf32>
    %82 = arith.addf %79, %81 : vector<2x128xf32>
    %83 = vector.extract_strided_slice %82 {offsets = [0, 0], sizes = [2, 32], strides = [1, 1]} : vector<2x128xf32> to vector<2x32xf32>
    %84 = arith.negf %83 : vector<2x32xf32>
    %85 = math.exp %84 : vector<2x32xf32>
    %cst_35 = arith.constant 1.000000e+00 : f32
    %86 = vector.broadcast %cst_35 : f32 to vector<2x32xf32>
    %87 = arith.addf %86, %85 : vector<2x32xf32>
    %88 = arith.divf %86, %87 : vector<2x32xf32>
    %89 = vector.extract_strided_slice %82 {offsets = [0, 32], sizes = [2, 32], strides = [1, 1]} : vector<2x128xf32> to vector<2x32xf32>
    %90 = arith.negf %89 : vector<2x32xf32>
    %91 = math.exp %90 : vector<2x32xf32>
    %cst_36 = arith.constant 1.000000e+00 : f32
    %92 = vector.broadcast %cst_36 : f32 to vector<2x32xf32>
    %93 = arith.addf %92, %91 : vector<2x32xf32>
    %94 = arith.divf %92, %93 : vector<2x32xf32>
    %95 = vector.extract_strided_slice %82 {offsets = [0, 64], sizes = [2, 32], strides = [1, 1]} : vector<2x128xf32> to vector<2x32xf32>
    %96 = math.tanh %95 : vector<2x32xf32>
    %97 = vector.extract_strided_slice %82 {offsets = [0, 96], sizes = [2, 32], strides = [1, 1]} : vector<2x128xf32> to vector<2x32xf32>
    %98 = arith.negf %97 : vector<2x32xf32>
    %99 = math.exp %98 : vector<2x32xf32>
    %cst_37 = arith.constant 1.000000e+00 : f32
    %100 = vector.broadcast %cst_37 : f32 to vector<2x32xf32>
    %101 = arith.addf %100, %99 : vector<2x32xf32>
    %102 = arith.divf %100, %101 : vector<2x32xf32>
    %103 = arith.mulf %94, %74 : vector<2x32xf32>
    %104 = arith.mulf %88, %96 : vector<2x32xf32>
    %105 = arith.addf %103, %104 : vector<2x32xf32>
    %106 = math.tanh %105 : vector<2x32xf32>
    %107 = arith.mulf %102, %106 : vector<2x32xf32>
    %108 = vector.shape_cast %107 : vector<2x32xf32> to vector<2x1x32xf32>
    %c0_38 = arith.constant 0 : index
    %c2_39 = arith.constant 2 : index
    %c0_40 = arith.constant 0 : index
    %109 = vector.load %arg10[%c0_38, %c2_39, %c0_40] : memref<2x8x32xf32, #tpu.memory_space<vmem>>, vector<2x1x32xf32>
    tpu.vector_store %arg10[%c0_38, %c2_39, %c0_40], %108 {strides = array<i32>} : memref<2x8x32xf32, #tpu.memory_space<vmem>>, vector<2x1x32xf32>,
    %c6 = arith.constant 6 : index
    %c0_41 = arith.constant 0 : index
    %110 = vector.load %arg9[%c6, %c0_41] : memref<16x128xf32, #tpu.memory_space<vmem>>, vector<2x128xf32>
    %111 = arith.truncf %107 : vector<2x32xf32> to vector<2x32xbf16>
    %cst_42 = arith.constant dense<0.000000e+00> : vector<2x128xf32>
    %112 = tpu.matmul %111, %0, %cst_42 {dimension_numbers = #tpu.dot_dimension_numbers<[1], [0], [0], [1], [0, 0, 1, 1], [], []>} : vector<2x32xbf16>, vector<32x128xbf16>, vector<2x128xf32> -> vector<2x128xf32>
    %113 = arith.addf %110, %112 : vector<2x128xf32>
    %114 = vector.extract_strided_slice %113 {offsets = [0, 0], sizes = [2, 32], strides = [1, 1]} : vector<2x128xf32> to vector<2x32xf32>
    %115 = arith.negf %114 : vector<2x32xf32>
    %116 = math.exp %115 : vector<2x32xf32>
    %cst_43 = arith.constant 1.000000e+00 : f32
    %117 = vector.broadcast %cst_43 : f32 to vector<2x32xf32>
    %118 = arith.addf %117, %116 : vector<2x32xf32>
    %119 = arith.divf %117, %118 : vector<2x32xf32>
    %120 = vector.extract_strided_slice %113 {offsets = [0, 32], sizes = [2, 32], strides = [1, 1]} : vector<2x128xf32> to vector<2x32xf32>
    %121 = arith.negf %120 : vector<2x32xf32>
    %122 = math.exp %121 : vector<2x32xf32>
    %cst_44 = arith.constant 1.000000e+00 : f32
    %123 = vector.broadcast %cst_44 : f32 to vector<2x32xf32>
    %124 = arith.addf %123, %122 : vector<2x32xf32>
    %125 = arith.divf %123, %124 : vector<2x32xf32>
    %126 = vector.extract_strided_slice %113 {offsets = [0, 64], sizes = [2, 32], strides = [1, 1]} : vector<2x128xf32> to vector<2x32xf32>
    %127 = math.tanh %126 : vector<2x32xf32>
    %128 = vector.extract_strided_slice %113 {offsets = [0, 96], sizes = [2, 32], strides = [1, 1]} : vector<2x128xf32> to vector<2x32xf32>
    %129 = arith.negf %128 : vector<2x32xf32>
    %130 = math.exp %129 : vector<2x32xf32>
    %cst_45 = arith.constant 1.000000e+00 : f32
    %131 = vector.broadcast %cst_45 : f32 to vector<2x32xf32>
    %132 = arith.addf %131, %130 : vector<2x32xf32>
    %133 = arith.divf %131, %132 : vector<2x32xf32>
    %134 = arith.mulf %125, %105 : vector<2x32xf32>
    %135 = arith.mulf %119, %127 : vector<2x32xf32>
    %136 = arith.addf %134, %135 : vector<2x32xf32>
    %137 = math.tanh %136 : vector<2x32xf32>
    %138 = arith.mulf %133, %137 : vector<2x32xf32>
    %139 = vector.shape_cast %138 : vector<2x32xf32> to vector<2x1x32xf32>
    %c0_46 = arith.constant 0 : index
    %c3 = arith.constant 3 : index
    %c0_47 = arith.constant 0 : index
    %140 = vector.load %arg10[%c0_46, %c3, %c0_47] : memref<2x8x32xf32, #tpu.memory_space<vmem>>, vector<2x1x32xf32>
    tpu.vector_store %arg10[%c0_46, %c3, %c0_47], %139 {strides = array<i32>} : memref<2x8x32xf32, #tpu.memory_space<vmem>>, vector<2x1x32xf32>,
    %c8 = arith.constant 8 : index
    %c0_48 = arith.constant 0 : index
    %141 = vector.load %arg9[%c8, %c0_48] : memref<16x128xf32, #tpu.memory_space<vmem>>, vector<2x128xf32>
    %142 = arith.truncf %138 : vector<2x32xf32> to vector<2x32xbf16>
    %cst_49 = arith.constant dense<0.000000e+00> : vector<2x128xf32>
    %143 = tpu.matmul %142, %0, %cst_49 {dimension_numbers = #tpu.dot_dimension_numbers<[1], [0], [0], [1], [0, 0, 1, 1], [], []>} : vector<2x32xbf16>, vector<32x128xbf16>, vector<2x128xf32> -> vector<2x128xf32>
    %144 = arith.addf %141, %143 : vector<2x128xf32>
    %145 = vector.extract_strided_slice %144 {offsets = [0, 0], sizes = [2, 32], strides = [1, 1]} : vector<2x128xf32> to vector<2x32xf32>
    %146 = arith.negf %145 : vector<2x32xf32>
    %147 = math.exp %146 : vector<2x32xf32>
    %cst_50 = arith.constant 1.000000e+00 : f32
    %148 = vector.broadcast %cst_50 : f32 to vector<2x32xf32>
    %149 = arith.addf %148, %147 : vector<2x32xf32>
    %150 = arith.divf %148, %149 : vector<2x32xf32>
    %151 = vector.extract_strided_slice %144 {offsets = [0, 32], sizes = [2, 32], strides = [1, 1]} : vector<2x128xf32> to vector<2x32xf32>
    %152 = arith.negf %151 : vector<2x32xf32>
    %153 = math.exp %152 : vector<2x32xf32>
    %cst_51 = arith.constant 1.000000e+00 : f32
    %154 = vector.broadcast %cst_51 : f32 to vector<2x32xf32>
    %155 = arith.addf %154, %153 : vector<2x32xf32>
    %156 = arith.divf %154, %155 : vector<2x32xf32>
    %157 = vector.extract_strided_slice %144 {offsets = [0, 64], sizes = [2, 32], strides = [1, 1]} : vector<2x128xf32> to vector<2x32xf32>
    %158 = math.tanh %157 : vector<2x32xf32>
    %159 = vector.extract_strided_slice %144 {offsets = [0, 96], sizes = [2, 32], strides = [1, 1]} : vector<2x128xf32> to vector<2x32xf32>
    %160 = arith.negf %159 : vector<2x32xf32>
    %161 = math.exp %160 : vector<2x32xf32>
    %cst_52 = arith.constant 1.000000e+00 : f32
    %162 = vector.broadcast %cst_52 : f32 to vector<2x32xf32>
    %163 = arith.addf %162, %161 : vector<2x32xf32>
    %164 = arith.divf %162, %163 : vector<2x32xf32>
    %165 = arith.mulf %156, %136 : vector<2x32xf32>
    %166 = arith.mulf %150, %158 : vector<2x32xf32>
    %167 = arith.addf %165, %166 : vector<2x32xf32>
    %168 = math.tanh %167 : vector<2x32xf32>
    %169 = arith.mulf %164, %168 : vector<2x32xf32>
    %170 = vector.shape_cast %169 : vector<2x32xf32> to vector<2x1x32xf32>
    %c0_53 = arith.constant 0 : index
    %c4_54 = arith.constant 4 : index
    %c0_55 = arith.constant 0 : index
    %171 = vector.load %arg10[%c0_53, %c4_54, %c0_55] : memref<2x8x32xf32, #tpu.memory_space<vmem>>, vector<2x1x32xf32>
    tpu.vector_store %arg10[%c0_53, %c4_54, %c0_55], %170 {strides = array<i32>} : memref<2x8x32xf32, #tpu.memory_space<vmem>>, vector<2x1x32xf32>,
    %c10 = arith.constant 10 : index
    %c0_56 = arith.constant 0 : index
    %172 = vector.load %arg9[%c10, %c0_56] : memref<16x128xf32, #tpu.memory_space<vmem>>, vector<2x128xf32>
    %173 = arith.truncf %169 : vector<2x32xf32> to vector<2x32xbf16>
    %cst_57 = arith.constant dense<0.000000e+00> : vector<2x128xf32>
    %174 = tpu.matmul %173, %0, %cst_57 {dimension_numbers = #tpu.dot_dimension_numbers<[1], [0], [0], [1], [0, 0, 1, 1], [], []>} : vector<2x32xbf16>, vector<32x128xbf16>, vector<2x128xf32> -> vector<2x128xf32>
    %175 = arith.addf %172, %174 : vector<2x128xf32>
    %176 = vector.extract_strided_slice %175 {offsets = [0, 0], sizes = [2, 32], strides = [1, 1]} : vector<2x128xf32> to vector<2x32xf32>
    %177 = arith.negf %176 : vector<2x32xf32>
    %178 = math.exp %177 : vector<2x32xf32>
    %cst_58 = arith.constant 1.000000e+00 : f32
    %179 = vector.broadcast %cst_58 : f32 to vector<2x32xf32>
    %180 = arith.addf %179, %178 : vector<2x32xf32>
    %181 = arith.divf %179, %180 : vector<2x32xf32>
    %182 = vector.extract_strided_slice %175 {offsets = [0, 32], sizes = [2, 32], strides = [1, 1]} : vector<2x128xf32> to vector<2x32xf32>
    %183 = arith.negf %182 : vector<2x32xf32>
    %184 = math.exp %183 : vector<2x32xf32>
    %cst_59 = arith.constant 1.000000e+00 : f32
    %185 = vector.broadcast %cst_59 : f32 to vector<2x32xf32>
    %186 = arith.addf %185, %184 : vector<2x32xf32>
    %187 = arith.divf %185, %186 : vector<2x32xf32>
    %188 = vector.extract_strided_slice %175 {offsets = [0, 64], sizes = [2, 32], strides = [1, 1]} : vector<2x128xf32> to vector<2x32xf32>
    %189 = math.tanh %188 : vector<2x32xf32>
    %190 = vector.extract_strided_slice %175 {offsets = [0, 96], sizes = [2, 32], strides = [1, 1]} : vector<2x128xf32> to vector<2x32xf32>
    %191 = arith.negf %190 : vector<2x32xf32>
    %192 = math.exp %191 : vector<2x32xf32>
    %cst_60 = arith.constant 1.000000e+00 : f32
    %193 = vector.broadcast %cst_60 : f32 to vector<2x32xf32>
    %194 = arith.addf %193, %192 : vector<2x32xf32>
    %195 = arith.divf %193, %194 : vector<2x32xf32>
    %196 = arith.mulf %187, %167 : vector<2x32xf32>
    %197 = arith.mulf %181, %189 : vector<2x32xf32>
    %198 = arith.addf %196, %197 : vector<2x32xf32>
    %199 = math.tanh %198 : vector<2x32xf32>
    %200 = arith.mulf %195, %199 : vector<2x32xf32>
    %201 = vector.shape_cast %200 : vector<2x32xf32> to vector<2x1x32xf32>
    %c0_61 = arith.constant 0 : index
    %c5 = arith.constant 5 : index
    %c0_62 = arith.constant 0 : index
    %202 = vector.load %arg10[%c0_61, %c5, %c0_62] : memref<2x8x32xf32, #tpu.memory_space<vmem>>, vector<2x1x32xf32>
    tpu.vector_store %arg10[%c0_61, %c5, %c0_62], %201 {strides = array<i32>} : memref<2x8x32xf32, #tpu.memory_space<vmem>>, vector<2x1x32xf32>,
    %c12 = arith.constant 12 : index
    %c0_63 = arith.constant 0 : index
    %203 = vector.load %arg9[%c12, %c0_63] : memref<16x128xf32, #tpu.memory_space<vmem>>, vector<2x128xf32>
    %204 = arith.truncf %200 : vector<2x32xf32> to vector<2x32xbf16>
    %cst_64 = arith.constant dense<0.000000e+00> : vector<2x128xf32>
    %205 = tpu.matmul %204, %0, %cst_64 {dimension_numbers = #tpu.dot_dimension_numbers<[1], [0], [0], [1], [0, 0, 1, 1], [], []>} : vector<2x32xbf16>, vector<32x128xbf16>, vector<2x128xf32> -> vector<2x128xf32>
    %206 = arith.addf %203, %205 : vector<2x128xf32>
    %207 = vector.extract_strided_slice %206 {offsets = [0, 0], sizes = [2, 32], strides = [1, 1]} : vector<2x128xf32> to vector<2x32xf32>
    %208 = arith.negf %207 : vector<2x32xf32>
    %209 = math.exp %208 : vector<2x32xf32>
    %cst_65 = arith.constant 1.000000e+00 : f32
    %210 = vector.broadcast %cst_65 : f32 to vector<2x32xf32>
    %211 = arith.addf %210, %209 : vector<2x32xf32>
    %212 = arith.divf %210, %211 : vector<2x32xf32>
    %213 = vector.extract_strided_slice %206 {offsets = [0, 32], sizes = [2, 32], strides = [1, 1]} : vector<2x128xf32> to vector<2x32xf32>
    %214 = arith.negf %213 : vector<2x32xf32>
    %215 = math.exp %214 : vector<2x32xf32>
    %cst_66 = arith.constant 1.000000e+00 : f32
    %216 = vector.broadcast %cst_66 : f32 to vector<2x32xf32>
    %217 = arith.addf %216, %215 : vector<2x32xf32>
    %218 = arith.divf %216, %217 : vector<2x32xf32>
    %219 = vector.extract_strided_slice %206 {offsets = [0, 64], sizes = [2, 32], strides = [1, 1]} : vector<2x128xf32> to vector<2x32xf32>
    %220 = math.tanh %219 : vector<2x32xf32>
    %221 = vector.extract_strided_slice %206 {offsets = [0, 96], sizes = [2, 32], strides = [1, 1]} : vector<2x128xf32> to vector<2x32xf32>
    %222 = arith.negf %221 : vector<2x32xf32>
    %223 = math.exp %222 : vector<2x32xf32>
    %cst_67 = arith.constant 1.000000e+00 : f32
    %224 = vector.broadcast %cst_67 : f32 to vector<2x32xf32>
    %225 = arith.addf %224, %223 : vector<2x32xf32>
    %226 = arith.divf %224, %225 : vector<2x32xf32>
    %227 = arith.mulf %218, %198 : vector<2x32xf32>
    %228 = arith.mulf %212, %220 : vector<2x32xf32>
    %229 = arith.addf %227, %228 : vector<2x32xf32>
    %230 = math.tanh %229 : vector<2x32xf32>
    %231 = arith.mulf %226, %230 : vector<2x32xf32>
    %232 = vector.shape_cast %231 : vector<2x32xf32> to vector<2x1x32xf32>
    %c0_68 = arith.constant 0 : index
    %c6_69 = arith.constant 6 : index
    %c0_70 = arith.constant 0 : index
    %233 = vector.load %arg10[%c0_68, %c6_69, %c0_70] : memref<2x8x32xf32, #tpu.memory_space<vmem>>, vector<2x1x32xf32>
    tpu.vector_store %arg10[%c0_68, %c6_69, %c0_70], %232 {strides = array<i32>} : memref<2x8x32xf32, #tpu.memory_space<vmem>>, vector<2x1x32xf32>,
    %c14 = arith.constant 14 : index
    %c0_71 = arith.constant 0 : index
    %234 = vector.load %arg9[%c14, %c0_71] : memref<16x128xf32, #tpu.memory_space<vmem>>, vector<2x128xf32>
    %235 = arith.truncf %231 : vector<2x32xf32> to vector<2x32xbf16>
    %cst_72 = arith.constant dense<0.000000e+00> : vector<2x128xf32>
    %236 = tpu.matmul %235, %0, %cst_72 {dimension_numbers = #tpu.dot_dimension_numbers<[1], [0], [0], [1], [0, 0, 1, 1], [], []>} : vector<2x32xbf16>, vector<32x128xbf16>, vector<2x128xf32> -> vector<2x128xf32>
    %237 = arith.addf %234, %236 : vector<2x128xf32>
    %238 = vector.extract_strided_slice %237 {offsets = [0, 0], sizes = [2, 32], strides = [1, 1]} : vector<2x128xf32> to vector<2x32xf32>
    %239 = arith.negf %238 : vector<2x32xf32>
    %240 = math.exp %239 : vector<2x32xf32>
    %cst_73 = arith.constant 1.000000e+00 : f32
    %241 = vector.broadcast %cst_73 : f32 to vector<2x32xf32>
    %242 = arith.addf %241, %240 : vector<2x32xf32>
    %243 = arith.divf %241, %242 : vector<2x32xf32>
    %244 = vector.extract_strided_slice %237 {offsets = [0, 32], sizes = [2, 32], strides = [1, 1]} : vector<2x128xf32> to vector<2x32xf32>
    %245 = arith.negf %244 : vector<2x32xf32>
    %246 = math.exp %245 : vector<2x32xf32>
    %cst_74 = arith.constant 1.000000e+00 : f32
    %247 = vector.broadcast %cst_74 : f32 to vector<2x32xf32>
    %248 = arith.addf %247, %246 : vector<2x32xf32>
    %249 = arith.divf %247, %248 : vector<2x32xf32>
    %250 = vector.extract_strided_slice %237 {offsets = [0, 64], sizes = [2, 32], strides = [1, 1]} : vector<2x128xf32> to vector<2x32xf32>
    %251 = math.tanh %250 : vector<2x32xf32>
    %252 = vector.extract_strided_slice %237 {offsets = [0, 96], sizes = [2, 32], strides = [1, 1]} : vector<2x128xf32> to vector<2x32xf32>
    %253 = arith.negf %252 : vector<2x32xf32>
    %254 = math.exp %253 : vector<2x32xf32>
    %cst_75 = arith.constant 1.000000e+00 : f32
    %255 = vector.broadcast %cst_75 : f32 to vector<2x32xf32>
    %256 = arith.addf %255, %254 : vector<2x32xf32>
    %257 = arith.divf %255, %256 : vector<2x32xf32>
    %258 = arith.mulf %249, %229 : vector<2x32xf32>
    %259 = arith.mulf %243, %251 : vector<2x32xf32>
    %260 = arith.addf %258, %259 : vector<2x32xf32>
    %261 = math.tanh %260 : vector<2x32xf32>
    %262 = arith.mulf %257, %261 : vector<2x32xf32>
    %263 = vector.shape_cast %262 : vector<2x32xf32> to vector<2x1x32xf32>
    %c0_76 = arith.constant 0 : index
    %c7 = arith.constant 7 : index
    %c0_77 = arith.constant 0 : index
    %264 = vector.load %arg10[%c0_76, %c7, %c0_77] : memref<2x8x32xf32, #tpu.memory_space<vmem>>, vector<2x1x32xf32>
    tpu.vector_store %arg10[%c0_76, %c7, %c0_77], %263 {strides = array<i32>} : memref<2x8x32xf32, #tpu.memory_space<vmem>>, vector<2x1x32xf32>,
    %cst_78 = arith.constant 0.000000e+00 : f32
    %265 = vector.broadcast %cst_78 : f32 to vector<2x32xf32>
    %cst_79 = arith.constant 0.000000e+00 : f32
    %266 = vector.broadcast %cst_79 : f32 to vector<2x8xf32>
    %267 = arith.truncf %265 : vector<2x32xf32> to vector<2x32xbf16>
    %cst_80 = arith.constant dense<0.000000e+00> : vector<2x128xf32>
    %268 = tpu.matmul %267, %1, %cst_80 {dimension_numbers = #tpu.dot_dimension_numbers<[1], [0], [0], [1], [0, 0, 1, 1], [], []>} : vector<2x32xbf16>, vector<32x128xbf16>, vector<2x128xf32> -> vector<2x128xf32>
    %269 = arith.truncf %262 : vector<2x32xf32> to vector<2x32xbf16>
    %cst_81 = arith.constant dense<0.000000e+00> : vector<2x128xf32>
    %270 = tpu.matmul %269, %2, %cst_81 {dimension_numbers = #tpu.dot_dimension_numbers<[1], [0], [0], [1], [0, 0, 1, 1], [], []>} : vector<2x32xbf16>, vector<32x128xbf16>, vector<2x128xf32> -> vector<2x128xf32>
    %271 = arith.addf %268, %270 : vector<2x128xf32>
    %272 = arith.addf %271, %5 : vector<2x128xf32>
    %273 = vector.extract_strided_slice %272 {offsets = [0, 0], sizes = [2, 32], strides = [1, 1]} : vector<2x128xf32> to vector<2x32xf32>
    %274 = arith.negf %273 : vector<2x32xf32>
    %275 = math.exp %274 : vector<2x32xf32>
    %cst_82 = arith.constant 1.000000e+00 : f32
    %276 = vector.broadcast %cst_82 : f32 to vector<2x32xf32>
    %277 = arith.addf %276, %275 : vector<2x32xf32>
    %278 = arith.divf %276, %277 : vector<2x32xf32>
    %279 = vector.extract_strided_slice %272 {offsets = [0, 32], sizes = [2, 32], strides = [1, 1]} : vector<2x128xf32> to vector<2x32xf32>
    %280 = arith.negf %279 : vector<2x32xf32>
    %281 = math.exp %280 : vector<2x32xf32>
    %cst_83 = arith.constant 1.000000e+00 : f32
    %282 = vector.broadcast %cst_83 : f32 to vector<2x32xf32>
    %283 = arith.addf %282, %281 : vector<2x32xf32>
    %284 = arith.divf %282, %283 : vector<2x32xf32>
    %285 = vector.extract_strided_slice %272 {offsets = [0, 64], sizes = [2, 32], strides = [1, 1]} : vector<2x128xf32> to vector<2x32xf32>
    %286 = math.tanh %285 : vector<2x32xf32>
    %287 = vector.extract_strided_slice %272 {offsets = [0, 96], sizes = [2, 32], strides = [1, 1]} : vector<2x128xf32> to vector<2x32xf32>
    %288 = arith.negf %287 : vector<2x32xf32>
    %289 = math.exp %288 : vector<2x32xf32>
    %cst_84 = arith.constant 1.000000e+00 : f32
    %290 = vector.broadcast %cst_84 : f32 to vector<2x32xf32>
    %291 = arith.addf %290, %289 : vector<2x32xf32>
    %292 = arith.divf %290, %291 : vector<2x32xf32>
    %293 = arith.mulf %284, %260 : vector<2x32xf32>
    %294 = arith.mulf %278, %286 : vector<2x32xf32>
    %295 = arith.addf %293, %294 : vector<2x32xf32>
    %296 = math.tanh %295 : vector<2x32xf32>
    %297 = arith.mulf %292, %296 : vector<2x32xf32>
    %c0_85 = arith.constant 0 : index
    %c0_86 = arith.constant 0 : index
    %c0_87 = arith.constant 0 : index
    %298 = vector.load %arg10[%c0_85, %c0_86, %c0_87] : memref<2x8x32xf32, #tpu.memory_space<vmem>>, vector<2x8x32xf32>
    %299 = vector.shape_cast %297 : vector<2x32xf32> to vector<2x1x32xf32>
    %300 = vector.broadcast %299 : vector<2x1x32xf32> to vector<2x8x32xf32>
    %301 = arith.mulf %298, %300 : vector<2x8x32xf32>
    %cst_88 = arith.constant dense<0.000000e+00> : vector<2x8xf32>
    %302 = vector.multi_reduction <add>, %301, %cst_88 [2] : vector<2x8x32xf32> to vector<2x8xf32>
    %cst_89 = arith.constant 0.000000e+00 : f32
    %303 = vector.broadcast %cst_89 : f32 to vector<2x8xf32>
    %304 = arith.cmpf ogt, %266, %303 : vector<2x8xf32>
    %cst_90 = arith.constant -1.000000e+30 : f32
    %305 = vector.broadcast %cst_90 : f32 to vector<2x8xf32>
    %306 = arith.select %304, %305, %302 : vector<2x8xi1>, vector<2x8xf32>
    %c0_91 = arith.constant 0 : index
    %c0_92 = arith.constant 0 : index
    %c0_93 = arith.constant 0 : index
    %307 = vector.load %arg1[%c0_91, %c0_92, %c0_93] : memref<8x2x8xf32, #tpu.memory_space<vmem>>, vector<1x2x8xf32>
    %308 = vector.shape_cast %307 : vector<1x2x8xf32> to vector<2x8xf32>
    %309 = arith.addf %306, %308 : vector<2x8xf32>
    %cst_94 = arith.constant dense<0xFF800000> : vector<2xf32>
    %310 = vector.multi_reduction <maximumf>, %309, %cst_94 [1] : vector<2x8xf32> to vector<2xf32>
    %311 = vector.shape_cast %310 : vector<2xf32> to vector<2x1xf32>
    %312 = vector.broadcast %311 : vector<2x1xf32> to vector<2x8xf32>
    %313 = arith.cmpf oge, %309, %312 : vector<2x8xf32>
    %c8_i32 = arith.constant 8 : i32
    %314 = vector.broadcast %c8_i32 : i32 to vector<2x8xi32>
    %315 = arith.select %313, %6, %314 : vector<2x8xi1>, vector<2x8xi32>
    %cst_95 = arith.constant dense<2147483647> : vector<2xi32>
    %316 = vector.multi_reduction <minsi>, %315, %cst_95 [1] : vector<2x8xi32> to vector<2xi32>
    %317 = vector.shape_cast %316 : vector<2xi32> to vector<2x1xi32>
    %318 = vector.broadcast %317 : vector<2x1xi32> to vector<2x8xi32>
    %319 = arith.cmpi eq, %6, %318 : vector<2x8xi32>
    %320 = arith.extui %319 : vector<2x8xi1> to vector<2x8xi32>
    %321 = arith.sitofp %320 : vector<2x8xi32> to vector<2x8xf32>
    %322 = arith.maximumf %266, %321 : vector<2x8xf32>
    %323 = vector.shape_cast %321 : vector<2x8xf32> to vector<2x8x1xf32>
    %324 = vector.broadcast %323 : vector<2x8x1xf32> to vector<2x8x32xf32>
    %325 = arith.mulf %324, %298 : vector<2x8x32xf32>
    %cst_96 = arith.constant dense<0.000000e+00> : vector<2x32xf32>
    %326 = vector.multi_reduction <add>, %325, %cst_96 [1] : vector<2x8x32xf32> to vector<2x32xf32>
    %327 = vector.shape_cast %316 : vector<2xi32> to vector<1x2xi32>
    %c0_97 = arith.constant 0 : index
    %c0_98 = arith.constant 0 : index
    %328 = vector.load %arg8[%c0_97, %c0_98] : memref<8x2xi32, #tpu.memory_space<vmem>>, vector<1x2xi32>
    tpu.vector_store %arg8[%c0_97, %c0_98], %327 {strides = array<i32>} : memref<8x2xi32, #tpu.memory_space<vmem>>, vector<1x2xi32>,
    %329 = arith.truncf %326 : vector<2x32xf32> to vector<2x32xbf16>
    %cst_99 = arith.constant dense<0.000000e+00> : vector<2x128xf32>
    %330 = tpu.matmul %329, %1, %cst_99 {dimension_numbers = #tpu.dot_dimension_numbers<[1], [0], [0], [1], [0, 0, 1, 1], [], []>} : vector<2x32xbf16>, vector<32x128xbf16>, vector<2x128xf32> -> vector<2x128xf32>
    %331 = arith.truncf %297 : vector<2x32xf32> to vector<2x32xbf16>
    %cst_100 = arith.constant dense<0.000000e+00> : vector<2x128xf32>
    %332 = tpu.matmul %331, %2, %cst_100 {dimension_numbers = #tpu.dot_dimension_numbers<[1], [0], [0], [1], [0, 0, 1, 1], [], []>} : vector<2x32xbf16>, vector<32x128xbf16>, vector<2x128xf32> -> vector<2x128xf32>
    %333 = arith.addf %330, %332 : vector<2x128xf32>
    %334 = arith.addf %333, %5 : vector<2x128xf32>
    %335 = vector.extract_strided_slice %334 {offsets = [0, 0], sizes = [2, 32], strides = [1, 1]} : vector<2x128xf32> to vector<2x32xf32>
    %336 = arith.negf %335 : vector<2x32xf32>
    %337 = math.exp %336 : vector<2x32xf32>
    %cst_101 = arith.constant 1.000000e+00 : f32
    %338 = vector.broadcast %cst_101 : f32 to vector<2x32xf32>
    %339 = arith.addf %338, %337 : vector<2x32xf32>
    %340 = arith.divf %338, %339 : vector<2x32xf32>
    %341 = vector.extract_strided_slice %334 {offsets = [0, 32], sizes = [2, 32], strides = [1, 1]} : vector<2x128xf32> to vector<2x32xf32>
    %342 = arith.negf %341 : vector<2x32xf32>
    %343 = math.exp %342 : vector<2x32xf32>
    %cst_102 = arith.constant 1.000000e+00 : f32
    %344 = vector.broadcast %cst_102 : f32 to vector<2x32xf32>
    %345 = arith.addf %344, %343 : vector<2x32xf32>
    %346 = arith.divf %344, %345 : vector<2x32xf32>
    %347 = vector.extract_strided_slice %334 {offsets = [0, 64], sizes = [2, 32], strides = [1, 1]} : vector<2x128xf32> to vector<2x32xf32>
    %348 = math.tanh %347 : vector<2x32xf32>
    %349 = vector.extract_strided_slice %334 {offsets = [0, 96], sizes = [2, 32], strides = [1, 1]} : vector<2x128xf32> to vector<2x32xf32>
    %350 = arith.negf %349 : vector<2x32xf32>
    %351 = math.exp %350 : vector<2x32xf32>
    %cst_103 = arith.constant 1.000000e+00 : f32
    %352 = vector.broadcast %cst_103 : f32 to vector<2x32xf32>
    %353 = arith.addf %352, %351 : vector<2x32xf32>
    %354 = arith.divf %352, %353 : vector<2x32xf32>
    %355 = arith.mulf %346, %295 : vector<2x32xf32>
    %356 = arith.mulf %340, %348 : vector<2x32xf32>
    %357 = arith.addf %355, %356 : vector<2x32xf32>
    %358 = math.tanh %357 : vector<2x32xf32>
    %359 = arith.mulf %354, %358 : vector<2x32xf32>
    %c0_104 = arith.constant 0 : index
    %c0_105 = arith.constant 0 : index
    %c0_106 = arith.constant 0 : index
    %360 = vector.load %arg10[%c0_104, %c0_105, %c0_106] : memref<2x8x32xf32, #tpu.memory_space<vmem>>, vector<2x8x32xf32>
    %361 = vector.shape_cast %359 : vector<2x32xf32> to vector<2x1x32xf32>
    %362 = vector.broadcast %361 : vector<2x1x32xf32> to vector<2x8x32xf32>
    %363 = arith.mulf %360, %362 : vector<2x8x32xf32>
    %cst_107 = arith.constant dense<0.000000e+00> : vector<2x8xf32>
    %364 = vector.multi_reduction <add>, %363, %cst_107 [2] : vector<2x8x32xf32> to vector<2x8xf32>
    %cst_108 = arith.constant 0.000000e+00 : f32
    %365 = vector.broadcast %cst_108 : f32 to vector<2x8xf32>
    %366 = arith.cmpf ogt, %322, %365 : vector<2x8xf32>
    %cst_109 = arith.constant -1.000000e+30 : f32
    %367 = vector.broadcast %cst_109 : f32 to vector<2x8xf32>
    %368 = arith.select %366, %367, %364 : vector<2x8xi1>, vector<2x8xf32>
    %c1_110 = arith.constant 1 : index
    %c0_111 = arith.constant 0 : index
    %c0_112 = arith.constant 0 : index
    %369 = vector.load %arg1[%c1_110, %c0_111, %c0_112] : memref<8x2x8xf32, #tpu.memory_space<vmem>>, vector<1x2x8xf32>
    %370 = vector.shape_cast %369 : vector<1x2x8xf32> to vector<2x8xf32>
    %371 = arith.addf %368, %370 : vector<2x8xf32>
    %cst_113 = arith.constant dense<0xFF800000> : vector<2xf32>
    %372 = vector.multi_reduction <maximumf>, %371, %cst_113 [1] : vector<2x8xf32> to vector<2xf32>
    %373 = vector.shape_cast %372 : vector<2xf32> to vector<2x1xf32>
    %374 = vector.broadcast %373 : vector<2x1xf32> to vector<2x8xf32>
    %375 = arith.cmpf oge, %371, %374 : vector<2x8xf32>
    %c8_i32_114 = arith.constant 8 : i32
    %376 = vector.broadcast %c8_i32_114 : i32 to vector<2x8xi32>
    %377 = arith.select %375, %6, %376 : vector<2x8xi1>, vector<2x8xi32>
    %cst_115 = arith.constant dense<2147483647> : vector<2xi32>
    %378 = vector.multi_reduction <minsi>, %377, %cst_115 [1] : vector<2x8xi32> to vector<2xi32>
    %379 = vector.shape_cast %378 : vector<2xi32> to vector<2x1xi32>
    %380 = vector.broadcast %379 : vector<2x1xi32> to vector<2x8xi32>
    %381 = arith.cmpi eq, %6, %380 : vector<2x8xi32>
    %382 = arith.extui %381 : vector<2x8xi1> to vector<2x8xi32>
    %383 = arith.sitofp %382 : vector<2x8xi32> to vector<2x8xf32>
    %384 = arith.maximumf %322, %383 : vector<2x8xf32>
    %385 = vector.shape_cast %383 : vector<2x8xf32> to vector<2x8x1xf32>
    %386 = vector.broadcast %385 : vector<2x8x1xf32> to vector<2x8x32xf32>
    %387 = arith.mulf %386, %360 : vector<2x8x32xf32>
    %cst_116 = arith.constant dense<0.000000e+00> : vector<2x32xf32>
    %388 = vector.multi_reduction <add>, %387, %cst_116 [1] : vector<2x8x32xf32> to vector<2x32xf32>
    %389 = vector.shape_cast %378 : vector<2xi32> to vector<1x2xi32>
    %c1_117 = arith.constant 1 : index
    %c0_118 = arith.constant 0 : index
    %390 = vector.load %arg8[%c1_117, %c0_118] : memref<8x2xi32, #tpu.memory_space<vmem>>, vector<1x2xi32>
    tpu.vector_store %arg8[%c1_117, %c0_118], %389 {strides = array<i32>} : memref<8x2xi32, #tpu.memory_space<vmem>>, vector<1x2xi32>,
    %391 = arith.truncf %388 : vector<2x32xf32> to vector<2x32xbf16>
    %cst_119 = arith.constant dense<0.000000e+00> : vector<2x128xf32>
    %392 = tpu.matmul %391, %1, %cst_119 {dimension_numbers = #tpu.dot_dimension_numbers<[1], [0], [0], [1], [0, 0, 1, 1], [], []>} : vector<2x32xbf16>, vector<32x128xbf16>, vector<2x128xf32> -> vector<2x128xf32>
    %393 = arith.truncf %359 : vector<2x32xf32> to vector<2x32xbf16>
    %cst_120 = arith.constant dense<0.000000e+00> : vector<2x128xf32>
    %394 = tpu.matmul %393, %2, %cst_120 {dimension_numbers = #tpu.dot_dimension_numbers<[1], [0], [0], [1], [0, 0, 1, 1], [], []>} : vector<2x32xbf16>, vector<32x128xbf16>, vector<2x128xf32> -> vector<2x128xf32>
    %395 = arith.addf %392, %394 : vector<2x128xf32>
    %396 = arith.addf %395, %5 : vector<2x128xf32>
    %397 = vector.extract_strided_slice %396 {offsets = [0, 0], sizes = [2, 32], strides = [1, 1]} : vector<2x128xf32> to vector<2x32xf32>
    %398 = arith.negf %397 : vector<2x32xf32>
    %399 = math.exp %398 : vector<2x32xf32>
    %cst_121 = arith.constant 1.000000e+00 : f32
    %400 = vector.broadcast %cst_121 : f32 to vector<2x32xf32>
    %401 = arith.addf %400, %399 : vector<2x32xf32>
    %402 = arith.divf %400, %401 : vector<2x32xf32>
    %403 = vector.extract_strided_slice %396 {offsets = [0, 32], sizes = [2, 32], strides = [1, 1]} : vector<2x128xf32> to vector<2x32xf32>
    %404 = arith.negf %403 : vector<2x32xf32>
    %405 = math.exp %404 : vector<2x32xf32>
    %cst_122 = arith.constant 1.000000e+00 : f32
    %406 = vector.broadcast %cst_122 : f32 to vector<2x32xf32>
    %407 = arith.addf %406, %405 : vector<2x32xf32>
    %408 = arith.divf %406, %407 : vector<2x32xf32>
    %409 = vector.extract_strided_slice %396 {offsets = [0, 64], sizes = [2, 32], strides = [1, 1]} : vector<2x128xf32> to vector<2x32xf32>
    %410 = math.tanh %409 : vector<2x32xf32>
    %411 = vector.extract_strided_slice %396 {offsets = [0, 96], sizes = [2, 32], strides = [1, 1]} : vector<2x128xf32> to vector<2x32xf32>
    %412 = arith.negf %411 : vector<2x32xf32>
    %413 = math.exp %412 : vector<2x32xf32>
    %cst_123 = arith.constant 1.000000e+00 : f32
    %414 = vector.broadcast %cst_123 : f32 to vector<2x32xf32>
    %415 = arith.addf %414, %413 : vector<2x32xf32>
    %416 = arith.divf %414, %415 : vector<2x32xf32>
    %417 = arith.mulf %408, %357 : vector<2x32xf32>
    %418 = arith.mulf %402, %410 : vector<2x32xf32>
    %419 = arith.addf %417, %418 : vector<2x32xf32>
    %420 = math.tanh %419 : vector<2x32xf32>
    %421 = arith.mulf %416, %420 : vector<2x32xf32>
    %c0_124 = arith.constant 0 : index
    %c0_125 = arith.constant 0 : index
    %c0_126 = arith.constant 0 : index
    %422 = vector.load %arg10[%c0_124, %c0_125, %c0_126] : memref<2x8x32xf32, #tpu.memory_space<vmem>>, vector<2x8x32xf32>
    %423 = vector.shape_cast %421 : vector<2x32xf32> to vector<2x1x32xf32>
    %424 = vector.broadcast %423 : vector<2x1x32xf32> to vector<2x8x32xf32>
    %425 = arith.mulf %422, %424 : vector<2x8x32xf32>
    %cst_127 = arith.constant dense<0.000000e+00> : vector<2x8xf32>
    %426 = vector.multi_reduction <add>, %425, %cst_127 [2] : vector<2x8x32xf32> to vector<2x8xf32>
    %cst_128 = arith.constant 0.000000e+00 : f32
    %427 = vector.broadcast %cst_128 : f32 to vector<2x8xf32>
    %428 = arith.cmpf ogt, %384, %427 : vector<2x8xf32>
    %cst_129 = arith.constant -1.000000e+30 : f32
    %429 = vector.broadcast %cst_129 : f32 to vector<2x8xf32>
    %430 = arith.select %428, %429, %426 : vector<2x8xi1>, vector<2x8xf32>
    %c2_130 = arith.constant 2 : index
    %c0_131 = arith.constant 0 : index
    %c0_132 = arith.constant 0 : index
    %431 = vector.load %arg1[%c2_130, %c0_131, %c0_132] : memref<8x2x8xf32, #tpu.memory_space<vmem>>, vector<1x2x8xf32>
    %432 = vector.shape_cast %431 : vector<1x2x8xf32> to vector<2x8xf32>
    %433 = arith.addf %430, %432 : vector<2x8xf32>
    %cst_133 = arith.constant dense<0xFF800000> : vector<2xf32>
    %434 = vector.multi_reduction <maximumf>, %433, %cst_133 [1] : vector<2x8xf32> to vector<2xf32>
    %435 = vector.shape_cast %434 : vector<2xf32> to vector<2x1xf32>
    %436 = vector.broadcast %435 : vector<2x1xf32> to vector<2x8xf32>
    %437 = arith.cmpf oge, %433, %436 : vector<2x8xf32>
    %c8_i32_134 = arith.constant 8 : i32
    %438 = vector.broadcast %c8_i32_134 : i32 to vector<2x8xi32>
    %439 = arith.select %437, %6, %438 : vector<2x8xi1>, vector<2x8xi32>
    %cst_135 = arith.constant dense<2147483647> : vector<2xi32>
    %440 = vector.multi_reduction <minsi>, %439, %cst_135 [1] : vector<2x8xi32> to vector<2xi32>
    %441 = vector.shape_cast %440 : vector<2xi32> to vector<2x1xi32>
    %442 = vector.broadcast %441 : vector<2x1xi32> to vector<2x8xi32>
    %443 = arith.cmpi eq, %6, %442 : vector<2x8xi32>
    %444 = arith.extui %443 : vector<2x8xi1> to vector<2x8xi32>
    %445 = arith.sitofp %444 : vector<2x8xi32> to vector<2x8xf32>
    %446 = arith.maximumf %384, %445 : vector<2x8xf32>
    %447 = vector.shape_cast %445 : vector<2x8xf32> to vector<2x8x1xf32>
    %448 = vector.broadcast %447 : vector<2x8x1xf32> to vector<2x8x32xf32>
    %449 = arith.mulf %448, %422 : vector<2x8x32xf32>
    %cst_136 = arith.constant dense<0.000000e+00> : vector<2x32xf32>
    %450 = vector.multi_reduction <add>, %449, %cst_136 [1] : vector<2x8x32xf32> to vector<2x32xf32>
    %451 = vector.shape_cast %440 : vector<2xi32> to vector<1x2xi32>
    %c2_137 = arith.constant 2 : index
    %c0_138 = arith.constant 0 : index
    %452 = vector.load %arg8[%c2_137, %c0_138] : memref<8x2xi32, #tpu.memory_space<vmem>>, vector<1x2xi32>
    tpu.vector_store %arg8[%c2_137, %c0_138], %451 {strides = array<i32>} : memref<8x2xi32, #tpu.memory_space<vmem>>, vector<1x2xi32>,
    %453 = arith.truncf %450 : vector<2x32xf32> to vector<2x32xbf16>
    %cst_139 = arith.constant dense<0.000000e+00> : vector<2x128xf32>
    %454 = tpu.matmul %453, %1, %cst_139 {dimension_numbers = #tpu.dot_dimension_numbers<[1], [0], [0], [1], [0, 0, 1, 1], [], []>} : vector<2x32xbf16>, vector<32x128xbf16>, vector<2x128xf32> -> vector<2x128xf32>
    %455 = arith.truncf %421 : vector<2x32xf32> to vector<2x32xbf16>
    %cst_140 = arith.constant dense<0.000000e+00> : vector<2x128xf32>
    %456 = tpu.matmul %455, %2, %cst_140 {dimension_numbers = #tpu.dot_dimension_numbers<[1], [0], [0], [1], [0, 0, 1, 1], [], []>} : vector<2x32xbf16>, vector<32x128xbf16>, vector<2x128xf32> -> vector<2x128xf32>
    %457 = arith.addf %454, %456 : vector<2x128xf32>
    %458 = arith.addf %457, %5 : vector<2x128xf32>
    %459 = vector.extract_strided_slice %458 {offsets = [0, 0], sizes = [2, 32], strides = [1, 1]} : vector<2x128xf32> to vector<2x32xf32>
    %460 = arith.negf %459 : vector<2x32xf32>
    %461 = math.exp %460 : vector<2x32xf32>
    %cst_141 = arith.constant 1.000000e+00 : f32
    %462 = vector.broadcast %cst_141 : f32 to vector<2x32xf32>
    %463 = arith.addf %462, %461 : vector<2x32xf32>
    %464 = arith.divf %462, %463 : vector<2x32xf32>
    %465 = vector.extract_strided_slice %458 {offsets = [0, 32], sizes = [2, 32], strides = [1, 1]} : vector<2x128xf32> to vector<2x32xf32>
    %466 = arith.negf %465 : vector<2x32xf32>
    %467 = math.exp %466 : vector<2x32xf32>
    %cst_142 = arith.constant 1.000000e+00 : f32
    %468 = vector.broadcast %cst_142 : f32 to vector<2x32xf32>
    %469 = arith.addf %468, %467 : vector<2x32xf32>
    %470 = arith.divf %468, %469 : vector<2x32xf32>
    %471 = vector.extract_strided_slice %458 {offsets = [0, 64], sizes = [2, 32], strides = [1, 1]} : vector<2x128xf32> to vector<2x32xf32>
    %472 = math.tanh %471 : vector<2x32xf32>
    %473 = vector.extract_strided_slice %458 {offsets = [0, 96], sizes = [2, 32], strides = [1, 1]} : vector<2x128xf32> to vector<2x32xf32>
    %474 = arith.negf %473 : vector<2x32xf32>
    %475 = math.exp %474 : vector<2x32xf32>
    %cst_143 = arith.constant 1.000000e+00 : f32
    %476 = vector.broadcast %cst_143 : f32 to vector<2x32xf32>
    %477 = arith.addf %476, %475 : vector<2x32xf32>
    %478 = arith.divf %476, %477 : vector<2x32xf32>
    %479 = arith.mulf %470, %419 : vector<2x32xf32>
    %480 = arith.mulf %464, %472 : vector<2x32xf32>
    %481 = arith.addf %479, %480 : vector<2x32xf32>
    %482 = math.tanh %481 : vector<2x32xf32>
    %483 = arith.mulf %478, %482 : vector<2x32xf32>
    %c0_144 = arith.constant 0 : index
    %c0_145 = arith.constant 0 : index
    %c0_146 = arith.constant 0 : index
    %484 = vector.load %arg10[%c0_144, %c0_145, %c0_146] : memref<2x8x32xf32, #tpu.memory_space<vmem>>, vector<2x8x32xf32>
    %485 = vector.shape_cast %483 : vector<2x32xf32> to vector<2x1x32xf32>
    %486 = vector.broadcast %485 : vector<2x1x32xf32> to vector<2x8x32xf32>
    %487 = arith.mulf %484, %486 : vector<2x8x32xf32>
    %cst_147 = arith.constant dense<0.000000e+00> : vector<2x8xf32>
    %488 = vector.multi_reduction <add>, %487, %cst_147 [2] : vector<2x8x32xf32> to vector<2x8xf32>
    %cst_148 = arith.constant 0.000000e+00 : f32
    %489 = vector.broadcast %cst_148 : f32 to vector<2x8xf32>
    %490 = arith.cmpf ogt, %446, %489 : vector<2x8xf32>
    %cst_149 = arith.constant -1.000000e+30 : f32
    %491 = vector.broadcast %cst_149 : f32 to vector<2x8xf32>
    %492 = arith.select %490, %491, %488 : vector<2x8xi1>, vector<2x8xf32>
    %c3_150 = arith.constant 3 : index
    %c0_151 = arith.constant 0 : index
    %c0_152 = arith.constant 0 : index
    %493 = vector.load %arg1[%c3_150, %c0_151, %c0_152] : memref<8x2x8xf32, #tpu.memory_space<vmem>>, vector<1x2x8xf32>
    %494 = vector.shape_cast %493 : vector<1x2x8xf32> to vector<2x8xf32>
    %495 = arith.addf %492, %494 : vector<2x8xf32>
    %cst_153 = arith.constant dense<0xFF800000> : vector<2xf32>
    %496 = vector.multi_reduction <maximumf>, %495, %cst_153 [1] : vector<2x8xf32> to vector<2xf32>
    %497 = vector.shape_cast %496 : vector<2xf32> to vector<2x1xf32>
    %498 = vector.broadcast %497 : vector<2x1xf32> to vector<2x8xf32>
    %499 = arith.cmpf oge, %495, %498 : vector<2x8xf32>
    %c8_i32_154 = arith.constant 8 : i32
    %500 = vector.broadcast %c8_i32_154 : i32 to vector<2x8xi32>
    %501 = arith.select %499, %6, %500 : vector<2x8xi1>, vector<2x8xi32>
    %cst_155 = arith.constant dense<2147483647> : vector<2xi32>
    %502 = vector.multi_reduction <minsi>, %501, %cst_155 [1] : vector<2x8xi32> to vector<2xi32>
    %503 = vector.shape_cast %502 : vector<2xi32> to vector<2x1xi32>
    %504 = vector.broadcast %503 : vector<2x1xi32> to vector<2x8xi32>
    %505 = arith.cmpi eq, %6, %504 : vector<2x8xi32>
    %506 = arith.extui %505 : vector<2x8xi1> to vector<2x8xi32>
    %507 = arith.sitofp %506 : vector<2x8xi32> to vector<2x8xf32>
    %508 = arith.maximumf %446, %507 : vector<2x8xf32>
    %509 = vector.shape_cast %507 : vector<2x8xf32> to vector<2x8x1xf32>
    %510 = vector.broadcast %509 : vector<2x8x1xf32> to vector<2x8x32xf32>
    %511 = arith.mulf %510, %484 : vector<2x8x32xf32>
    %cst_156 = arith.constant dense<0.000000e+00> : vector<2x32xf32>
    %512 = vector.multi_reduction <add>, %511, %cst_156 [1] : vector<2x8x32xf32> to vector<2x32xf32>
    %513 = vector.shape_cast %502 : vector<2xi32> to vector<1x2xi32>
    %c3_157 = arith.constant 3 : index
    %c0_158 = arith.constant 0 : index
    %514 = vector.load %arg8[%c3_157, %c0_158] : memref<8x2xi32, #tpu.memory_space<vmem>>, vector<1x2xi32>
    tpu.vector_store %arg8[%c3_157, %c0_158], %513 {strides = array<i32>} : memref<8x2xi32, #tpu.memory_space<vmem>>, vector<1x2xi32>,
    %515 = arith.truncf %512 : vector<2x32xf32> to vector<2x32xbf16>
    %cst_159 = arith.constant dense<0.000000e+00> : vector<2x128xf32>
    %516 = tpu.matmul %515, %1, %cst_159 {dimension_numbers = #tpu.dot_dimension_numbers<[1], [0], [0], [1], [0, 0, 1, 1], [], []>} : vector<2x32xbf16>, vector<32x128xbf16>, vector<2x128xf32> -> vector<2x128xf32>
    %517 = arith.truncf %483 : vector<2x32xf32> to vector<2x32xbf16>
    %cst_160 = arith.constant dense<0.000000e+00> : vector<2x128xf32>
    %518 = tpu.matmul %517, %2, %cst_160 {dimension_numbers = #tpu.dot_dimension_numbers<[1], [0], [0], [1], [0, 0, 1, 1], [], []>} : vector<2x32xbf16>, vector<32x128xbf16>, vector<2x128xf32> -> vector<2x128xf32>
    %519 = arith.addf %516, %518 : vector<2x128xf32>
    %520 = arith.addf %519, %5 : vector<2x128xf32>
    %521 = vector.extract_strided_slice %520 {offsets = [0, 0], sizes = [2, 32], strides = [1, 1]} : vector<2x128xf32> to vector<2x32xf32>
    %522 = arith.negf %521 : vector<2x32xf32>
    %523 = math.exp %522 : vector<2x32xf32>
    %cst_161 = arith.constant 1.000000e+00 : f32
    %524 = vector.broadcast %cst_161 : f32 to vector<2x32xf32>
    %525 = arith.addf %524, %523 : vector<2x32xf32>
    %526 = arith.divf %524, %525 : vector<2x32xf32>
    %527 = vector.extract_strided_slice %520 {offsets = [0, 32], sizes = [2, 32], strides = [1, 1]} : vector<2x128xf32> to vector<2x32xf32>
    %528 = arith.negf %527 : vector<2x32xf32>
    %529 = math.exp %528 : vector<2x32xf32>
    %cst_162 = arith.constant 1.000000e+00 : f32
    %530 = vector.broadcast %cst_162 : f32 to vector<2x32xf32>
    %531 = arith.addf %530, %529 : vector<2x32xf32>
    %532 = arith.divf %530, %531 : vector<2x32xf32>
    %533 = vector.extract_strided_slice %520 {offsets = [0, 64], sizes = [2, 32], strides = [1, 1]} : vector<2x128xf32> to vector<2x32xf32>
    %534 = math.tanh %533 : vector<2x32xf32>
    %535 = vector.extract_strided_slice %520 {offsets = [0, 96], sizes = [2, 32], strides = [1, 1]} : vector<2x128xf32> to vector<2x32xf32>
    %536 = arith.negf %535 : vector<2x32xf32>
    %537 = math.exp %536 : vector<2x32xf32>
    %cst_163 = arith.constant 1.000000e+00 : f32
    %538 = vector.broadcast %cst_163 : f32 to vector<2x32xf32>
    %539 = arith.addf %538, %537 : vector<2x32xf32>
    %540 = arith.divf %538, %539 : vector<2x32xf32>
    %541 = arith.mulf %532, %481 : vector<2x32xf32>
    %542 = arith.mulf %526, %534 : vector<2x32xf32>
    %543 = arith.addf %541, %542 : vector<2x32xf32>
    %544 = math.tanh %543 : vector<2x32xf32>
    %545 = arith.mulf %540, %544 : vector<2x32xf32>
    %c0_164 = arith.constant 0 : index
    %c0_165 = arith.constant 0 : index
    %c0_166 = arith.constant 0 : index
    %546 = vector.load %arg10[%c0_164, %c0_165, %c0_166] : memref<2x8x32xf32, #tpu.memory_space<vmem>>, vector<2x8x32xf32>
    %547 = vector.shape_cast %545 : vector<2x32xf32> to vector<2x1x32xf32>
    %548 = vector.broadcast %547 : vector<2x1x32xf32> to vector<2x8x32xf32>
    %549 = arith.mulf %546, %548 : vector<2x8x32xf32>
    %cst_167 = arith.constant dense<0.000000e+00> : vector<2x8xf32>
    %550 = vector.multi_reduction <add>, %549, %cst_167 [2] : vector<2x8x32xf32> to vector<2x8xf32>
    %cst_168 = arith.constant 0.000000e+00 : f32
    %551 = vector.broadcast %cst_168 : f32 to vector<2x8xf32>
    %552 = arith.cmpf ogt, %508, %551 : vector<2x8xf32>
    %cst_169 = arith.constant -1.000000e+30 : f32
    %553 = vector.broadcast %cst_169 : f32 to vector<2x8xf32>
    %554 = arith.select %552, %553, %550 : vector<2x8xi1>, vector<2x8xf32>
    %c4_170 = arith.constant 4 : index
    %c0_171 = arith.constant 0 : index
    %c0_172 = arith.constant 0 : index
    %555 = vector.load %arg1[%c4_170, %c0_171, %c0_172] : memref<8x2x8xf32, #tpu.memory_space<vmem>>, vector<1x2x8xf32>
    %556 = vector.shape_cast %555 : vector<1x2x8xf32> to vector<2x8xf32>
    %557 = arith.addf %554, %556 : vector<2x8xf32>
    %cst_173 = arith.constant dense<0xFF800000> : vector<2xf32>
    %558 = vector.multi_reduction <maximumf>, %557, %cst_173 [1] : vector<2x8xf32> to vector<2xf32>
    %559 = vector.shape_cast %558 : vector<2xf32> to vector<2x1xf32>
    %560 = vector.broadcast %559 : vector<2x1xf32> to vector<2x8xf32>
    %561 = arith.cmpf oge, %557, %560 : vector<2x8xf32>
    %c8_i32_174 = arith.constant 8 : i32
    %562 = vector.broadcast %c8_i32_174 : i32 to vector<2x8xi32>
    %563 = arith.select %561, %6, %562 : vector<2x8xi1>, vector<2x8xi32>
    %cst_175 = arith.constant dense<2147483647> : vector<2xi32>
    %564 = vector.multi_reduction <minsi>, %563, %cst_175 [1] : vector<2x8xi32> to vector<2xi32>
    %565 = vector.shape_cast %564 : vector<2xi32> to vector<2x1xi32>
    %566 = vector.broadcast %565 : vector<2x1xi32> to vector<2x8xi32>
    %567 = arith.cmpi eq, %6, %566 : vector<2x8xi32>
    %568 = arith.extui %567 : vector<2x8xi1> to vector<2x8xi32>
    %569 = arith.sitofp %568 : vector<2x8xi32> to vector<2x8xf32>
    %570 = arith.maximumf %508, %569 : vector<2x8xf32>
    %571 = vector.shape_cast %569 : vector<2x8xf32> to vector<2x8x1xf32>
    %572 = vector.broadcast %571 : vector<2x8x1xf32> to vector<2x8x32xf32>
    %573 = arith.mulf %572, %546 : vector<2x8x32xf32>
    %cst_176 = arith.constant dense<0.000000e+00> : vector<2x32xf32>
    %574 = vector.multi_reduction <add>, %573, %cst_176 [1] : vector<2x8x32xf32> to vector<2x32xf32>
    %575 = vector.shape_cast %564 : vector<2xi32> to vector<1x2xi32>
    %c4_177 = arith.constant 4 : index
    %c0_178 = arith.constant 0 : index
    %576 = vector.load %arg8[%c4_177, %c0_178] : memref<8x2xi32, #tpu.memory_space<vmem>>, vector<1x2xi32>
    tpu.vector_store %arg8[%c4_177, %c0_178], %575 {strides = array<i32>} : memref<8x2xi32, #tpu.memory_space<vmem>>, vector<1x2xi32>,
    %577 = arith.truncf %574 : vector<2x32xf32> to vector<2x32xbf16>
    %cst_179 = arith.constant dense<0.000000e+00> : vector<2x128xf32>
    %578 = tpu.matmul %577, %1, %cst_179 {dimension_numbers = #tpu.dot_dimension_numbers<[1], [0], [0], [1], [0, 0, 1, 1], [], []>} : vector<2x32xbf16>, vector<32x128xbf16>, vector<2x128xf32> -> vector<2x128xf32>
    %579 = arith.truncf %545 : vector<2x32xf32> to vector<2x32xbf16>
    %cst_180 = arith.constant dense<0.000000e+00> : vector<2x128xf32>
    %580 = tpu.matmul %579, %2, %cst_180 {dimension_numbers = #tpu.dot_dimension_numbers<[1], [0], [0], [1], [0, 0, 1, 1], [], []>} : vector<2x32xbf16>, vector<32x128xbf16>, vector<2x128xf32> -> vector<2x128xf32>
    %581 = arith.addf %578, %580 : vector<2x128xf32>
    %582 = arith.addf %581, %5 : vector<2x128xf32>
    %583 = vector.extract_strided_slice %582 {offsets = [0, 0], sizes = [2, 32], strides = [1, 1]} : vector<2x128xf32> to vector<2x32xf32>
    %584 = arith.negf %583 : vector<2x32xf32>
    %585 = math.exp %584 : vector<2x32xf32>
    %cst_181 = arith.constant 1.000000e+00 : f32
    %586 = vector.broadcast %cst_181 : f32 to vector<2x32xf32>
    %587 = arith.addf %586, %585 : vector<2x32xf32>
    %588 = arith.divf %586, %587 : vector<2x32xf32>
    %589 = vector.extract_strided_slice %582 {offsets = [0, 32], sizes = [2, 32], strides = [1, 1]} : vector<2x128xf32> to vector<2x32xf32>
    %590 = arith.negf %589 : vector<2x32xf32>
    %591 = math.exp %590 : vector<2x32xf32>
    %cst_182 = arith.constant 1.000000e+00 : f32
    %592 = vector.broadcast %cst_182 : f32 to vector<2x32xf32>
    %593 = arith.addf %592, %591 : vector<2x32xf32>
    %594 = arith.divf %592, %593 : vector<2x32xf32>
    %595 = vector.extract_strided_slice %582 {offsets = [0, 64], sizes = [2, 32], strides = [1, 1]} : vector<2x128xf32> to vector<2x32xf32>
    %596 = math.tanh %595 : vector<2x32xf32>
    %597 = vector.extract_strided_slice %582 {offsets = [0, 96], sizes = [2, 32], strides = [1, 1]} : vector<2x128xf32> to vector<2x32xf32>
    %598 = arith.negf %597 : vector<2x32xf32>
    %599 = math.exp %598 : vector<2x32xf32>
    %cst_183 = arith.constant 1.000000e+00 : f32
    %600 = vector.broadcast %cst_183 : f32 to vector<2x32xf32>
    %601 = arith.addf %600, %599 : vector<2x32xf32>
    %602 = arith.divf %600, %601 : vector<2x32xf32>
    %603 = arith.mulf %594, %543 : vector<2x32xf32>
    %604 = arith.mulf %588, %596 : vector<2x32xf32>
    %605 = arith.addf %603, %604 : vector<2x32xf32>
    %606 = math.tanh %605 : vector<2x32xf32>
    %607 = arith.mulf %602, %606 : vector<2x32xf32>
    %c0_184 = arith.constant 0 : index
    %c0_185 = arith.constant 0 : index
    %c0_186 = arith.constant 0 : index
    %608 = vector.load %arg10[%c0_184, %c0_185, %c0_186] : memref<2x8x32xf32, #tpu.memory_space<vmem>>, vector<2x8x32xf32>
    %609 = vector.shape_cast %607 : vector<2x32xf32> to vector<2x1x32xf32>
    %610 = vector.broadcast %609 : vector<2x1x32xf32> to vector<2x8x32xf32>
    %611 = arith.mulf %608, %610 : vector<2x8x32xf32>
    %cst_187 = arith.constant dense<0.000000e+00> : vector<2x8xf32>
    %612 = vector.multi_reduction <add>, %611, %cst_187 [2] : vector<2x8x32xf32> to vector<2x8xf32>
    %cst_188 = arith.constant 0.000000e+00 : f32
    %613 = vector.broadcast %cst_188 : f32 to vector<2x8xf32>
    %614 = arith.cmpf ogt, %570, %613 : vector<2x8xf32>
    %cst_189 = arith.constant -1.000000e+30 : f32
    %615 = vector.broadcast %cst_189 : f32 to vector<2x8xf32>
    %616 = arith.select %614, %615, %612 : vector<2x8xi1>, vector<2x8xf32>
    %c5_190 = arith.constant 5 : index
    %c0_191 = arith.constant 0 : index
    %c0_192 = arith.constant 0 : index
    %617 = vector.load %arg1[%c5_190, %c0_191, %c0_192] : memref<8x2x8xf32, #tpu.memory_space<vmem>>, vector<1x2x8xf32>
    %618 = vector.shape_cast %617 : vector<1x2x8xf32> to vector<2x8xf32>
    %619 = arith.addf %616, %618 : vector<2x8xf32>
    %cst_193 = arith.constant dense<0xFF800000> : vector<2xf32>
    %620 = vector.multi_reduction <maximumf>, %619, %cst_193 [1] : vector<2x8xf32> to vector<2xf32>
    %621 = vector.shape_cast %620 : vector<2xf32> to vector<2x1xf32>
    %622 = vector.broadcast %621 : vector<2x1xf32> to vector<2x8xf32>
    %623 = arith.cmpf oge, %619, %622 : vector<2x8xf32>
    %c8_i32_194 = arith.constant 8 : i32
    %624 = vector.broadcast %c8_i32_194 : i32 to vector<2x8xi32>
    %625 = arith.select %623, %6, %624 : vector<2x8xi1>, vector<2x8xi32>
    %cst_195 = arith.constant dense<2147483647> : vector<2xi32>
    %626 = vector.multi_reduction <minsi>, %625, %cst_195 [1] : vector<2x8xi32> to vector<2xi32>
    %627 = vector.shape_cast %626 : vector<2xi32> to vector<2x1xi32>
    %628 = vector.broadcast %627 : vector<2x1xi32> to vector<2x8xi32>
    %629 = arith.cmpi eq, %6, %628 : vector<2x8xi32>
    %630 = arith.extui %629 : vector<2x8xi1> to vector<2x8xi32>
    %631 = arith.sitofp %630 : vector<2x8xi32> to vector<2x8xf32>
    %632 = arith.maximumf %570, %631 : vector<2x8xf32>
    %633 = vector.shape_cast %631 : vector<2x8xf32> to vector<2x8x1xf32>
    %634 = vector.broadcast %633 : vector<2x8x1xf32> to vector<2x8x32xf32>
    %635 = arith.mulf %634, %608 : vector<2x8x32xf32>
    %cst_196 = arith.constant dense<0.000000e+00> : vector<2x32xf32>
    %636 = vector.multi_reduction <add>, %635, %cst_196 [1] : vector<2x8x32xf32> to vector<2x32xf32>
    %637 = vector.shape_cast %626 : vector<2xi32> to vector<1x2xi32>
    %c5_197 = arith.constant 5 : index
    %c0_198 = arith.constant 0 : index
    %638 = vector.load %arg8[%c5_197, %c0_198] : memref<8x2xi32, #tpu.memory_space<vmem>>, vector<1x2xi32>
    tpu.vector_store %arg8[%c5_197, %c0_198], %637 {strides = array<i32>} : memref<8x2xi32, #tpu.memory_space<vmem>>, vector<1x2xi32>,
    %639 = arith.truncf %636 : vector<2x32xf32> to vector<2x32xbf16>
    %cst_199 = arith.constant dense<0.000000e+00> : vector<2x128xf32>
    %640 = tpu.matmul %639, %1, %cst_199 {dimension_numbers = #tpu.dot_dimension_numbers<[1], [0], [0], [1], [0, 0, 1, 1], [], []>} : vector<2x32xbf16>, vector<32x128xbf16>, vector<2x128xf32> -> vector<2x128xf32>
    %641 = arith.truncf %607 : vector<2x32xf32> to vector<2x32xbf16>
    %cst_200 = arith.constant dense<0.000000e+00> : vector<2x128xf32>
    %642 = tpu.matmul %641, %2, %cst_200 {dimension_numbers = #tpu.dot_dimension_numbers<[1], [0], [0], [1], [0, 0, 1, 1], [], []>} : vector<2x32xbf16>, vector<32x128xbf16>, vector<2x128xf32> -> vector<2x128xf32>
    %643 = arith.addf %640, %642 : vector<2x128xf32>
    %644 = arith.addf %643, %5 : vector<2x128xf32>
    %645 = vector.extract_strided_slice %644 {offsets = [0, 0], sizes = [2, 32], strides = [1, 1]} : vector<2x128xf32> to vector<2x32xf32>
    %646 = arith.negf %645 : vector<2x32xf32>
    %647 = math.exp %646 : vector<2x32xf32>
    %cst_201 = arith.constant 1.000000e+00 : f32
    %648 = vector.broadcast %cst_201 : f32 to vector<2x32xf32>
    %649 = arith.addf %648, %647 : vector<2x32xf32>
    %650 = arith.divf %648, %649 : vector<2x32xf32>
    %651 = vector.extract_strided_slice %644 {offsets = [0, 32], sizes = [2, 32], strides = [1, 1]} : vector<2x128xf32> to vector<2x32xf32>
    %652 = arith.negf %651 : vector<2x32xf32>
    %653 = math.exp %652 : vector<2x32xf32>
    %cst_202 = arith.constant 1.000000e+00 : f32
    %654 = vector.broadcast %cst_202 : f32 to vector<2x32xf32>
    %655 = arith.addf %654, %653 : vector<2x32xf32>
    %656 = arith.divf %654, %655 : vector<2x32xf32>
    %657 = vector.extract_strided_slice %644 {offsets = [0, 64], sizes = [2, 32], strides = [1, 1]} : vector<2x128xf32> to vector<2x32xf32>
    %658 = math.tanh %657 : vector<2x32xf32>
    %659 = vector.extract_strided_slice %644 {offsets = [0, 96], sizes = [2, 32], strides = [1, 1]} : vector<2x128xf32> to vector<2x32xf32>
    %660 = arith.negf %659 : vector<2x32xf32>
    %661 = math.exp %660 : vector<2x32xf32>
    %cst_203 = arith.constant 1.000000e+00 : f32
    %662 = vector.broadcast %cst_203 : f32 to vector<2x32xf32>
    %663 = arith.addf %662, %661 : vector<2x32xf32>
    %664 = arith.divf %662, %663 : vector<2x32xf32>
    %665 = arith.mulf %656, %605 : vector<2x32xf32>
    %666 = arith.mulf %650, %658 : vector<2x32xf32>
    %667 = arith.addf %665, %666 : vector<2x32xf32>
    %668 = math.tanh %667 : vector<2x32xf32>
    %669 = arith.mulf %664, %668 : vector<2x32xf32>
    %c0_204 = arith.constant 0 : index
    %c0_205 = arith.constant 0 : index
    %c0_206 = arith.constant 0 : index
    %670 = vector.load %arg10[%c0_204, %c0_205, %c0_206] : memref<2x8x32xf32, #tpu.memory_space<vmem>>, vector<2x8x32xf32>
    %671 = vector.shape_cast %669 : vector<2x32xf32> to vector<2x1x32xf32>
    %672 = vector.broadcast %671 : vector<2x1x32xf32> to vector<2x8x32xf32>
    %673 = arith.mulf %670, %672 : vector<2x8x32xf32>
    %cst_207 = arith.constant dense<0.000000e+00> : vector<2x8xf32>
    %674 = vector.multi_reduction <add>, %673, %cst_207 [2] : vector<2x8x32xf32> to vector<2x8xf32>
    %cst_208 = arith.constant 0.000000e+00 : f32
    %675 = vector.broadcast %cst_208 : f32 to vector<2x8xf32>
    %676 = arith.cmpf ogt, %632, %675 : vector<2x8xf32>
    %cst_209 = arith.constant -1.000000e+30 : f32
    %677 = vector.broadcast %cst_209 : f32 to vector<2x8xf32>
    %678 = arith.select %676, %677, %674 : vector<2x8xi1>, vector<2x8xf32>
    %c6_210 = arith.constant 6 : index
    %c0_211 = arith.constant 0 : index
    %c0_212 = arith.constant 0 : index
    %679 = vector.load %arg1[%c6_210, %c0_211, %c0_212] : memref<8x2x8xf32, #tpu.memory_space<vmem>>, vector<1x2x8xf32>
    %680 = vector.shape_cast %679 : vector<1x2x8xf32> to vector<2x8xf32>
    %681 = arith.addf %678, %680 : vector<2x8xf32>
    %cst_213 = arith.constant dense<0xFF800000> : vector<2xf32>
    %682 = vector.multi_reduction <maximumf>, %681, %cst_213 [1] : vector<2x8xf32> to vector<2xf32>
    %683 = vector.shape_cast %682 : vector<2xf32> to vector<2x1xf32>
    %684 = vector.broadcast %683 : vector<2x1xf32> to vector<2x8xf32>
    %685 = arith.cmpf oge, %681, %684 : vector<2x8xf32>
    %c8_i32_214 = arith.constant 8 : i32
    %686 = vector.broadcast %c8_i32_214 : i32 to vector<2x8xi32>
    %687 = arith.select %685, %6, %686 : vector<2x8xi1>, vector<2x8xi32>
    %cst_215 = arith.constant dense<2147483647> : vector<2xi32>
    %688 = vector.multi_reduction <minsi>, %687, %cst_215 [1] : vector<2x8xi32> to vector<2xi32>
    %689 = vector.shape_cast %688 : vector<2xi32> to vector<2x1xi32>
    %690 = vector.broadcast %689 : vector<2x1xi32> to vector<2x8xi32>
    %691 = arith.cmpi eq, %6, %690 : vector<2x8xi32>
    %692 = arith.extui %691 : vector<2x8xi1> to vector<2x8xi32>
    %693 = arith.sitofp %692 : vector<2x8xi32> to vector<2x8xf32>
    %694 = arith.maximumf %632, %693 : vector<2x8xf32>
    %695 = vector.shape_cast %693 : vector<2x8xf32> to vector<2x8x1xf32>
    %696 = vector.broadcast %695 : vector<2x8x1xf32> to vector<2x8x32xf32>
    %697 = arith.mulf %696, %670 : vector<2x8x32xf32>
    %cst_216 = arith.constant dense<0.000000e+00> : vector<2x32xf32>
    %698 = vector.multi_reduction <add>, %697, %cst_216 [1] : vector<2x8x32xf32> to vector<2x32xf32>
    %699 = vector.shape_cast %688 : vector<2xi32> to vector<1x2xi32>
    %c6_217 = arith.constant 6 : index
    %c0_218 = arith.constant 0 : index
    %700 = vector.load %arg8[%c6_217, %c0_218] : memref<8x2xi32, #tpu.memory_space<vmem>>, vector<1x2xi32>
    tpu.vector_store %arg8[%c6_217, %c0_218], %699 {strides = array<i32>} : memref<8x2xi32, #tpu.memory_space<vmem>>, vector<1x2xi32>,
    %701 = arith.truncf %698 : vector<2x32xf32> to vector<2x32xbf16>
    %cst_219 = arith.constant dense<0.000000e+00> : vector<2x128xf32>
    %702 = tpu.matmul %701, %1, %cst_219 {dimension_numbers = #tpu.dot_dimension_numbers<[1], [0], [0], [1], [0, 0, 1, 1], [], []>} : vector<2x32xbf16>, vector<32x128xbf16>, vector<2x128xf32> -> vector<2x128xf32>
    %703 = arith.truncf %669 : vector<2x32xf32> to vector<2x32xbf16>
    %cst_220 = arith.constant dense<0.000000e+00> : vector<2x128xf32>
    %704 = tpu.matmul %703, %2, %cst_220 {dimension_numbers = #tpu.dot_dimension_numbers<[1], [0], [0], [1], [0, 0, 1, 1], [], []>} : vector<2x32xbf16>, vector<32x128xbf16>, vector<2x128xf32> -> vector<2x128xf32>
    %705 = arith.addf %702, %704 : vector<2x128xf32>
    %706 = arith.addf %705, %5 : vector<2x128xf32>
    %707 = vector.extract_strided_slice %706 {offsets = [0, 0], sizes = [2, 32], strides = [1, 1]} : vector<2x128xf32> to vector<2x32xf32>
    %708 = arith.negf %707 : vector<2x32xf32>
    %709 = math.exp %708 : vector<2x32xf32>
    %cst_221 = arith.constant 1.000000e+00 : f32
    %710 = vector.broadcast %cst_221 : f32 to vector<2x32xf32>
    %711 = arith.addf %710, %709 : vector<2x32xf32>
    %712 = arith.divf %710, %711 : vector<2x32xf32>
    %713 = vector.extract_strided_slice %706 {offsets = [0, 32], sizes = [2, 32], strides = [1, 1]} : vector<2x128xf32> to vector<2x32xf32>
    %714 = arith.negf %713 : vector<2x32xf32>
    %715 = math.exp %714 : vector<2x32xf32>
    %cst_222 = arith.constant 1.000000e+00 : f32
    %716 = vector.broadcast %cst_222 : f32 to vector<2x32xf32>
    %717 = arith.addf %716, %715 : vector<2x32xf32>
    %718 = arith.divf %716, %717 : vector<2x32xf32>
    %719 = vector.extract_strided_slice %706 {offsets = [0, 64], sizes = [2, 32], strides = [1, 1]} : vector<2x128xf32> to vector<2x32xf32>
    %720 = math.tanh %719 : vector<2x32xf32>
    %721 = vector.extract_strided_slice %706 {offsets = [0, 96], sizes = [2, 32], strides = [1, 1]} : vector<2x128xf32> to vector<2x32xf32>
    %722 = arith.negf %721 : vector<2x32xf32>
    %723 = math.exp %722 : vector<2x32xf32>
    %cst_223 = arith.constant 1.000000e+00 : f32
    %724 = vector.broadcast %cst_223 : f32 to vector<2x32xf32>
    %725 = arith.addf %724, %723 : vector<2x32xf32>
    %726 = arith.divf %724, %725 : vector<2x32xf32>
    %727 = arith.mulf %718, %667 : vector<2x32xf32>
    %728 = arith.mulf %712, %720 : vector<2x32xf32>
    %729 = arith.addf %727, %728 : vector<2x32xf32>
    %730 = math.tanh %729 : vector<2x32xf32>
    %731 = arith.mulf %726, %730 : vector<2x32xf32>
    %c0_224 = arith.constant 0 : index
    %c0_225 = arith.constant 0 : index
    %c0_226 = arith.constant 0 : index
    %732 = vector.load %arg10[%c0_224, %c0_225, %c0_226] : memref<2x8x32xf32, #tpu.memory_space<vmem>>, vector<2x8x32xf32>
    %733 = vector.shape_cast %731 : vector<2x32xf32> to vector<2x1x32xf32>
    %734 = vector.broadcast %733 : vector<2x1x32xf32> to vector<2x8x32xf32>
    %735 = arith.mulf %732, %734 : vector<2x8x32xf32>
    %cst_227 = arith.constant dense<0.000000e+00> : vector<2x8xf32>
    %736 = vector.multi_reduction <add>, %735, %cst_227 [2] : vector<2x8x32xf32> to vector<2x8xf32>
    %cst_228 = arith.constant 0.000000e+00 : f32
    %737 = vector.broadcast %cst_228 : f32 to vector<2x8xf32>
    %738 = arith.cmpf ogt, %694, %737 : vector<2x8xf32>
    %cst_229 = arith.constant -1.000000e+30 : f32
    %739 = vector.broadcast %cst_229 : f32 to vector<2x8xf32>
    %740 = arith.select %738, %739, %736 : vector<2x8xi1>, vector<2x8xf32>
    %c7_230 = arith.constant 7 : index
    %c0_231 = arith.constant 0 : index
    %c0_232 = arith.constant 0 : index
    %741 = vector.load %arg1[%c7_230, %c0_231, %c0_232] : memref<8x2x8xf32, #tpu.memory_space<vmem>>, vector<1x2x8xf32>
    %742 = vector.shape_cast %741 : vector<1x2x8xf32> to vector<2x8xf32>
    %743 = arith.addf %740, %742 : vector<2x8xf32>
    %cst_233 = arith.constant dense<0xFF800000> : vector<2xf32>
    %744 = vector.multi_reduction <maximumf>, %743, %cst_233 [1] : vector<2x8xf32> to vector<2xf32>
    %745 = vector.shape_cast %744 : vector<2xf32> to vector<2x1xf32>
    %746 = vector.broadcast %745 : vector<2x1xf32> to vector<2x8xf32>
    %747 = arith.cmpf oge, %743, %746 : vector<2x8xf32>
    %c8_i32_234 = arith.constant 8 : i32
    %748 = vector.broadcast %c8_i32_234 : i32 to vector<2x8xi32>
    %749 = arith.select %747, %6, %748 : vector<2x8xi1>, vector<2x8xi32>
    %cst_235 = arith.constant dense<2147483647> : vector<2xi32>
    %750 = vector.multi_reduction <minsi>, %749, %cst_235 [1] : vector<2x8xi32> to vector<2xi32>
    %751 = vector.shape_cast %750 : vector<2xi32> to vector<1x2xi32>
    %c7_236 = arith.constant 7 : index
    %c0_237 = arith.constant 0 : index
    %752 = vector.load %arg8[%c7_236, %c0_237] : memref<8x2xi32, #tpu.memory_space<vmem>>, vector<1x2xi32>
    tpu.vector_store %arg8[%c7_236, %c0_237], %751 {strides = array<i32>} : memref<8x2xi32, #tpu.memory_space<vmem>>, vector<1x2xi32>,
    return
  }
}

</mosaic_0001>

<llo_original>
// kernel: pointer_net_forward.1
$region0: #{pointer_net_forward.1}
  #allocation0 [shape = 'u32[]', space=smem, size = 0x4, offset = 0x4, fixed_abs, tag = 'smem constant byte address 0x4 - core index']
  #allocation1 [shape = 'u32[144,128]{1,0:T(1,128)}', space=vmem, size = 0x12000, scoped, tag = 'internal scratch']
  #allocation2 [shape = 'f32[16,128]{1,0:T(8,128)}', space=vmem, size = 0x2000, scoped, tag = 'scratch operand']
  #allocation3 [shape = 'f32[2,8,32]{2,1,0:T(8,128)}', space=vmem, size = 0x2000, scoped, tag = 'scratch operand']
  %s0 = inlined_call_operand.vmem [shape: f32[16,4], index: 0, kind: input, shape index: {}]
  %s1 = inlined_call_operand.vmem [shape: f32[8,2,8], index: 1, kind: input, shape index: {}]
  %s2 = inlined_call_operand.vmem [shape: bf16[4,128], index: 2, kind: input, shape index: {}]
  %s3 = inlined_call_operand.vmem [shape: bf16[32,128], index: 3, kind: input, shape index: {}]
  %s4 = inlined_call_operand.vmem [shape: f32[1,128], index: 4, kind: input, shape index: {}]
  %s5 = inlined_call_operand.vmem [shape: bf16[32,128], index: 5, kind: input, shape index: {}]
  %s6 = inlined_call_operand.vmem [shape: bf16[32,128], index: 6, kind: input, shape index: {}]
  %s7 = inlined_call_operand.vmem [shape: f32[1,128], index: 7, kind: input, shape index: {}]
  %s8 = inlined_call_operand.vmem [shape: s32[8,2], index: 8, kind: output, shape index: {}]
  %s9 = sld [smem:[#allocation0]]
  $region42: #{pointer_net_forward.1} parent=0
    _
  %s11 = ssub.s32 1, %s9
  %s12 = scalar_select 0, %s11, %s9
  // Predicated region
  $region2: #{pointer_net_forward.1} parent=0 // pred_check
    _
  $region3: #{pointer_net_forward.1} parent=0 // pred_check_branch
    %14 = sbr.rel (0) target = $region5
  $region4: #{pointer_net_forward.1} parent=0 // pred_region
    _
  $region5: #{pointer_net_forward.1} parent=0 // pred_fallthru
    _
  // Predicated region
  $region6: #{pointer_net_forward.1} parent=0 // pred_check
    _
  $region7: #{pointer_net_forward.1} parent=0 // pred_check_branch
    %16 = sbr.rel (0) target = $region9
  $region8: #{pointer_net_forward.1} parent=0 // pred_region
    _
  $region9: #{pointer_net_forward.1} parent=0 // pred_fallthru
    _
  // Predicated region
  $region10: #{pointer_net_forward.1} parent=0 // pred_check
    _
  $region11: #{pointer_net_forward.1} parent=0 // pred_check_branch
    %18 = sbr.rel (0) target = $region13
  $region12: #{pointer_net_forward.1} parent=0 // pred_region
    _
  $region13: #{pointer_net_forward.1} parent=0 // pred_fallthru
    _
  // Predicated region
  $region14: #{pointer_net_forward.1} parent=0 // pred_check
    _
  $region15: #{pointer_net_forward.1} parent=0 // pred_check_branch
    %20 = sbr.rel (0) target = $region17
  $region16: #{pointer_net_forward.1} parent=0 // pred_region
    _
  $region17: #{pointer_net_forward.1} parent=0 // pred_fallthru
    _
  // Predicated region
  $region18: #{pointer_net_forward.1} parent=0 // pred_check
    _
  $region19: #{pointer_net_forward.1} parent=0 // pred_check_branch
    %22 = sbr.rel (0) target = $region21
  $region20: #{pointer_net_forward.1} parent=0 // pred_region
    _
  $region21: #{pointer_net_forward.1} parent=0 // pred_fallthru
    _
  // Predicated region
  $region22: #{pointer_net_forward.1} parent=0 // pred_check
    _
  $region23: #{pointer_net_forward.1} parent=0 // pred_check_branch
    %24 = sbr.rel (0) target = $region25
  $region24: #{pointer_net_forward.1} parent=0 // pred_region
    _
  $region25: #{pointer_net_forward.1} parent=0 // pred_fallthru
    _
  // Predicated region
  $region26: #{pointer_net_forward.1} parent=0 // pred_check
    _
  $region27: #{pointer_net_forward.1} parent=0 // pred_check_branch
    %26 = sbr.rel (0) target = $region29
  $region28: #{pointer_net_forward.1} parent=0 // pred_region
    _
  $region29: #{pointer_net_forward.1} parent=0 // pred_fallthru
    _
  // Predicated region
  $region30: #{pointer_net_forward.1} parent=0 // pred_check
    _
  $region31: #{pointer_net_forward.1} parent=0 // pred_check_branch
    %28 = sbr.rel (0) target = $region33
  $region32: #{pointer_net_forward.1} parent=0 // pred_region
    _
  $region33: #{pointer_net_forward.1} parent=0 // pred_fallthru
    _
  %v30 = vld [vmem:[%s3] sm:$0xf]
  %v31 = vld [vmem:[%s3 + $0x4] sm:$0xf]
  %v32 = vld [vmem:[%s3 + $0x8] sm:$0xf]
  %v33 = vld [vmem:[%s3 + $0xc] sm:$0xf]
  %v34 = vld [vmem:[%s5] sm:$0xf]
  %v35 = vld [vmem:[%s5 + $0x4] sm:$0xf]
  %v36 = vld [vmem:[%s5 + $0x8] sm:$0xf]
  %v37 = vld [vmem:[%s5 + $0xc] sm:$0xf]
  %v38 = vld [vmem:[%s6] sm:$0xf]
  %v39 = vld [vmem:[%s6 + $0x4] sm:$0xf]
  %v40 = vld [vmem:[%s6 + $0x8] sm:$0xf]
  %v41 = vld [vmem:[%s6 + $0xc] sm:$0xf]
  %v42 = vld [vmem:[%s7] sm:$0x1]
  %v44 = vlaneseq
  %v45 = vshrl.u32 %v44, 7
  %v46 = vsub.s32 0, %v45
  %v47 = vrot.slane %v42, %v46
  %v49 = vlaneseq
  %v50 = vand.u32 %v49, 127
  %v51 = vld [vmem:[%s0] sm:$0xff]
  %v52 = vld [vmem:[%s0 + $0x8] sm:$0xff]
  %v53 = vpack.c.bf16 %v52, %v51
  %v54 = vld [vmem:[%s2] sm:$0x3]
  %v55 = vld [vmem:[%s4] sm:$0x1]
  %v57 = vlaneseq
  %v58 = vshrl.u32 %v57, 7
  %v59 = vsub.s32 0, %v58
  %v60 = vrot.slane %v55, %v59
  %vm62 = vcmask 31744
  %v64 = vsel %vm62, %v53, 0
  %vm66 = vcmask 1041408
  %v68 = vsel %vm66, %v54, 0
  %70 = vmatprep.subr.bf16.mxu0 0
  %71 = vmatpush1.bf16.msra.mxu0 %v68
  %72 = vmatprep.subr.bf16.mxu0 0
  %73 = vmatpush1.bf16.msra.mxu0 0
  %74 = vmatprep.subr.bf16.mxu0 0
  %75 = vmatpush1.bf16.msra.mxu0 0
  %76 = vmatprep.subr.bf16.mxu0 0
  %77 = vmatpush1.bf16.msra.mxu0 0
  %78 = vmatprep.subr.bf16.mxu0 0
  %79 = vmatpush1.bf16.msra.mxu0 0
  %80 = vmatprep.subr.bf16.mxu0 0
  %81 = vmatpush1.bf16.msra.mxu0 0
  %82 = vmatprep.subr.bf16.mxu0 0
  %83 = vmatpush1.bf16.msra.mxu0 0
  %84 = vmatprep.subr.bf16.mxu0 0
  %85 = vmatpush1.bf16.msra.mxu0 0
  %86 = vmatprep.subr.bf16.mxu0 0
  %87 = vmatpush1.bf16.msra.mxu0 0
  %88 = vmatprep.subr.bf16.mxu0 0
  %89 = vmatpush1.bf16.msra.mxu0 0
  %90 = vmatprep.subr.bf16.mxu0 0
  %91 = vmatpush1.bf16.msra.mxu0 0
  %92 = vmatprep.subr.bf16.mxu0 0
  %93 = vmatpush1.bf16.msra.mxu0 0
  %94 = vmatprep.subr.bf16.mxu0 0
  %95 = vmatpush1.bf16.msra.mxu0 0
  %96 = vmatprep.subr.bf16.mxu0 0
  %97 = vmatpush1.bf16.msra.mxu0 0
  %98 = vmatprep.subr.bf16.mxu0 0
  %99 = vmatpush1.bf16.msra.mxu0 0
  %100 = vmatprep.subr.bf16.mxu0 0
  %101 = vmatpush1.bf16.msra.mxu0 0
  %102 = vmatprep.mubr.bf16.mxu0 0
  %103 = vmatmul.mubr.bf16.gmra.mrb[0].mxu0 %v64
  %v104 = vpop.f32.mrb[0].mxu0
  %v105 = vadd.f32 %v60, %v104
  %v106 = vpop.f32.mrb[0].mxu0
  %v107 = vpop.f32.mrb[0].mxu0
  %v108 = vadd.f32 %v60, %v107
  %v109 = vpop.f32.mrb[0].mxu0
  %110 = vdwg.mxu0
  %111 = vst [vmem:[#allocation2] sm:$0xff] %v105
  %112 = vst [vmem:[#allocation2 + $0x8] sm:$0xff] %v108
  %v113 = vld [vmem:[#allocation2] sm:$0x3]
  %v118 = vunpack.c.l.b16 %v30
  %v119 = vunpack.c.l.b16 %v31
  %v120 = vunpack.c.l.b16 %v32
  %v121 = vunpack.c.l.b16 %v33
  %v122 = vpack.c.b16 %v119, %v118
  %v123 = vpack.c.b16 %v121, %v120
  %vm126 = vcmask 261120
  %v128 = vsel %vm126, 0, 0
  %130 = vmatprep.subr.bf16.mxu0 0
  %131 = vmatpush1.bf16.msra.mxu0 %v122
  %132 = vmatprep.subr.bf16.mxu0 0
  %133 = vmatpush1.bf16.msra.mxu0 %v123
  %134 = vmatprep.subr.bf16.mxu0 0
  %135 = vmatpush1.bf16.msra.mxu0 0
  %136 = vmatprep.subr.bf16.mxu0 0
  %137 = vmatpush1.bf16.msra.mxu0 0
  %138 = vmatprep.subr.bf16.mxu0 0
  %139 = vmatpush1.bf16.msra.mxu0 0
  %140 = vmatprep.subr.bf16.mxu0 0
  %141 = vmatpush1.bf16.msra.mxu0 0
  %142 = vmatprep.subr.bf16.mxu0 0
  %143 = vmatpush1.bf16.msra.mxu0 0
  %144 = vmatprep.subr.bf16.mxu0 0
  %145 = vmatpush1.bf16.msra.mxu0 0
  %146 = vmatprep.subr.bf16.mxu0 0
  %147 = vmatpush1.bf16.msra.mxu0 0
  %148 = vmatprep.subr.bf16.mxu0 0
  %149 = vmatpush1.bf16.msra.mxu0 0
  %150 = vmatprep.subr.bf16.mxu0 0
  %151 = vmatpush1.bf16.msra.mxu0 0
  %152 = vmatprep.subr.bf16.mxu0 0
  %153 = vmatpush1.bf16.msra.mxu0 0
  %154 = vmatprep.subr.bf16.mxu0 0
  %155 = vmatpush1.bf16.msra.mxu0 0
  %156 = vmatprep.subr.bf16.mxu0 0
  %157 = vmatpush1.bf16.msra.mxu0 0
  %158 = vmatprep.subr.bf16.mxu0 0
  %159 = vmatpush1.bf16.msra.mxu0 0
  %160 = vmatprep.subr.bf16.mxu0 0
  %161 = vmatpush1.bf16.msra.mxu0 0
  %162 = vmatprep.mubr.bf16.mxu0 0
  %163 = vmatmul.mubr.bf16.gmra.mrb[0].mxu0 %v128
  %v164 = vpop.f32.mrb[0].mxu0
  %v165 = vadd.f32 0.0, %v164
  %v166 = vpop.f32.mrb[0].mxu0
  %v167 = vpop.f32.mrb[0].mxu0
  %v168 = vpop.f32.mrb[0].mxu0
  %169 = vdwg.mxu0
  %v170 = vadd.f32 %v113, %v165
  %v171 = vxor.u32 %v170, 2147483648
  %v172 = vmul.f32 %v171, 1.442695
  %v173 = vpow.pop %v172
  %v174 = vadd.f32 %v173, 1.0
  %v175 = vrcp.pop %v174
  %v176 = vmul.f32 1.0, %v175
  %v177 = vtanh.pop %v170
  %v178 = vmul.f32 %v176, 0.0
  %180 = vrot.lane.b32.xlu0 %v177, 64
  %v181 = vpop.permute.xlu0 %180
  %v183 = vmul.f32 %v176, %v181
  %185 = vrot.lane.b32.xlu0 %v183, 32
  %v186 = vpop.permute.xlu0 %185
  %v188 = vadd.f32 %v178, %v186
  %v189 = vtanh.pop %v188
  %191 = vrot.lane.b32.xlu0 %v189, 64
  %v192 = vpop.permute.xlu0 %191
  %v194 = vmul.f32 %v176, %v192
  %v197 = vunpack.c.l.s4 1966171168
  %v198 = vunpack.c.0.s8 %v197
  %v199 = vlaneseq
  %v200 = vshrl.u32 %v199, 7
  %v201 = vsub.s32 %v198, %v200
  %v202 = vrot.slane %v194, %v201
  %v203 = vcombine.high %v202, %v202
  %v205 = vunpack.c.l.s4 1966171168
  %v206 = vunpack.c.0.s8 %v205
  %v207 = vlaneseq
  %v208 = vshrl.u32 %v207, 7
  %v209 = vsub.s32 %v206, %v208
  %v210 = vrot.slane %v202, %v209
  %v212 = vunpack.c.l.s4 1966171168
  %v213 = vunpack.c.0.s8 %v212
  %v214 = vlaneseq
  %v215 = vshrl.u32 %v214, 7
  %v216 = vsub.s32 %v213, %v215
  %v217 = vrot.slane %v203, %v216
  %v218 = vlaneseq
  %v219 = vshrl.u32 %v218, 7
  %v220 = vsub.s32 0, %v219
  %v221 = vrot.slane %v210, %v220
  %v222 = vlaneseq
  %v223 = vshrl.u32 %v222, 7
  %v224 = vsub.s32 0, %v223
  %v225 = vrot.slane %v217, %v224
  %226 = vrot.lane.b32.xlu0 %v221, 32
  %v227 = vpop.permute.xlu0 %226
  %228 = vrot.lane.b32.xlu0 %v225, 32
  %v229 = vpop.permute.xlu0 %228
  %vm232 = vcmask 253952
  %233 = vst.msk [vmem:[#allocation3] sm:$0x1] %vm232, %v227
  %234 = vst.msk [vmem:[#allocation3 + $0x8] sm:$0x1] %vm232, %v229
  %v235 = vld [vmem:[#allocation2 + $0x2] sm:$0x3]
  %v236 = vpack.c.bf16 %v194, %v194
  %238 = vrot.lane.b32.xlu0 %v236, 32
  %v239 = vpop.permute.xlu0 %238
  %v241 = vsel %vm126, %v239, 0
  %243 = vmatprep.subr.bf16.mxu0 0
  %244 = vmatpush1.bf16.msra.mxu0 %v122
  %245 = vmatprep.subr.bf16.mxu0 0
  %246 = vmatpush1.bf16.msra.mxu0 %v123
  %247 = vmatprep.subr.bf16.mxu0 0
  %248 = vmatpush1.bf16.msra.mxu0 0
  %249 = vmatprep.subr.bf16.mxu0 0
  %250 = vmatpush1.bf16.msra.mxu0 0
  %251 = vmatprep.subr.bf16.mxu0 0
  %252 = vmatpush1.bf16.msra.mxu0 0
  %253 = vmatprep.subr.bf16.mxu0 0
  %254 = vmatpush1.bf16.msra.mxu0 0
  %255 = vmatprep.subr.bf16.mxu0 0
  %256 = vmatpush1.bf16.msra.mxu0 0
  %257 = vmatprep.subr.bf16.mxu0 0
  %258 = vmatpush1.bf16.msra.mxu0 0
  %259 = vmatprep.subr.bf16.mxu0 0
  %260 = vmatpush1.bf16.msra.mxu0 0
  %261 = vmatprep.subr.bf16.mxu0 0
  %262 = vmatpush1.bf16.msra.mxu0 0
  %263 = vmatprep.subr.bf16.mxu0 0
  %264 = vmatpush1.bf16.msra.mxu0 0
  %265 = vmatprep.subr.bf16.mxu0 0
  %266 = vmatpush1.bf16.msra.mxu0 0
  %267 = vmatprep.subr.bf16.mxu0 0
  %268 = vmatpush1.bf16.msra.mxu0 0
  %269 = vmatprep.subr.bf16.mxu0 0
  %270 = vmatpush1.bf16.msra.mxu0 0
  %271 = vmatprep.subr.bf16.mxu0 0
  %272 = vmatpush1.bf16.msra.mxu0 0
  %273 = vmatprep.subr.bf16.mxu0 0
  %274 = vmatpush1.bf16.msra.mxu0 0
  %275 = vmatprep.mubr.bf16.mxu0 0
  %276 = vmatmul.mubr.bf16.gmra.mrb[0].mxu0 %v241
  %v277 = vpop.f32.mrb[0].mxu0
  %v278 = vadd.f32 0.0, %v277
  %v279 = vpop.f32.mrb[0].mxu0
  %v280 = vpop.f32.mrb[0].mxu0
  %v281 = vpop.f32.mrb[0].mxu0
  %282 = vdwg.mxu0
  %v283 = vadd.f32 %v235, %v278
  %v284 = vxor.u32 %v283, 2147483648
  %v285 = vmul.f32 %v284, 1.442695
  %v286 = vpow.pop %v285
  %v287 = vadd.f32 %v286, 1.0
  %v288 = vrcp.pop %v287
  %v289 = vmul.f32 1.0, %v288
  %v290 = vtanh.pop %v283
  %v291 = vmul.f32 %v289, %v188
  %293 = vrot.lane.b32.xlu0 %v290, 64
  %v294 = vpop.permute.xlu0 %293
  %v296 = vmul.f32 %v289, %v294
  %298 = vrot.lane.b32.xlu0 %v296, 32
  %v299 = vpop.permute.xlu0 %298
  %v301 = vadd.f32 %v291, %v299
  %v302 = vtanh.pop %v301
  %304 = vrot.lane.b32.xlu0 %v302, 64
  %v305 = vpop.permute.xlu0 %304
  %v307 = vmul.f32 %v289, %v305
  %v310 = vunpack.c.l.s4 1966171168
  %v311 = vunpack.c.0.s8 %v310
  %v312 = vlaneseq
  %v313 = vshrl.u32 %v312, 7
  %v314 = vsub.s32 %v311, %v313
  %v315 = vrot.slane %v307, %v314
  %v316 = vcombine.high %v315, %v315
  %v318 = vunpack.c.l.s4 1966171168
  %v319 = vunpack.c.0.s8 %v318
  %v320 = vlaneseq
  %v321 = vshrl.u32 %v320, 7
  %v322 = vsub.s32 %v319, %v321
  %v323 = vrot.slane %v315, %v322
  %v325 = vunpack.c.l.s4 1966171168
  %v326 = vunpack.c.0.s8 %v325
  %v327 = vlaneseq
  %v328 = vshrl.u32 %v327, 7
  %v329 = vsub.s32 %v326, %v328
  %v330 = vrot.slane %v316, %v329
  %v331 = vlaneseq
  %v332 = vshrl.u32 %v331, 7
  %v333 = vsub.s32 0, %v332
  %v334 = vrot.slane %v323, %v333
  %v335 = vlaneseq
  %v336 = vshrl.u32 %v335, 7
  %v337 = vsub.s32 0, %v336
  %v338 = vrot.slane %v330, %v337
  %339 = vrot.lane.b32.xlu0 %v334, 32
  %v340 = vpop.permute.xlu0 %339
  %341 = vrot.lane.b32.xlu0 %v338, 32
  %v342 = vpop.permute.xlu0 %341
  %345 = vst.msk [vmem:[#allocation3 + $0x1] sm:$0x1] %vm232, %v340
  %346 = vst.msk [vmem:[#allocation3 + $0x9] sm:$0x1] %vm232, %v342
  %v347 = vld [vmem:[#allocation2 + $0x4] sm:$0x3]
  %v348 = vpack.c.bf16 %v307, %v307
  %350 = vrot.lane.b32.xlu0 %v348, 32
  %v351 = vpop.permute.xlu0 %350
  %v353 = vsel %vm126, %v351, 0
  %355 = vmatprep.subr.bf16.mxu0 0
  %356 = vmatpush1.bf16.msra.mxu0 %v122
  %357 = vmatprep.subr.bf16.mxu0 0
  %358 = vmatpush1.bf16.msra.mxu0 %v123
  %359 = vmatprep.subr.bf16.mxu0 0
  %360 = vmatpush1.bf16.msra.mxu0 0
  %361 = vmatprep.subr.bf16.mxu0 0
  %362 = vmatpush1.bf16.msra.mxu0 0
  %363 = vmatprep.subr.bf16.mxu0 0
  %364 = vmatpush1.bf16.msra.mxu0 0
  %365 = vmatprep.subr.bf16.mxu0 0
  %366 = vmatpush1.bf16.msra.mxu0 0
  %367 = vmatprep.subr.bf16.mxu0 0
  %368 = vmatpush1.bf16.msra.mxu0 0
  %369 = vmatprep.subr.bf16.mxu0 0
  %370 = vmatpush1.bf16.msra.mxu0 0
  %371 = vmatprep.subr.bf16.mxu0 0
  %372 = vmatpush1.bf16.msra.mxu0 0
  %373 = vmatprep.subr.bf16.mxu0 0
  %374 = vmatpush1.bf16.msra.mxu0 0
  %375 = vmatprep.subr.bf16.mxu0 0
  %376 = vmatpush1.bf16.msra.mxu0 0
  %377 = vmatprep.subr.bf16.mxu0 0
  %378 = vmatpush1.bf16.msra.mxu0 0
  %379 = vmatprep.subr.bf16.mxu0 0
  %380 = vmatpush1.bf16.msra.mxu0 0
  %381 = vmatprep.subr.bf16.mxu0 0
  %382 = vmatpush1.bf16.msra.mxu0 0
  %383 = vmatprep.subr.bf16.mxu0 0
  %384 = vmatpush1.bf16.msra.mxu0 0
  %385 = vmatprep.subr.bf16.mxu0 0
  %386 = vmatpush1.bf16.msra.mxu0 0
  %387 = vmatprep.mubr.bf16.mxu0 0
  %388 = vmatmul.mubr.bf16.gmra.mrb[0].mxu0 %v353
  %v389 = vpop.f32.mrb[0].mxu0
  %v390 = vadd.f32 0.0, %v389
  %v391 = vpop.f32.mrb[0].mxu0
  %v392 = vpop.f32.mrb[0].mxu0
  %v393 = vpop.f32.mrb[0].mxu0
  %394 = vdwg.mxu0
  %v395 = vadd.f32 %v347, %v390
  %v396 = vxor.u32 %v395, 2147483648
  %v397 = vmul.f32 %v396, 1.442695
  %v398 = vpow.pop %v397
  %v399 = vadd.f32 %v398, 1.0
  %v400 = vrcp.pop %v399
  %v401 = vmul.f32 1.0, %v400
  %v402 = vtanh.pop %v395
  %v403 = vmul.f32 %v401, %v301
  %405 = vrot.lane.b32.xlu0 %v402, 64
  %v406 = vpop.permute.xlu0 %405
  %v408 = vmul.f32 %v401, %v406
  %410 = vrot.lane.b32.xlu0 %v408, 32
  %v411 = vpop.permute.xlu0 %410
  %v413 = vadd.f32 %v403, %v411
  %v414 = vtanh.pop %v413
  %416 = vrot.lane.b32.xlu0 %v414, 64
  %v417 = vpop.permute.xlu0 %416
  %v419 = vmul.f32 %v401, %v417
  %v422 = vunpack.c.l.s4 1966171168
  %v423 = vunpack.c.0.s8 %v422
  %v424 = vlaneseq
  %v425 = vshrl.u32 %v424, 7
  %v426 = vsub.s32 %v423, %v425
  %v427 = vrot.slane %v419, %v426
  %v428 = vcombine.high %v427, %v427
  %v430 = vunpack.c.l.s4 1966171168
  %v431 = vunpack.c.0.s8 %v430
  %v432 = vlaneseq
  %v433 = vshrl.u32 %v432, 7
  %v434 = vsub.s32 %v431, %v433
  %v435 = vrot.slane %v427, %v434
  %v437 = vunpack.c.l.s4 1966171168
  %v438 = vunpack.c.0.s8 %v437
  %v439 = vlaneseq
  %v440 = vshrl.u32 %v439, 7
  %v441 = vsub.s32 %v438, %v440
  %v442 = vrot.slane %v428, %v441
  %v443 = vlaneseq
  %v444 = vshrl.u32 %v443, 7
  %v445 = vsub.s32 0, %v444
  %v446 = vrot.slane %v435, %v445
  %v447 = vlaneseq
  %v448 = vshrl.u32 %v447, 7
  %v449 = vsub.s32 0, %v448
  %v450 = vrot.slane %v442, %v449
  %451 = vrot.lane.b32.xlu0 %v446, 32
  %v452 = vpop.permute.xlu0 %451
  %453 = vrot.lane.b32.xlu0 %v450, 32
  %v454 = vpop.permute.xlu0 %453
  %457 = vst.msk [vmem:[#allocation3 + $0x2] sm:$0x1] %vm232, %v452
  %458 = vst.msk [vmem:[#allocation3 + $0xa] sm:$0x1] %vm232, %v454
  %v459 = vld [vmem:[#allocation2 + $0x6] sm:$0x3]
  %v460 = vpack.c.bf16 %v419, %v419
  %462 = vrot.lane.b32.xlu0 %v460, 32
  %v463 = vpop.permute.xlu0 %462
  %v465 = vsel %vm126, %v463, 0
  %467 = vmatprep.subr.bf16.mxu0 0
  %468 = vmatpush1.bf16.msra.mxu0 %v122
  %469 = vmatprep.subr.bf16.mxu0 0
  %470 = vmatpush1.bf16.msra.mxu0 %v123
  %471 = vmatprep.subr.bf16.mxu0 0
  %472 = vmatpush1.bf16.msra.mxu0 0
  %473 = vmatprep.subr.bf16.mxu0 0
  %474 = vmatpush1.bf16.msra.mxu0 0
  %475 = vmatprep.subr.bf16.mxu0 0
  %476 = vmatpush1.bf16.msra.mxu0 0
  %477 = vmatprep.subr.bf16.mxu0 0
  %478 = vmatpush1.bf16.msra.mxu0 0
  %479 = vmatprep.subr.bf16.mxu0 0
  %480 = vmatpush1.bf16.msra.mxu0 0
  %481 = vmatprep.subr.bf16.mxu0 0
  %482 = vmatpush1.bf16.msra.mxu0 0
  %483 = vmatprep.subr.bf16.mxu0 0
  %484 = vmatpush1.bf16.msra.mxu0 0
  %485 = vmatprep.subr.bf16.mxu0 0
  %486 = vmatpush1.bf16.msra.mxu0 0
  %487 = vmatprep.subr.bf16.mxu0 0
  %488 = vmatpush1.bf16.msra.mxu0 0
  %489 = vmatprep.subr.bf16.mxu0 0
  %490 = vmatpush1.bf16.msra.mxu0 0
  %491 = vmatprep.subr.bf16.mxu0 0
  %492 = vmatpush1.bf16.msra.mxu0 0
  %493 = vmatprep.subr.bf16.mxu0 0
  %494 = vmatpush1.bf16.msra.mxu0 0
  %495 = vmatprep.subr.bf16.mxu0 0
  %496 = vmatpush1.bf16.msra.mxu0 0
  %497 = vmatprep.subr.bf16.mxu0 0
  %498 = vmatpush1.bf16.msra.mxu0 0
  %499 = vmatprep.mubr.bf16.mxu0 0
  %500 = vmatmul.mubr.bf16.gmra.mrb[0].mxu0 %v465
  %v501 = vpop.f32.mrb[0].mxu0
  %v502 = vadd.f32 0.0, %v501
  %v503 = vpop.f32.mrb[0].mxu0
  %v504 = vpop.f32.mrb[0].mxu0
  %v505 = vpop.f32.mrb[0].mxu0
  %506 = vdwg.mxu0
  %v507 = vadd.f32 %v459, %v502
  %v508 = vxor.u32 %v507, 2147483648
  %v509 = vmul.f32 %v508, 1.442695
  %v510 = vpow.pop %v509
  %v511 = vadd.f32 %v510, 1.0
  %v512 = vrcp.pop %v511
  %v513 = vmul.f32 1.0, %v512
  %v514 = vtanh.pop %v507
  %v515 = vmul.f32 %v513, %v413
  %517 = vrot.lane.b32.xlu0 %v514, 64
  %v518 = vpop.permute.xlu0 %517
  %v520 = vmul.f32 %v513, %v518
  %522 = vrot.lane.b32.xlu0 %v520, 32
  %v523 = vpop.permute.xlu0 %522
  %v525 = vadd.f32 %v515, %v523
  %v526 = vtanh.pop %v525
  %528 = vrot.lane.b32.xlu0 %v526, 64
  %v529 = vpop.permute.xlu0 %528
  %v531 = vmul.f32 %v513, %v529
  %v534 = vunpack.c.l.s4 1966171168
  %v535 = vunpack.c.0.s8 %v534
  %v536 = vlaneseq
  %v537 = vshrl.u32 %v536, 7
  %v538 = vsub.s32 %v535, %v537
  %v539 = vrot.slane %v531, %v538
  %v540 = vcombine.high %v539, %v539
  %v542 = vunpack.c.l.s4 1966171168
  %v543 = vunpack.c.0.s8 %v542
  %v544 = vlaneseq
  %v545 = vshrl.u32 %v544, 7
  %v546 = vsub.s32 %v543, %v545
  %v547 = vrot.slane %v539, %v546
  %v549 = vunpack.c.l.s4 1966171168
  %v550 = vunpack.c.0.s8 %v549
  %v551 = vlaneseq
  %v552 = vshrl.u32 %v551, 7
  %v553 = vsub.s32 %v550, %v552
  %v554 = vrot.slane %v540, %v553
  %v555 = vlaneseq
  %v556 = vshrl.u32 %v555, 7
  %v557 = vsub.s32 0, %v556
  %v558 = vrot.slane %v547, %v557
  %v559 = vlaneseq
  %v560 = vshrl.u32 %v559, 7
  %v561 = vsub.s32 0, %v560
  %v562 = vrot.slane %v554, %v561
  %563 = vrot.lane.b32.xlu0 %v558, 32
  %v564 = vpop.permute.xlu0 %563
  %565 = vrot.lane.b32.xlu0 %v562, 32
  %v566 = vpop.permute.xlu0 %565
  %569 = vst.msk [vmem:[#allocation3 + $0x3] sm:$0x1] %vm232, %v564
  %570 = vst.msk [vmem:[#allocation3 + $0xb] sm:$0x1] %vm232, %v566
  %v571 = vld [vmem:[#allocation2 + $0x8] sm:$0x3]
  %v572 = vpack.c.bf16 %v531, %v531
  %574 = vrot.lane.b32.xlu0 %v572, 32
  %v575 = vpop.permute.xlu0 %574
  %v577 = vsel %vm126, %v575, 0
  %579 = vmatprep.subr.bf16.mxu0 0
  %580 = vmatpush1.bf16.msra.mxu0 %v122
  %581 = vmatprep.subr.bf16.mxu0 0
  %582 = vmatpush1.bf16.msra.mxu0 %v123
  %583 = vmatprep.subr.bf16.mxu0 0
  %584 = vmatpush1.bf16.msra.mxu0 0
  %585 = vmatprep.subr.bf16.mxu0 0
  %586 = vmatpush1.bf16.msra.mxu0 0
  %587 = vmatprep.subr.bf16.mxu0 0
  %588 = vmatpush1.bf16.msra.mxu0 0
  %589 = vmatprep.subr.bf16.mxu0 0
  %590 = vmatpush1.bf16.msra.mxu0 0
  %591 = vmatprep.subr.bf16.mxu0 0
  %592 = vmatpush1.bf16.msra.mxu0 0
  %593 = vmatprep.subr.bf16.mxu0 0
  %594 = vmatpush1.bf16.msra.mxu0 0
  %595 = vmatprep.subr.bf16.mxu0 0
  %596 = vmatpush1.bf16.msra.mxu0 0
  %597 = vmatprep.subr.bf16.mxu0 0
  %598 = vmatpush1.bf16.msra.mxu0 0
  %599 = vmatprep.subr.bf16.mxu0 0
  %600 = vmatpush1.bf16.msra.mxu0 0
  %601 = vmatprep.subr.bf16.mxu0 0
  %602 = vmatpush1.bf16.msra.mxu0 0
  %603 = vmatprep.subr.bf16.mxu0 0
  %604 = vmatpush1.bf16.msra.mxu0 0
  %605 = vmatprep.subr.bf16.mxu0 0
  %606 = vmatpush1.bf16.msra.mxu0 0
  %607 = vmatprep.subr.bf16.mxu0 0
  %608 = vmatpush1.bf16.msra.mxu0 0
  %609 = vmatprep.subr.bf16.mxu0 0
  %610 = vmatpush1.bf16.msra.mxu0 0
  %611 = vmatprep.mubr.bf16.mxu0 0
  %612 = vmatmul.mubr.bf16.gmra.mrb[0].mxu0 %v577
  %v613 = vpop.f32.mrb[0].mxu0
  %v614 = vadd.f32 0.0, %v613
  %v615 = vpop.f32.mrb[0].mxu0
  %v616 = vpop.f32.mrb[0].mxu0
  %v617 = vpop.f32.mrb[0].mxu0
  %618 = vdwg.mxu0
  %v619 = vadd.f32 %v571, %v614
  %v620 = vxor.u32 %v619, 2147483648
  %v621 = vmul.f32 %v620, 1.442695
  %v622 = vpow.pop %v621
  %v623 = vadd.f32 %v622, 1.0
  %v624 = vrcp.pop %v623
  %v625 = vmul.f32 1.0, %v624
  %v626 = vtanh.pop %v619
  %v627 = vmul.f32 %v625, %v525
  %629 = vrot.lane.b32.xlu0 %v626, 64
  %v630 = vpop.permute.xlu0 %629
  %v632 = vmul.f32 %v625, %v630
  %634 = vrot.lane.b32.xlu0 %v632, 32
  %v635 = vpop.permute.xlu0 %634
  %v637 = vadd.f32 %v627, %v635
  %v638 = vtanh.pop %v637
  %640 = vrot.lane.b32.xlu0 %v638, 64
  %v641 = vpop.permute.xlu0 %640
  %v643 = vmul.f32 %v625, %v641
  %v646 = vunpack.c.l.s4 1966171168
  %v647 = vunpack.c.0.s8 %v646
  %v648 = vlaneseq
  %v649 = vshrl.u32 %v648, 7
  %v650 = vsub.s32 %v647, %v649
  %v651 = vrot.slane %v643, %v650
  %v652 = vcombine.high %v651, %v651
  %v654 = vunpack.c.l.s4 1966171168
  %v655 = vunpack.c.0.s8 %v654
  %v656 = vlaneseq
  %v657 = vshrl.u32 %v656, 7
  %v658 = vsub.s32 %v655, %v657
  %v659 = vrot.slane %v651, %v658
  %v661 = vunpack.c.l.s4 1966171168
  %v662 = vunpack.c.0.s8 %v661
  %v663 = vlaneseq
  %v664 = vshrl.u32 %v663, 7
  %v665 = vsub.s32 %v662, %v664
  %v666 = vrot.slane %v652, %v665
  %v667 = vlaneseq
  %v668 = vshrl.u32 %v667, 7
  %v669 = vsub.s32 0, %v668
  %v670 = vrot.slane %v659, %v669
  %v671 = vlaneseq
  %v672 = vshrl.u32 %v671, 7
  %v673 = vsub.s32 0, %v672
  %v674 = vrot.slane %v666, %v673
  %675 = vrot.lane.b32.xlu0 %v670, 32
  %v676 = vpop.permute.xlu0 %675
  %677 = vrot.lane.b32.xlu0 %v674, 32
  %v678 = vpop.permute.xlu0 %677
  %681 = vst.msk [vmem:[#allocation3 + $0x4] sm:$0x1] %vm232, %v676
  %682 = vst.msk [vmem:[#allocation3 + $0xc] sm:$0x1] %vm232, %v678
  %v683 = vld [vmem:[#allocation2 + $0xa] sm:$0x3]
  %v684 = vpack.c.bf16 %v643, %v643
  %686 = vrot.lane.b32.xlu0 %v684, 32
  %v687 = vpop.permute.xlu0 %686
  %v689 = vsel %vm126, %v687, 0
  %691 = vmatprep.subr.bf16.mxu0 0
  %692 = vmatpush1.bf16.msra.mxu0 %v122
  %693 = vmatprep.subr.bf16.mxu0 0
  %694 = vmatpush1.bf16.msra.mxu0 %v123
  %695 = vmatprep.subr.bf16.mxu0 0
  %696 = vmatpush1.bf16.msra.mxu0 0
  %697 = vmatprep.subr.bf16.mxu0 0
  %698 = vmatpush1.bf16.msra.mxu0 0
  %699 = vmatprep.subr.bf16.mxu0 0
  %700 = vmatpush1.bf16.msra.mxu0 0
  %701 = vmatprep.subr.bf16.mxu0 0
  %702 = vmatpush1.bf16.msra.mxu0 0
  %703 = vmatprep.subr.bf16.mxu0 0
  %704 = vmatpush1.bf16.msra.mxu0 0
  %705 = vmatprep.subr.bf16.mxu0 0
  %706 = vmatpush1.bf16.msra.mxu0 0
  %707 = vmatprep.subr.bf16.mxu0 0
  %708 = vmatpush1.bf16.msra.mxu0 0
  %709 = vmatprep.subr.bf16.mxu0 0
  %710 = vmatpush1.bf16.msra.mxu0 0
  %711 = vmatprep.subr.bf16.mxu0 0
  %712 = vmatpush1.bf16.msra.mxu0 0
  %713 = vmatprep.subr.bf16.mxu0 0
  %714 = vmatpush1.bf16.msra.mxu0 0
  %715 = vmatprep.subr.bf16.mxu0 0
  %716 = vmatpush1.bf16.msra.mxu0 0
  %717 = vmatprep.subr.bf16.mxu0 0
  %718 = vmatpush1.bf16.msra.mxu0 0
  %719 = vmatprep.subr.bf16.mxu0 0
  %720 = vmatpush1.bf16.msra.mxu0 0
  %721 = vmatprep.subr.bf16.mxu0 0
  %722 = vmatpush1.bf16.msra.mxu0 0
  %723 = vmatprep.mubr.bf16.mxu0 0
  %724 = vmatmul.mubr.bf16.gmra.mrb[0].mxu0 %v689
  %v725 = vpop.f32.mrb[0].mxu0
  %v726 = vadd.f32 0.0, %v725
  %v727 = vpop.f32.mrb[0].mxu0
  %v728 = vpop.f32.mrb[0].mxu0
  %v729 = vpop.f32.mrb[0].mxu0
  %730 = vdwg.mxu0
  %v731 = vadd.f32 %v683, %v726
  %v732 = vxor.u32 %v731, 2147483648
  %v733 = vmul.f32 %v732, 1.442695
  %v734 = vpow.pop %v733
  %v735 = vadd.f32 %v734, 1.0
  %v736 = vrcp.pop %v735
  %v737 = vmul.f32 1.0, %v736
  %v738 = vtanh.pop %v731
  %v739 = vmul.f32 %v737, %v637
  %741 = vrot.lane.b32.xlu0 %v738, 64
  %v742 = vpop.permute.xlu0 %741
  %v744 = vmul.f32 %v737, %v742
  %746 = vrot.lane.b32.xlu0 %v744, 32
  %v747 = vpop.permute.xlu0 %746
  %v749 = vadd.f32 %v739, %v747
  %v750 = vtanh.pop %v749
  %752 = vrot.lane.b32.xlu0 %v750, 64
  %v753 = vpop.permute.xlu0 %752
  %v755 = vmul.f32 %v737, %v753
  %v758 = vunpack.c.l.s4 1966171168
  %v759 = vunpack.c.0.s8 %v758
  %v760 = vlaneseq
  %v761 = vshrl.u32 %v760, 7
  %v762 = vsub.s32 %v759, %v761
  %v763 = vrot.slane %v755, %v762
  %v764 = vcombine.high %v763, %v763
  %v766 = vunpack.c.l.s4 1966171168
  %v767 = vunpack.c.0.s8 %v766
  %v768 = vlaneseq
  %v769 = vshrl.u32 %v768, 7
  %v770 = vsub.s32 %v767, %v769
  %v771 = vrot.slane %v763, %v770
  %v773 = vunpack.c.l.s4 1966171168
  %v774 = vunpack.c.0.s8 %v773
  %v775 = vlaneseq
  %v776 = vshrl.u32 %v775, 7
  %v777 = vsub.s32 %v774, %v776
  %v778 = vrot.slane %v764, %v777
  %v779 = vlaneseq
  %v780 = vshrl.u32 %v779, 7
  %v781 = vsub.s32 0, %v780
  %v782 = vrot.slane %v771, %v781
  %v783 = vlaneseq
  %v784 = vshrl.u32 %v783, 7
  %v785 = vsub.s32 0, %v784
  %v786 = vrot.slane %v778, %v785
  %787 = vrot.lane.b32.xlu0 %v782, 32
  %v788 = vpop.permute.xlu0 %787
  %789 = vrot.lane.b32.xlu0 %v786, 32
  %v790 = vpop.permute.xlu0 %789
  %793 = vst.msk [vmem:[#allocation3 + $0x5] sm:$0x1] %vm232, %v788
  %794 = vst.msk [vmem:[#allocation3 + $0xd] sm:$0x1] %vm232, %v790
  %v795 = vld [vmem:[#allocation2 + $0xc] sm:$0x3]
  %v796 = vpack.c.bf16 %v755, %v755
  %798 = vrot.lane.b32.xlu0 %v796, 32
  %v799 = vpop.permute.xlu0 %798
  %v801 = vsel %vm126, %v799, 0
  %803 = vmatprep.subr.bf16.mxu0 0
  %804 = vmatpush1.bf16.msra.mxu0 %v122
  %805 = vmatprep.subr.bf16.mxu0 0
  %806 = vmatpush1.bf16.msra.mxu0 %v123
  %807 = vmatprep.subr.bf16.mxu0 0
  %808 = vmatpush1.bf16.msra.mxu0 0
  %809 = vmatprep.subr.bf16.mxu0 0
  %810 = vmatpush1.bf16.msra.mxu0 0
  %811 = vmatprep.subr.bf16.mxu0 0
  %812 = vmatpush1.bf16.msra.mxu0 0
  %813 = vmatprep.subr.bf16.mxu0 0
  %814 = vmatpush1.bf16.msra.mxu0 0
  %815 = vmatprep.subr.bf16.mxu0 0
  %816 = vmatpush1.bf16.msra.mxu0 0
  %817 = vmatprep.subr.bf16.mxu0 0
  %818 = vmatpush1.bf16.msra.mxu0 0
  %819 = vmatprep.subr.bf16.mxu0 0
  %820 = vmatpush1.bf16.msra.mxu0 0
  %821 = vmatprep.subr.bf16.mxu0 0
  %822 = vmatpush1.bf16.msra.mxu0 0
  %823 = vmatprep.subr.bf16.mxu0 0
  %824 = vmatpush1.bf16.msra.mxu0 0
  %825 = vmatprep.subr.bf16.mxu0 0
  %826 = vmatpush1.bf16.msra.mxu0 0
  %827 = vmatprep.subr.bf16.mxu0 0
  %828 = vmatpush1.bf16.msra.mxu0 0
  %829 = vmatprep.subr.bf16.mxu0 0
  %830 = vmatpush1.bf16.msra.mxu0 0
  %831 = vmatprep.subr.bf16.mxu0 0
  %832 = vmatpush1.bf16.msra.mxu0 0
  %833 = vmatprep.subr.bf16.mxu0 0
  %834 = vmatpush1.bf16.msra.mxu0 0
  %835 = vmatprep.mubr.bf16.mxu0 0
  %836 = vmatmul.mubr.bf16.gmra.mrb[0].mxu0 %v801
  %v837 = vpop.f32.mrb[0].mxu0
  %v838 = vadd.f32 0.0, %v837
  %v839 = vpop.f32.mrb[0].mxu0
  %v840 = vpop.f32.mrb[0].mxu0
  %v841 = vpop.f32.mrb[0].mxu0
  %842 = vdwg.mxu0
  %v843 = vadd.f32 %v795, %v838
  %v844 = vxor.u32 %v843, 2147483648
  %v845 = vmul.f32 %v844, 1.442695
  %v846 = vpow.pop %v845
  %v847 = vadd.f32 %v846, 1.0
  %v848 = vrcp.pop %v847
  %v849 = vmul.f32 1.0, %v848
  %v850 = vtanh.pop %v843
  %v851 = vmul.f32 %v849, %v749
  %853 = vrot.lane.b32.xlu0 %v850, 64
  %v854 = vpop.permute.xlu0 %853
  %v856 = vmul.f32 %v849, %v854
  %858 = vrot.lane.b32.xlu0 %v856, 32
  %v859 = vpop.permute.xlu0 %858
  %v861 = vadd.f32 %v851, %v859
  %v862 = vtanh.pop %v861
  %864 = vrot.lane.b32.xlu0 %v862, 64
  %v865 = vpop.permute.xlu0 %864
  %v867 = vmul.f32 %v849, %v865
  %v870 = vunpack.c.l.s4 1966171168
  %v871 = vunpack.c.0.s8 %v870
  %v872 = vlaneseq
  %v873 = vshrl.u32 %v872, 7
  %v874 = vsub.s32 %v871, %v873
  %v875 = vrot.slane %v867, %v874
  %v876 = vcombine.high %v875, %v875
  %v878 = vunpack.c.l.s4 1966171168
  %v879 = vunpack.c.0.s8 %v878
  %v880 = vlaneseq
  %v881 = vshrl.u32 %v880, 7
  %v882 = vsub.s32 %v879, %v881
  %v883 = vrot.slane %v875, %v882
  %v885 = vunpack.c.l.s4 1966171168
  %v886 = vunpack.c.0.s8 %v885
  %v887 = vlaneseq
  %v888 = vshrl.u32 %v887, 7
  %v889 = vsub.s32 %v886, %v888
  %v890 = vrot.slane %v876, %v889
  %v891 = vlaneseq
  %v892 = vshrl.u32 %v891, 7
  %v893 = vsub.s32 0, %v892
  %v894 = vrot.slane %v883, %v893
  %v895 = vlaneseq
  %v896 = vshrl.u32 %v895, 7
  %v897 = vsub.s32 0, %v896
  %v898 = vrot.slane %v890, %v897
  %899 = vrot.lane.b32.xlu0 %v894, 32
  %v900 = vpop.permute.xlu0 %899
  %901 = vrot.lane.b32.xlu0 %v898, 32
  %v902 = vpop.permute.xlu0 %901
  %905 = vst.msk [vmem:[#allocation3 + $0x6] sm:$0x1] %vm232, %v900
  %906 = vst.msk [vmem:[#allocation3 + $0xe] sm:$0x1] %vm232, %v902
  %v907 = vld [vmem:[#allocation2 + $0xe] sm:$0x3]
  %v908 = vpack.c.bf16 %v867, %v867
  %910 = vrot.lane.b32.xlu0 %v908, 32
  %v911 = vpop.permute.xlu0 %910
  %v913 = vsel %vm126, %v911, 0
  %915 = vmatprep.subr.bf16.mxu0 0
  %916 = vmatpush1.bf16.msra.mxu0 %v122
  %917 = vmatprep.subr.bf16.mxu0 0
  %918 = vmatpush1.bf16.msra.mxu0 %v123
  %919 = vmatprep.subr.bf16.mxu0 0
  %920 = vmatpush1.bf16.msra.mxu0 0
  %921 = vmatprep.subr.bf16.mxu0 0
  %922 = vmatpush1.bf16.msra.mxu0 0
  %923 = vmatprep.subr.bf16.mxu0 0
  %924 = vmatpush1.bf16.msra.mxu0 0
  %925 = vmatprep.subr.bf16.mxu0 0
  %926 = vmatpush1.bf16.msra.mxu0 0
  %927 = vmatprep.subr.bf16.mxu0 0
  %928 = vmatpush1.bf16.msra.mxu0 0
  %929 = vmatprep.subr.bf16.mxu0 0
  %930 = vmatpush1.bf16.msra.mxu0 0
  %931 = vmatprep.subr.bf16.mxu0 0
  %932 = vmatpush1.bf16.msra.mxu0 0
  %933 = vmatprep.subr.bf16.mxu0 0
  %934 = vmatpush1.bf16.msra.mxu0 0
  %935 = vmatprep.subr.bf16.mxu0 0
  %936 = vmatpush1.bf16.msra.mxu0 0
  %937 = vmatprep.subr.bf16.mxu0 0
  %938 = vmatpush1.bf16.msra.mxu0 0
  %939 = vmatprep.subr.bf16.mxu0 0
  %940 = vmatpush1.bf16.msra.mxu0 0
  %941 = vmatprep.subr.bf16.mxu0 0
  %942 = vmatpush1.bf16.msra.mxu0 0
  %943 = vmatprep.subr.bf16.mxu0 0
  %944 = vmatpush1.bf16.msra.mxu0 0
  %945 = vmatprep.subr.bf16.mxu0 0
  %946 = vmatpush1.bf16.msra.mxu0 0
  %947 = vmatprep.mubr.bf16.mxu0 0
  %948 = vmatmul.mubr.bf16.gmra.mrb[0].mxu0 %v913
  %v949 = vpop.f32.mrb[0].mxu0
  %v950 = vadd.f32 0.0, %v949
  %v951 = vpop.f32.mrb[0].mxu0
  %v952 = vpop.f32.mrb[0].mxu0
  %v953 = vpop.f32.mrb[0].mxu0
  %954 = vdwg.mxu0
  %v955 = vadd.f32 %v907, %v950
  %v956 = vxor.u32 %v955, 2147483648
  %v957 = vmul.f32 %v956, 1.442695
  %v958 = vpow.pop %v957
  %v959 = vadd.f32 %v958, 1.0
  %v960 = vrcp.pop %v959
  %v961 = vmul.f32 1.0, %v960
  %v962 = vtanh.pop %v955
  %v963 = vmul.f32 %v961, %v861
  %965 = vrot.lane.b32.xlu0 %v962, 64
  %v966 = vpop.permute.xlu0 %965
  %v968 = vmul.f32 %v961, %v966
  %970 = vrot.lane.b32.xlu0 %v968, 32
  %v971 = vpop.permute.xlu0 %970
  %v973 = vadd.f32 %v963, %v971
  %v974 = vtanh.pop %v973
  %976 = vrot.lane.b32.xlu0 %v974, 64
  %v977 = vpop.permute.xlu0 %976
  %v979 = vmul.f32 %v961, %v977
  %v982 = vunpack.c.l.s4 1966171168
  %v983 = vunpack.c.0.s8 %v982
  %v984 = vlaneseq
  %v985 = vshrl.u32 %v984, 7
  %v986 = vsub.s32 %v983, %v985
  %v987 = vrot.slane %v979, %v986
  %v988 = vcombine.high %v987, %v987
  %v990 = vunpack.c.l.s4 1966171168
  %v991 = vunpack.c.0.s8 %v990
  %v992 = vlaneseq
  %v993 = vshrl.u32 %v992, 7
  %v994 = vsub.s32 %v991, %v993
  %v995 = vrot.slane %v987, %v994
  %v997 = vunpack.c.l.s4 1966171168
  %v998 = vunpack.c.0.s8 %v997
  %v999 = vlaneseq
  %v1000 = vshrl.u32 %v999, 7
  %v1001 = vsub.s32 %v998, %v1000
  %v1002 = vrot.slane %v988, %v1001
  %v1003 = vlaneseq
  %v1004 = vshrl.u32 %v1003, 7
  %v1005 = vsub.s32 0, %v1004
  %v1006 = vrot.slane %v995, %v1005
  %v1007 = vlaneseq
  %v1008 = vshrl.u32 %v1007, 7
  %v1009 = vsub.s32 0, %v1008
  %v1010 = vrot.slane %v1002, %v1009
  %1011 = vrot.lane.b32.xlu0 %v1006, 32
  %v1012 = vpop.permute.xlu0 %1011
  %1013 = vrot.lane.b32.xlu0 %v1010, 32
  %v1014 = vpop.permute.xlu0 %1013
  %1017 = vst.msk [vmem:[#allocation3 + $0x7] sm:$0x1] %vm232, %v1012
  %1018 = vst.msk [vmem:[#allocation3 + $0xf] sm:$0x1] %vm232, %v1014
  %v1019 = vpack.c.bf16 %v979, %v979
  %1021 = vrot.lane.b32.xlu0 %v1019, 32
  %v1022 = vpop.permute.xlu0 %1021
  %v1027 = vunpack.c.l.b16 %v38
  %v1028 = vunpack.c.l.b16 %v39
  %v1029 = vunpack.c.l.b16 %v40
  %v1030 = vunpack.c.l.b16 %v41
  %v1031 = vpack.c.b16 %v1028, %v1027
  %v1032 = vpack.c.b16 %v1030, %v1029
  %v1036 = vsel %vm126, %v1022, 0
  %1038 = vmatprep.subr.bf16.mxu0 0
  %1039 = vmatpush1.bf16.msra.mxu0 %v1031
  %1040 = vmatprep.subr.bf16.mxu0 0
  %1041 = vmatpush1.bf16.msra.mxu0 %v1032
  %1042 = vmatprep.subr.bf16.mxu0 0
  %1043 = vmatpush1.bf16.msra.mxu0 0
  %1044 = vmatprep.subr.bf16.mxu0 0
  %1045 = vmatpush1.bf16.msra.mxu0 0
  %1046 = vmatprep.subr.bf16.mxu0 0
  %1047 = vmatpush1.bf16.msra.mxu0 0
  %1048 = vmatprep.subr.bf16.mxu0 0
  %1049 = vmatpush1.bf16.msra.mxu0 0
  %1050 = vmatprep.subr.bf16.mxu0 0
  %1051 = vmatpush1.bf16.msra.mxu0 0
  %1052 = vmatprep.subr.bf16.mxu0 0
  %1053 = vmatpush1.bf16.msra.mxu0 0
  %1054 = vmatprep.subr.bf16.mxu0 0
  %1055 = vmatpush1.bf16.msra.mxu0 0
  %1056 = vmatprep.subr.bf16.mxu0 0
  %1057 = vmatpush1.bf16.msra.mxu0 0
  %1058 = vmatprep.subr.bf16.mxu0 0
  %1059 = vmatpush1.bf16.msra.mxu0 0
  %1060 = vmatprep.subr.bf16.mxu0 0
  %1061 = vmatpush1.bf16.msra.mxu0 0
  %1062 = vmatprep.subr.bf16.mxu0 0
  %1063 = vmatpush1.bf16.msra.mxu0 0
  %1064 = vmatprep.subr.bf16.mxu0 0
  %1065 = vmatpush1.bf16.msra.mxu0 0
  %1066 = vmatprep.subr.bf16.mxu0 0
  %1067 = vmatpush1.bf16.msra.mxu0 0
  %1068 = vmatprep.subr.bf16.mxu0 0
  %1069 = vmatpush1.bf16.msra.mxu0 0
  %1070 = vmatprep.mubr.bf16.mxu0 0
  %1071 = vmatmul.mubr.bf16.gmra.mrb[0].mxu0 %v1036
  %v1072 = vpop.f32.mrb[0].mxu0
  %v1073 = vadd.f32 0.0, %v1072
  %v1074 = vpop.f32.mrb[0].mxu0
  %v1075 = vpop.f32.mrb[0].mxu0
  %v1076 = vpop.f32.mrb[0].mxu0
  %1077 = vdwg.mxu0
  %v1082 = vunpack.c.l.b16 %v34
  %v1083 = vunpack.c.l.b16 %v35
  %v1084 = vunpack.c.l.b16 %v36
  %v1085 = vunpack.c.l.b16 %v37
  %v1086 = vpack.c.b16 %v1083, %v1082
  %v1087 = vpack.c.b16 %v1085, %v1084
  %1090 = vmatprep.subr.bf16.mxu0 0
  %1091 = vmatpush1.bf16.msra.mxu0 %v1086
  %1092 = vmatprep.subr.bf16.mxu0 0
  %1093 = vmatpush1.bf16.msra.mxu0 %v1087
  %1094 = vmatprep.subr.bf16.mxu0 0
  %1095 = vmatpush1.bf16.msra.mxu0 0
  %1096 = vmatprep.subr.bf16.mxu0 0
  %1097 = vmatpush1.bf16.msra.mxu0 0
  %1098 = vmatprep.subr.bf16.mxu0 0
  %1099 = vmatpush1.bf16.msra.mxu0 0
  %1100 = vmatprep.subr.bf16.mxu0 0
  %1101 = vmatpush1.bf16.msra.mxu0 0
  %1102 = vmatprep.subr.bf16.mxu0 0
  %1103 = vmatpush1.bf16.msra.mxu0 0
  %1104 = vmatprep.subr.bf16.mxu0 0
  %1105 = vmatpush1.bf16.msra.mxu0 0
  %1106 = vmatprep.subr.bf16.mxu0 0
  %1107 = vmatpush1.bf16.msra.mxu0 0
  %1108 = vmatprep.subr.bf16.mxu0 0
  %1109 = vmatpush1.bf16.msra.mxu0 0
  %1110 = vmatprep.subr.bf16.mxu0 0
  %1111 = vmatpush1.bf16.msra.mxu0 0
  %1112 = vmatprep.subr.bf16.mxu0 0
  %1113 = vmatpush1.bf16.msra.mxu0 0
  %1114 = vmatprep.subr.bf16.mxu0 0
  %1115 = vmatpush1.bf16.msra.mxu0 0
  %1116 = vmatprep.subr.bf16.mxu0 0
  %1117 = vmatpush1.bf16.msra.mxu0 0
  %1118 = vmatprep.subr.bf16.mxu0 0
  %1119 = vmatpush1.bf16.msra.mxu0 0
  %1120 = vmatprep.subr.bf16.mxu0 0
  %1121 = vmatpush1.bf16.msra.mxu0 0
  %1122 = vmatprep.mubr.bf16.mxu0 0
  %1123 = vmatmul.mubr.bf16.gmra.mrb[0].mxu0 %v128
  %v1124 = vpop.f32.mrb[0].mxu0
  %v1125 = vadd.f32 %v1073, %v1124
  %v1126 = vpop.f32.mrb[0].mxu0
  %v1127 = vpop.f32.mrb[0].mxu0
  %v1128 = vpop.f32.mrb[0].mxu0
  %1129 = vdwg.mxu0
  %v1130 = vadd.f32 %v1125, %v47
  %v1131 = vxor.u32 %v1130, 2147483648
  %v1132 = vmul.f32 %v1131, 1.442695
  %v1133 = vpow.pop %v1132
  %v1134 = vadd.f32 %v1133, 1.0
  %v1135 = vrcp.pop %v1134
  %v1136 = vmul.f32 1.0, %v1135
  %v1137 = vtanh.pop %v1130
  %v1138 = vmul.f32 %v1136, %v973
  %1140 = vrot.lane.b32.xlu0 %v1137, 64
  %v1141 = vpop.permute.xlu0 %1140
  %v1143 = vmul.f32 %v1136, %v1141
  %1145 = vrot.lane.b32.xlu0 %v1143, 32
  %v1146 = vpop.permute.xlu0 %1145
  %v1148 = vadd.f32 %v1138, %v1146
  %v1149 = vtanh.pop %v1148
  %1151 = vrot.lane.b32.xlu0 %v1149, 64
  %v1152 = vpop.permute.xlu0 %1151
  %v1154 = vmul.f32 %v1136, %v1152
  %v1155 = vld [vmem:[#allocation3] sm:$0xff]
  %v1156 = vld [vmem:[#allocation3 + $0x8] sm:$0xff]
  %v1159 = vunpack.c.l.s4 1966171168
  %v1160 = vunpack.c.0.s8 %v1159
  %v1161 = vlaneseq
  %v1162 = vshrl.u32 %v1161, 7
  %v1163 = vsub.s32 %v1160, %v1162
  %v1164 = vrot.slane %v1154, %v1163
  %v1165 = vcombine.high %v1164, %v1164
  %v1167 = vunpack.c.l.s4 1966171168
  %v1168 = vunpack.c.0.s8 %v1167
  %v1169 = vlaneseq
  %v1170 = vshrl.u32 %v1169, 7
  %v1171 = vsub.s32 %v1168, %v1170
  %v1172 = vrot.slane %v1164, %v1171
  %v1174 = vunpack.c.l.s4 1966171168
  %v1175 = vunpack.c.0.s8 %v1174
  %v1176 = vlaneseq
  %v1177 = vshrl.u32 %v1176, 7
  %v1178 = vsub.s32 %v1175, %v1177
  %v1179 = vrot.slane %v1165, %v1178
  %v1180 = vlaneseq
  %v1181 = vshrl.u32 %v1180, 7
  %v1182 = vsub.s32 0, %v1181
  %v1183 = vrot.slane %v1172, %v1182
  %v1184 = vlaneseq
  %v1185 = vshrl.u32 %v1184, 7
  %v1186 = vsub.s32 0, %v1185
  %v1187 = vrot.slane %v1179, %v1186
  %1188 = vrot.lane.b32.xlu0 %v1183, 32
  %v1189 = vpop.permute.xlu0 %1188
  %1190 = vrot.lane.b32.xlu0 %v1187, 32
  %v1191 = vpop.permute.xlu0 %1190
  %v1194 = vmul.f32 %v1155, %v1189
  %v1195 = vmul.f32 %v1156, %v1191
  %v1196 = vsel %vm126, %v1194, 0.0
  %1197 = vadd.xlane.f32.xlu0 %v1196
  %v1198 = vpop.xlane.xlu0 %1197
  %v1199 = vsel %vm126, %v1195, 0.0
  %1200 = vadd.xlane.f32.xlu0 %v1199
  %v1201 = vpop.xlane.xlu0 %1200
  %vm1202 = vcmp.gt.f32.partialorder 0.0, 0.0
  %v1203 = vsel %vm1202, -1e+30, %v1198
  %v1204 = vsel %vm1202, -1e+30, %v1201
  %v1205 = vld [vmem:[%s1] sm:$0x3]
  %v1207 = vlaneseq
  %v1208 = vshrl.u32 %v1207, 7
  %v1209 = vsub.s32 0, %v1208
  %v1210 = vrot.slane %v1205, %v1209
  %1212 = vbcast.lane.b32.xlu0 %v1210, 256
  %v1213 = vpop.permute.xlu0 %1212
  %v1214 = vlaneseq
  %v1215 = vshrl.u32 %v1214, 7
  %v1216 = vsub.s32 1, %v1215
  %v1217 = vrot.slane %v1205, %v1216
  %1219 = vbcast.lane.b32.xlu0 %v1217, 256
  %v1220 = vpop.permute.xlu0 %1219
  %v1223 = vadd.f32 %v1203, %v1213
  %v1224 = vadd.f32 %v1204, %v1220
  %1227 = vset.pattern.permute.xlu0 0
  %1228 = vperm.xlu0 %1227, %v1223
  %v1229 = vpop.permute.xlu0 %1228
  %1230 = vset.pattern.permute.xlu0 0
  %1231 = vperm.xlu0 %1230, %v1224
  %v1232 = vpop.permute.xlu0 %1231
  %v1233 = vlaneseq
  %v1234 = vshrl.u32 %v1233, 7
  %v1235 = vsub.s32 %v50, %v1234
  %v1236 = vrot.slane %v1229, %v1235
  %v1237 = vlaneseq
  %v1238 = vshrl.u32 %v1237, 7
  %v1239 = vsub.s32 %v50, %v1238
  %v1240 = vrot.slane %v1232, %v1239
  %vm1241 = vcmask 1041409
  %v1242 = vsel %vm1241, %v1240, %v1236
  %vm1244 = vcmask 58368
  %v1245 = vsel %vm1244, %v1242, -inf
  %1246 = vmax.xlane.f32.xlu0 %v1245
  %v1247 = vpop.xlane.xlu0 %1246
  %v1249 = vlaneseq
  %v1250 = vshrl.u32 %v1249, 7
  %v1251 = vsub.s32 0, %v1250
  %v1252 = vrot.slane %v1247, %v1251
  %v1253 = vlaneseq
  %v1254 = vshrl.u32 %v1253, 7
  %v1255 = vsub.s32 1, %v1254
  %v1256 = vrot.slane %v1247, %v1255
  %vm1259 = vcmp.ge.f32.partialorder %v1223, %v1252
  %vm1260 = vcmp.ge.f32.partialorder %v1224, %v1256
  %1262 = vbcast.lane.b32.xlu0 %v50, 256
  %v1263 = vpop.permute.xlu0 %1262
  %v1264 = vsel %vm1259, %v1263, 8
  %v1265 = vsel %vm1260, %v1263, 8
  %1266 = vset.pattern.permute.xlu0 0
  %1267 = vperm.xlu0 %1266, %v1264
  %v1268 = vpop.permute.xlu0 %1267
  %1269 = vset.pattern.permute.xlu0 0
  %1270 = vperm.xlu0 %1269, %v1265
  %v1271 = vpop.permute.xlu0 %1270
  %v1272 = vlaneseq
  %v1273 = vshrl.u32 %v1272, 7
  %v1274 = vsub.s32 %v50, %v1273
  %v1275 = vrot.slane %v1268, %v1274
  %v1276 = vlaneseq
  %v1277 = vshrl.u32 %v1276, 7
  %v1278 = vsub.s32 %v50, %v1277
  %v1279 = vrot.slane %v1271, %v1278
  %v1280 = vsel %vm1241, %v1279, %v1275
  %v1281 = vsel %vm1244, %v1280, 2147483647
  %v1282 = vand.u32 %v1281, 65535
  %v1283 = vshra.s32 %v1281, 16
  %v1284 = vcvt.s32.f32 %v1282
  %v1285 = vcvt.s32.f32 %v1283
  %1286 = vmin.xlane.f32.xlu0 %v1285
  %v1287 = vpop.xlane.xlu0 %1286
  %vm1288 = vcmp.eq.f32.partialorder %v1285, %v1287
  %v1289 = vsel %vm1288, %v1284, inf
  %1290 = vmin.xlane.f32.xlu0 %v1289
  %v1291 = vpop.xlane.xlu0 %1290
  %v1292 = vcvt.f32.s32 %v1291
  %v1293 = vcvt.f32.s32 %v1287
  %v1294 = vshll.u32 %v1293, 16
  %v1295 = vadd.s32 %v1294, %v1292
  %vm1296 = vcmp.eq.s32.totalorder %v50, %v1295
  %v1297 = vsel %vm1296, 1, 0
  %v1298 = vcvt.s32.f32 %v1297
  %v1299 = vmax.f32 %v1298, 0.0
  %v1300 = vlaneseq
  %v1301 = vshrl.u32 %v1300, 7
  %v1302 = vsub.s32 0, %v1301
  %v1303 = vrot.slane %v1298, %v1302
  %1305 = vbcast.lane.b32.xlu0 %v1303, 256
  %v1306 = vpop.permute.xlu0 %1305
  %v1307 = vlaneseq
  %v1308 = vshrl.u32 %v1307, 7
  %v1309 = vsub.s32 1, %v1308
  %v1310 = vrot.slane %v1298, %v1309
  %1312 = vbcast.lane.b32.xlu0 %v1310, 256
  %v1313 = vpop.permute.xlu0 %1312
  %v1314 = vmul.f32 %v1306, %v1155
  %v1315 = vmul.f32 %v1313, %v1156
  %v1316 = vsel %vm126, %v1314, 0.0
  %v1317 = vrot.slane %v1316, 4
  %v1318 = vadd.f32 %v1316, %v1317
  %v1319 = vrot.slane %v1318, 2
  %v1320 = vadd.f32 %v1318, %v1319
  %v1321 = vrot.slane %v1320, 1
  %v1322 = vadd.f32 %v1320, %v1321
  %v1323 = vsel %vm126, %v1315, 0.0
  %v1324 = vrot.slane %v1323, 4
  %v1325 = vadd.f32 %v1323, %v1324
  %v1326 = vrot.slane %v1325, 2
  %v1327 = vadd.f32 %v1325, %v1326
  %v1328 = vrot.slane %v1327, 1
  %v1329 = vadd.f32 %v1327, %v1328
  %v1330 = vlaneseq
  %v1331 = vshrl.u32 %v1330, 7
  %v1332 = vsub.s32 %v50, %v1331
  %v1333 = vrot.slane %v1295, %v1332
  %vm1334 = vcmask 8192
  %1335 = vst.msk [vmem:[%s8] sm:$0x1] %vm1334, %v1333
  %v1336 = vpack.c.bf16 %v1322, %v1322
  %v1337 = vpack.c.bf16 %v1329, %v1329
  %v1338 = vpack.c.bf16 %v1154, %v1154
  %1340 = vrot.lane.b32.xlu0 %v1338, 32
  %v1341 = vpop.permute.xlu0 %1340
  %v1343 = vsel %vm126, %v1341, 0
  %1345 = vmatprep.subr.bf16.mxu0 0
  %1346 = vmatpush1.bf16.msra.mxu0 %v1031
  %1347 = vmatprep.subr.bf16.mxu0 0
  %1348 = vmatpush1.bf16.msra.mxu0 %v1032
  %1349 = vmatprep.subr.bf16.mxu0 0
  %1350 = vmatpush1.bf16.msra.mxu0 0
  %1351 = vmatprep.subr.bf16.mxu0 0
  %1352 = vmatpush1.bf16.msra.mxu0 0
  %1353 = vmatprep.subr.bf16.mxu0 0
  %1354 = vmatpush1.bf16.msra.mxu0 0
  %1355 = vmatprep.subr.bf16.mxu0 0
  %1356 = vmatpush1.bf16.msra.mxu0 0
  %1357 = vmatprep.subr.bf16.mxu0 0
  %1358 = vmatpush1.bf16.msra.mxu0 0
  %1359 = vmatprep.subr.bf16.mxu0 0
  %1360 = vmatpush1.bf16.msra.mxu0 0
  %1361 = vmatprep.subr.bf16.mxu0 0
  %1362 = vmatpush1.bf16.msra.mxu0 0
  %1363 = vmatprep.subr.bf16.mxu0 0
  %1364 = vmatpush1.bf16.msra.mxu0 0
  %1365 = vmatprep.subr.bf16.mxu0 0
  %1366 = vmatpush1.bf16.msra.mxu0 0
  %1367 = vmatprep.subr.bf16.mxu0 0
  %1368 = vmatpush1.bf16.msra.mxu0 0
  %1369 = vmatprep.subr.bf16.mxu0 0
  %1370 = vmatpush1.bf16.msra.mxu0 0
  %1371 = vmatprep.subr.bf16.mxu0 0
  %1372 = vmatpush1.bf16.msra.mxu0 0
  %1373 = vmatprep.subr.bf16.mxu0 0
  %1374 = vmatpush1.bf16.msra.mxu0 0
  %1375 = vmatprep.subr.bf16.mxu0 0
  %1376 = vmatpush1.bf16.msra.mxu0 0
  %1377 = vmatprep.mubr.bf16.mxu0 0
  %1378 = vmatmul.mubr.bf16.gmra.mrb[0].mxu0 %v1343
  %v1379 = vpop.f32.mrb[0].mxu0
  %v1380 = vadd.f32 0.0, %v1379
  %v1381 = vpop.f32.mrb[0].mxu0
  %v1382 = vpop.f32.mrb[0].mxu0
  %v1383 = vpop.f32.mrb[0].mxu0
  %1384 = vdwg.mxu0
  %v1387 = vunpack.c.l.b16 %v1336
  %v1388 = vunpack.c.l.b16 %v1337
  %v1389 = vsel %vm1241, %v1388, %v1387
  %v1390 = vpack.c.b16 %v1389, %v1389
  %v1392 = vsel %vm126, %v1390, 0
  %1394 = vmatprep.subr.bf16.mxu0 0
  %1395 = vmatpush1.bf16.msra.mxu0 %v1086
  %1396 = vmatprep.subr.bf16.mxu0 0
  %1397 = vmatpush1.bf16.msra.mxu0 %v1087
  %1398 = vmatprep.subr.bf16.mxu0 0
  %1399 = vmatpush1.bf16.msra.mxu0 0
  %1400 = vmatprep.subr.bf16.mxu0 0
  %1401 = vmatpush1.bf16.msra.mxu0 0
  %1402 = vmatprep.subr.bf16.mxu0 0
  %1403 = vmatpush1.bf16.msra.mxu0 0
  %1404 = vmatprep.subr.bf16.mxu0 0
  %1405 = vmatpush1.bf16.msra.mxu0 0
  %1406 = vmatprep.subr.bf16.mxu0 0
  %1407 = vmatpush1.bf16.msra.mxu0 0
  %1408 = vmatprep.subr.bf16.mxu0 0
  %1409 = vmatpush1.bf16.msra.mxu0 0
  %1410 = vmatprep.subr.bf16.mxu0 0
  %1411 = vmatpush1.bf16.msra.mxu0 0
  %1412 = vmatprep.subr.bf16.mxu0 0
  %1413 = vmatpush1.bf16.msra.mxu0 0
  %1414 = vmatprep.subr.bf16.mxu0 0
  %1415 = vmatpush1.bf16.msra.mxu0 0
  %1416 = vmatprep.subr.bf16.mxu0 0
  %1417 = vmatpush1.bf16.msra.mxu0 0
  %1418 = vmatprep.subr.bf16.mxu0 0
  %1419 = vmatpush1.bf16.msra.mxu0 0
  %1420 = vmatprep.subr.bf16.mxu0 0
  %1421 = vmatpush1.bf16.msra.mxu0 0
  %1422 = vmatprep.subr.bf16.mxu0 0
  %1423 = vmatpush1.bf16.msra.mxu0 0
  %1424 = vmatprep.subr.bf16.mxu0 0
  %1425 = vmatpush1.bf16.msra.mxu0 0
  %1426 = vmatprep.mubr.bf16.mxu0 0
  %1427 = vmatmul.mubr.bf16.gmra.mrb[0].mxu0 %v1392
  %v1428 = vpop.f32.mrb[0].mxu0
  %v1429 = vadd.f32 %v1380, %v1428
  %v1430 = vpop.f32.mrb[0].mxu0
  %v1431 = vpop.f32.mrb[0].mxu0
  %v1432 = vpop.f32.mrb[0].mxu0
  %1433 = vdwg.mxu0
  %v1434 = vadd.f32 %v1429, %v47
  %v1435 = vxor.u32 %v1434, 2147483648
  %v1436 = vmul.f32 %v1435, 1.442695
  %v1437 = vpow.pop %v1436
  %v1438 = vadd.f32 %v1437, 1.0
  %v1439 = vrcp.pop %v1438
  %v1440 = vmul.f32 1.0, %v1439
  %v1441 = vtanh.pop %v1434
  %v1442 = vmul.f32 %v1440, %v1148
  %1444 = vrot.lane.b32.xlu0 %v1441, 64
  %v1445 = vpop.permute.xlu0 %1444
  %v1447 = vmul.f32 %v1440, %v1445
  %1449 = vrot.lane.b32.xlu0 %v1447, 32
  %v1450 = vpop.permute.xlu0 %1449
  %v1452 = vadd.f32 %v1442, %v1450
  %v1453 = vtanh.pop %v1452
  %1455 = vrot.lane.b32.xlu0 %v1453, 64
  %v1456 = vpop.permute.xlu0 %1455
  %v1458 = vmul.f32 %v1440, %v1456
  %v1459 = vld [vmem:[#allocation3] sm:$0xff]
  %v1460 = vld [vmem:[#allocation3 + $0x8] sm:$0xff]
  %v1463 = vunpack.c.l.s4 1966171168
  %v1464 = vunpack.c.0.s8 %v1463
  %v1465 = vlaneseq
  %v1466 = vshrl.u32 %v1465, 7
  %v1467 = vsub.s32 %v1464, %v1466
  %v1468 = vrot.slane %v1458, %v1467
  %v1469 = vcombine.high %v1468, %v1468
  %v1471 = vunpack.c.l.s4 1966171168
  %v1472 = vunpack.c.0.s8 %v1471
  %v1473 = vlaneseq
  %v1474 = vshrl.u32 %v1473, 7
  %v1475 = vsub.s32 %v1472, %v1474
  %v1476 = vrot.slane %v1468, %v1475
  %v1478 = vunpack.c.l.s4 1966171168
  %v1479 = vunpack.c.0.s8 %v1478
  %v1480 = vlaneseq
  %v1481 = vshrl.u32 %v1480, 7
  %v1482 = vsub.s32 %v1479, %v1481
  %v1483 = vrot.slane %v1469, %v1482
  %v1484 = vlaneseq
  %v1485 = vshrl.u32 %v1484, 7
  %v1486 = vsub.s32 0, %v1485
  %v1487 = vrot.slane %v1476, %v1486
  %v1488 = vlaneseq
  %v1489 = vshrl.u32 %v1488, 7
  %v1490 = vsub.s32 0, %v1489
  %v1491 = vrot.slane %v1483, %v1490
  %1492 = vrot.lane.b32.xlu0 %v1487, 32
  %v1493 = vpop.permute.xlu0 %1492
  %1494 = vrot.lane.b32.xlu0 %v1491, 32
  %v1495 = vpop.permute.xlu0 %1494
  %v1498 = vmul.f32 %v1459, %v1493
  %v1499 = vmul.f32 %v1460, %v1495
  %v1500 = vsel %vm126, %v1498, 0.0
  %1501 = vadd.xlane.f32.xlu0 %v1500
  %v1502 = vpop.xlane.xlu0 %1501
  %v1503 = vsel %vm126, %v1499, 0.0
  %1504 = vadd.xlane.f32.xlu0 %v1503
  %v1505 = vpop.xlane.xlu0 %1504
  %vm1506 = vcmp.gt.f32.partialorder %v1299, 0.0
  %v1509 = vlaneseq
  %v1510 = vshrl.u32 %v1509, 7
  %v1511 = vsub.s32 %v50, %v1510
  %v1512 = vrot.slane %v1502, %v1511
  %v1513 = vlaneseq
  %v1514 = vshrl.u32 %v1513, 7
  %v1515 = vsub.s32 %v50, %v1514
  %v1516 = vrot.slane %v1505, %v1515
  %v1517 = vsel %vm1241, %v1516, %v1512
  %v1519 = vsel %vm1506, -1e+30, %v1517
  %s1520 = scalar_lea.vmem %s1, 2
  %v1521 = vld [vmem:[%s1520] sm:$0x3]
  %v1522 = vadd.f32 %v1519, %v1521
  %v1523 = vsel %vm1244, %v1522, -inf
  %1524 = vmax.xlane.f32.xlu0 %v1523
  %v1525 = vpop.xlane.xlu0 %1524
  %vm1526 = vcmp.ge.f32.partialorder %v1522, %v1525
  %v1527 = vsel %vm1526, %v50, 8
  %v1528 = vsel %vm1244, %v1527, 2147483647
  %v1529 = vand.u32 %v1528, 65535
  %v1530 = vshra.s32 %v1528, 16
  %v1531 = vcvt.s32.f32 %v1529
  %v1532 = vcvt.s32.f32 %v1530
  %1533 = vmin.xlane.f32.xlu0 %v1532
  %v1534 = vpop.xlane.xlu0 %1533
  %vm1535 = vcmp.eq.f32.partialorder %v1532, %v1534
  %v1536 = vsel %vm1535, %v1531, inf
  %1537 = vmin.xlane.f32.xlu0 %v1536
  %v1538 = vpop.xlane.xlu0 %1537
  %v1539 = vcvt.f32.s32 %v1538
  %v1540 = vcvt.f32.s32 %v1534
  %v1541 = vshll.u32 %v1540, 16
  %v1542 = vadd.s32 %v1541, %v1539
  %vm1543 = vcmp.eq.s32.totalorder %v50, %v1542
  %v1544 = vsel %vm1543, 1, 0
  %v1545 = vcvt.s32.f32 %v1544
  %v1546 = vmax.f32 %v1299, %v1545
  %v1547 = vlaneseq
  %v1548 = vshrl.u32 %v1547, 7
  %v1549 = vsub.s32 0, %v1548
  %v1550 = vrot.slane %v1545, %v1549
  %1552 = vbcast.lane.b32.xlu0 %v1550, 256
  %v1553 = vpop.permute.xlu0 %1552
  %v1554 = vlaneseq
  %v1555 = vshrl.u32 %v1554, 7
  %v1556 = vsub.s32 1, %v1555
  %v1557 = vrot.slane %v1545, %v1556
  %1559 = vbcast.lane.b32.xlu0 %v1557, 256
  %v1560 = vpop.permute.xlu0 %1559
  %v1561 = vmul.f32 %v1553, %v1459
  %v1562 = vmul.f32 %v1560, %v1460
  %v1563 = vsel %vm126, %v1561, 0.0
  %v1564 = vrot.slane %v1563, 4
  %v1565 = vadd.f32 %v1563, %v1564
  %v1566 = vrot.slane %v1565, 2
  %v1567 = vadd.f32 %v1565, %v1566
  %v1568 = vrot.slane %v1567, 1
  %v1569 = vadd.f32 %v1567, %v1568
  %v1570 = vsel %vm126, %v1562, 0.0
  %v1571 = vrot.slane %v1570, 4
  %v1572 = vadd.f32 %v1570, %v1571
  %v1573 = vrot.slane %v1572, 2
  %v1574 = vadd.f32 %v1572, %v1573
  %v1575 = vrot.slane %v1574, 1
  %v1576 = vadd.f32 %v1574, %v1575
  %v1577 = vlaneseq
  %v1578 = vshrl.u32 %v1577, 7
  %v1579 = vsub.s32 %v50, %v1578
  %v1580 = vrot.slane %v1542, %v1579
  %1581 = vst.msk [vmem:[%s8 + $0x1] sm:$0x1] %vm1334, %v1580
  %v1582 = vpack.c.bf16 %v1569, %v1569
  %v1583 = vpack.c.bf16 %v1576, %v1576
  %v1584 = vpack.c.bf16 %v1458, %v1458
  %1586 = vrot.lane.b32.xlu0 %v1584, 32
  %v1587 = vpop.permute.xlu0 %1586
  %v1589 = vsel %vm126, %v1587, 0
  %1591 = vmatprep.subr.bf16.mxu0 0
  %1592 = vmatpush1.bf16.msra.mxu0 %v1031
  %1593 = vmatprep.subr.bf16.mxu0 0
  %1594 = vmatpush1.bf16.msra.mxu0 %v1032
  %1595 = vmatprep.subr.bf16.mxu0 0
  %1596 = vmatpush1.bf16.msra.mxu0 0
  %1597 = vmatprep.subr.bf16.mxu0 0
  %1598 = vmatpush1.bf16.msra.mxu0 0
  %1599 = vmatprep.subr.bf16.mxu0 0
  %1600 = vmatpush1.bf16.msra.mxu0 0
  %1601 = vmatprep.subr.bf16.mxu0 0
  %1602 = vmatpush1.bf16.msra.mxu0 0
  %1603 = vmatprep.subr.bf16.mxu0 0
  %1604 = vmatpush1.bf16.msra.mxu0 0
  %1605 = vmatprep.subr.bf16.mxu0 0
  %1606 = vmatpush1.bf16.msra.mxu0 0
  %1607 = vmatprep.subr.bf16.mxu0 0
  %1608 = vmatpush1.bf16.msra.mxu0 0
  %1609 = vmatprep.subr.bf16.mxu0 0
  %1610 = vmatpush1.bf16.msra.mxu0 0
  %1611 = vmatprep.subr.bf16.mxu0 0
  %1612 = vmatpush1.bf16.msra.mxu0 0
  %1613 = vmatprep.subr.bf16.mxu0 0
  %1614 = vmatpush1.bf16.msra.mxu0 0
  %1615 = vmatprep.subr.bf16.mxu0 0
  %1616 = vmatpush1.bf16.msra.mxu0 0
  %1617 = vmatprep.subr.bf16.mxu0 0
  %1618 = vmatpush1.bf16.msra.mxu0 0
  %1619 = vmatprep.subr.bf16.mxu0 0
  %1620 = vmatpush1.bf16.msra.mxu0 0
  %1621 = vmatprep.subr.bf16.mxu0 0
  %1622 = vmatpush1.bf16.msra.mxu0 0
  %1623 = vmatprep.mubr.bf16.mxu0 0
  %1624 = vmatmul.mubr.bf16.gmra.mrb[0].mxu0 %v1589
  %v1625 = vpop.f32.mrb[0].mxu0
  %v1626 = vadd.f32 0.0, %v1625
  %v1627 = vpop.f32.mrb[0].mxu0
  %v1628 = vpop.f32.mrb[0].mxu0
  %v1629 = vpop.f32.mrb[0].mxu0
  %1630 = vdwg.mxu0
  %v1633 = vunpack.c.l.b16 %v1582
  %v1634 = vunpack.c.l.b16 %v1583
  %v1635 = vsel %vm1241, %v1634, %v1633
  %v1636 = vpack.c.b16 %v1635, %v1635
  %v1638 = vsel %vm126, %v1636, 0
  %1640 = vmatprep.subr.bf16.mxu0 0
  %1641 = vmatpush1.bf16.msra.mxu0 %v1086
  %1642 = vmatprep.subr.bf16.mxu0 0
  %1643 = vmatpush1.bf16.msra.mxu0 %v1087
  %1644 = vmatprep.subr.bf16.mxu0 0
  %1645 = vmatpush1.bf16.msra.mxu0 0
  %1646 = vmatprep.subr.bf16.mxu0 0
  %1647 = vmatpush1.bf16.msra.mxu0 0
  %1648 = vmatprep.subr.bf16.mxu0 0
  %1649 = vmatpush1.bf16.msra.mxu0 0
  %1650 = vmatprep.subr.bf16.mxu0 0
  %1651 = vmatpush1.bf16.msra.mxu0 0
  %1652 = vmatprep.subr.bf16.mxu0 0
  %1653 = vmatpush1.bf16.msra.mxu0 0
  %1654 = vmatprep.subr.bf16.mxu0 0
  %1655 = vmatpush1.bf16.msra.mxu0 0
  %1656 = vmatprep.subr.bf16.mxu0 0
  %1657 = vmatpush1.bf16.msra.mxu0 0
  %1658 = vmatprep.subr.bf16.mxu0 0
  %1659 = vmatpush1.bf16.msra.mxu0 0
  %1660 = vmatprep.subr.bf16.mxu0 0
  %1661 = vmatpush1.bf16.msra.mxu0 0
  %1662 = vmatprep.subr.bf16.mxu0 0
  %1663 = vmatpush1.bf16.msra.mxu0 0
  %1664 = vmatprep.subr.bf16.mxu0 0
  %1665 = vmatpush1.bf16.msra.mxu0 0
  %1666 = vmatprep.subr.bf16.mxu0 0
  %1667 = vmatpush1.bf16.msra.mxu0 0
  %1668 = vmatprep.subr.bf16.mxu0 0
  %1669 = vmatpush1.bf16.msra.mxu0 0
  %1670 = vmatprep.subr.bf16.mxu0 0
  %1671 = vmatpush1.bf16.msra.mxu0 0
  %1672 = vmatprep.mubr.bf16.mxu0 0
  %1673 = vmatmul.mubr.bf16.gmra.mrb[0].mxu0 %v1638
  %v1674 = vpop.f32.mrb[0].mxu0
  %v1675 = vadd.f32 %v1626, %v1674
  %v1676 = vpop.f32.mrb[0].mxu0
  %v1677 = vpop.f32.mrb[0].mxu0
  %v1678 = vpop.f32.mrb[0].mxu0
  %1679 = vdwg.mxu0
  %v1680 = vadd.f32 %v1675, %v47
  %v1681 = vxor.u32 %v1680, 2147483648
  %v1682 = vmul.f32 %v1681, 1.442695
  %v1683 = vpow.pop %v1682
  %v1684 = vadd.f32 %v1683, 1.0
  %v1685 = vrcp.pop %v1684
  %v1686 = vmul.f32 1.0, %v1685
  %v1687 = vtanh.pop %v1680
  %v1688 = vmul.f32 %v1686, %v1452
  %1690 = vrot.lane.b32.xlu0 %v1687, 64
  %v1691 = vpop.permute.xlu0 %1690
  %v1693 = vmul.f32 %v1686, %v1691
  %1695 = vrot.lane.b32.xlu0 %v1693, 32
  %v1696 = vpop.permute.xlu0 %1695
  %v1698 = vadd.f32 %v1688, %v1696
  %v1699 = vtanh.pop %v1698
  %1701 = vrot.lane.b32.xlu0 %v1699, 64
  %v1702 = vpop.permute.xlu0 %1701
  %v1704 = vmul.f32 %v1686, %v1702
  %v1705 = vld [vmem:[#allocation3] sm:$0xff]
  %v1706 = vld [vmem:[#allocation3 + $0x8] sm:$0xff]
  %v1709 = vunpack.c.l.s4 1966171168
  %v1710 = vunpack.c.0.s8 %v1709
  %v1711 = vlaneseq
  %v1712 = vshrl.u32 %v1711, 7
  %v1713 = vsub.s32 %v1710, %v1712
  %v1714 = vrot.slane %v1704, %v1713
  %v1715 = vcombine.high %v1714, %v1714
  %v1717 = vunpack.c.l.s4 1966171168
  %v1718 = vunpack.c.0.s8 %v1717
  %v1719 = vlaneseq
  %v1720 = vshrl.u32 %v1719, 7
  %v1721 = vsub.s32 %v1718, %v1720
  %v1722 = vrot.slane %v1714, %v1721
  %v1724 = vunpack.c.l.s4 1966171168
  %v1725 = vunpack.c.0.s8 %v1724
  %v1726 = vlaneseq
  %v1727 = vshrl.u32 %v1726, 7
  %v1728 = vsub.s32 %v1725, %v1727
  %v1729 = vrot.slane %v1715, %v1728
  %v1730 = vlaneseq
  %v1731 = vshrl.u32 %v1730, 7
  %v1732 = vsub.s32 0, %v1731
  %v1733 = vrot.slane %v1722, %v1732
  %v1734 = vlaneseq
  %v1735 = vshrl.u32 %v1734, 7
  %v1736 = vsub.s32 0, %v1735
  %v1737 = vrot.slane %v1729, %v1736
  %1738 = vrot.lane.b32.xlu0 %v1733, 32
  %v1739 = vpop.permute.xlu0 %1738
  %1740 = vrot.lane.b32.xlu0 %v1737, 32
  %v1741 = vpop.permute.xlu0 %1740
  %v1744 = vmul.f32 %v1705, %v1739
  %v1745 = vmul.f32 %v1706, %v1741
  %v1746 = vsel %vm126, %v1744, 0.0
  %1747 = vadd.xlane.f32.xlu0 %v1746
  %v1748 = vpop.xlane.xlu0 %1747
  %v1749 = vsel %vm126, %v1745, 0.0
  %1750 = vadd.xlane.f32.xlu0 %v1749
  %v1751 = vpop.xlane.xlu0 %1750
  %vm1752 = vcmp.gt.f32.partialorder %v1546, 0.0
  %v1755 = vlaneseq
  %v1756 = vshrl.u32 %v1755, 7
  %v1757 = vsub.s32 %v50, %v1756
  %v1758 = vrot.slane %v1748, %v1757
  %v1759 = vlaneseq
  %v1760 = vshrl.u32 %v1759, 7
  %v1761 = vsub.s32 %v50, %v1760
  %v1762 = vrot.slane %v1751, %v1761
  %v1763 = vsel %vm1241, %v1762, %v1758
  %v1765 = vsel %vm1752, -1e+30, %v1763
  %s1766 = scalar_lea.vmem %s1, 4
  %v1767 = vld [vmem:[%s1766] sm:$0x3]
  %v1768 = vadd.f32 %v1765, %v1767
  %v1769 = vsel %vm1244, %v1768, -inf
  %1770 = vmax.xlane.f32.xlu0 %v1769
  %v1771 = vpop.xlane.xlu0 %1770
  %vm1772 = vcmp.ge.f32.partialorder %v1768, %v1771
  %v1773 = vsel %vm1772, %v50, 8
  %v1774 = vsel %vm1244, %v1773, 2147483647
  %v1775 = vand.u32 %v1774, 65535
  %v1776 = vshra.s32 %v1774, 16
  %v1777 = vcvt.s32.f32 %v1775
  %v1778 = vcvt.s32.f32 %v1776
  %1779 = vmin.xlane.f32.xlu0 %v1778
  %v1780 = vpop.xlane.xlu0 %1779
  %vm1781 = vcmp.eq.f32.partialorder %v1778, %v1780
  %v1782 = vsel %vm1781, %v1777, inf
  %1783 = vmin.xlane.f32.xlu0 %v1782
  %v1784 = vpop.xlane.xlu0 %1783
  %v1785 = vcvt.f32.s32 %v1784
  %v1786 = vcvt.f32.s32 %v1780
  %v1787 = vshll.u32 %v1786, 16
  %v1788 = vadd.s32 %v1787, %v1785
  %vm1789 = vcmp.eq.s32.totalorder %v50, %v1788
  %v1790 = vsel %vm1789, 1, 0
  %v1791 = vcvt.s32.f32 %v1790
  %v1792 = vmax.f32 %v1546, %v1791
  %v1793 = vlaneseq
  %v1794 = vshrl.u32 %v1793, 7
  %v1795 = vsub.s32 0, %v1794
  %v1796 = vrot.slane %v1791, %v1795
  %1798 = vbcast.lane.b32.xlu0 %v1796, 256
  %v1799 = vpop.permute.xlu0 %1798
  %v1800 = vlaneseq
  %v1801 = vshrl.u32 %v1800, 7
  %v1802 = vsub.s32 1, %v1801
  %v1803 = vrot.slane %v1791, %v1802
  %1805 = vbcast.lane.b32.xlu0 %v1803, 256
  %v1806 = vpop.permute.xlu0 %1805
  %v1807 = vmul.f32 %v1799, %v1705
  %v1808 = vmul.f32 %v1806, %v1706
  %v1809 = vsel %vm126, %v1807, 0.0
  %v1810 = vrot.slane %v1809, 4
  %v1811 = vadd.f32 %v1809, %v1810
  %v1812 = vrot.slane %v1811, 2
  %v1813 = vadd.f32 %v1811, %v1812
  %v1814 = vrot.slane %v1813, 1
  %v1815 = vadd.f32 %v1813, %v1814
  %v1816 = vsel %vm126, %v1808, 0.0
  %v1817 = vrot.slane %v1816, 4
  %v1818 = vadd.f32 %v1816, %v1817
  %v1819 = vrot.slane %v1818, 2
  %v1820 = vadd.f32 %v1818, %v1819
  %v1821 = vrot.slane %v1820, 1
  %v1822 = vadd.f32 %v1820, %v1821
  %v1823 = vlaneseq
  %v1824 = vshrl.u32 %v1823, 7
  %v1825 = vsub.s32 %v50, %v1824
  %v1826 = vrot.slane %v1788, %v1825
  %1827 = vst.msk [vmem:[%s8 + $0x2] sm:$0x1] %vm1334, %v1826
  %v1828 = vpack.c.bf16 %v1815, %v1815
  %v1829 = vpack.c.bf16 %v1822, %v1822
  %v1830 = vpack.c.bf16 %v1704, %v1704
  %1832 = vrot.lane.b32.xlu0 %v1830, 32
  %v1833 = vpop.permute.xlu0 %1832
  %v1835 = vsel %vm126, %v1833, 0
  %1837 = vmatprep.subr.bf16.mxu0 0
  %1838 = vmatpush1.bf16.msra.mxu0 %v1031
  %1839 = vmatprep.subr.bf16.mxu0 0
  %1840 = vmatpush1.bf16.msra.mxu0 %v1032
  %1841 = vmatprep.subr.bf16.mxu0 0
  %1842 = vmatpush1.bf16.msra.mxu0 0
  %1843 = vmatprep.subr.bf16.mxu0 0
  %1844 = vmatpush1.bf16.msra.mxu0 0
  %1845 = vmatprep.subr.bf16.mxu0 0
  %1846 = vmatpush1.bf16.msra.mxu0 0
  %1847 = vmatprep.subr.bf16.mxu0 0
  %1848 = vmatpush1.bf16.msra.mxu0 0
  %1849 = vmatprep.subr.bf16.mxu0 0
  %1850 = vmatpush1.bf16.msra.mxu0 0
  %1851 = vmatprep.subr.bf16.mxu0 0
  %1852 = vmatpush1.bf16.msra.mxu0 0
  %1853 = vmatprep.subr.bf16.mxu0 0
  %1854 = vmatpush1.bf16.msra.mxu0 0
  %1855 = vmatprep.subr.bf16.mxu0 0
  %1856 = vmatpush1.bf16.msra.mxu0 0
  %1857 = vmatprep.subr.bf16.mxu0 0
  %1858 = vmatpush1.bf16.msra.mxu0 0
  %1859 = vmatprep.subr.bf16.mxu0 0
  %1860 = vmatpush1.bf16.msra.mxu0 0
  %1861 = vmatprep.subr.bf16.mxu0 0
  %1862 = vmatpush1.bf16.msra.mxu0 0
  %1863 = vmatprep.subr.bf16.mxu0 0
  %1864 = vmatpush1.bf16.msra.mxu0 0
  %1865 = vmatprep.subr.bf16.mxu0 0
  %1866 = vmatpush1.bf16.msra.mxu0 0
  %1867 = vmatprep.subr.bf16.mxu0 0
  %1868 = vmatpush1.bf16.msra.mxu0 0
  %1869 = vmatprep.mubr.bf16.mxu0 0
  %1870 = vmatmul.mubr.bf16.gmra.mrb[0].mxu0 %v1835
  %v1871 = vpop.f32.mrb[0].mxu0
  %v1872 = vadd.f32 0.0, %v1871
  %v1873 = vpop.f32.mrb[0].mxu0
  %v1874 = vpop.f32.mrb[0].mxu0
  %v1875 = vpop.f32.mrb[0].mxu0
  %1876 = vdwg.mxu0
  %v1879 = vunpack.c.l.b16 %v1828
  %v1880 = vunpack.c.l.b16 %v1829
  %v1881 = vsel %vm1241, %v1880, %v1879
  %v1882 = vpack.c.b16 %v1881, %v1881
  %v1884 = vsel %vm126, %v1882, 0
  %1886 = vmatprep.subr.bf16.mxu0 0
  %1887 = vmatpush1.bf16.msra.mxu0 %v1086
  %1888 = vmatprep.subr.bf16.mxu0 0
  %1889 = vmatpush1.bf16.msra.mxu0 %v1087
  %1890 = vmatprep.subr.bf16.mxu0 0
  %1891 = vmatpush1.bf16.msra.mxu0 0
  %1892 = vmatprep.subr.bf16.mxu0 0
  %1893 = vmatpush1.bf16.msra.mxu0 0
  %1894 = vmatprep.subr.bf16.mxu0 0
  %1895 = vmatpush1.bf16.msra.mxu0 0
  %1896 = vmatprep.subr.bf16.mxu0 0
  %1897 = vmatpush1.bf16.msra.mxu0 0
  %1898 = vmatprep.subr.bf16.mxu0 0
  %1899 = vmatpush1.bf16.msra.mxu0 0
  %1900 = vmatprep.subr.bf16.mxu0 0
  %1901 = vmatpush1.bf16.msra.mxu0 0
  %1902 = vmatprep.subr.bf16.mxu0 0
  %1903 = vmatpush1.bf16.msra.mxu0 0
  %1904 = vmatprep.subr.bf16.mxu0 0
  %1905 = vmatpush1.bf16.msra.mxu0 0
  %1906 = vmatprep.subr.bf16.mxu0 0
  %1907 = vmatpush1.bf16.msra.mxu0 0
  %1908 = vmatprep.subr.bf16.mxu0 0
  %1909 = vmatpush1.bf16.msra.mxu0 0
  %1910 = vmatprep.subr.bf16.mxu0 0
  %1911 = vmatpush1.bf16.msra.mxu0 0
  %1912 = vmatprep.subr.bf16.mxu0 0
  %1913 = vmatpush1.bf16.msra.mxu0 0
  %1914 = vmatprep.subr.bf16.mxu0 0
  %1915 = vmatpush1.bf16.msra.mxu0 0
  %1916 = vmatprep.subr.bf16.mxu0 0
  %1917 = vmatpush1.bf16.msra.mxu0 0
  %1918 = vmatprep.mubr.bf16.mxu0 0
  %1919 = vmatmul.mubr.bf16.gmra.mrb[0].mxu0 %v1884
  %v1920 = vpop.f32.mrb[0].mxu0
  %v1921 = vadd.f32 %v1872, %v1920
  %v1922 = vpop.f32.mrb[0].mxu0
  %v1923 = vpop.f32.mrb[0].mxu0
  %v1924 = vpop.f32.mrb[0].mxu0
  %1925 = vdwg.mxu0
  %v1926 = vadd.f32 %v1921, %v47
  %v1927 = vxor.u32 %v1926, 2147483648
  %v1928 = vmul.f32 %v1927, 1.442695
  %v1929 = vpow.pop %v1928
  %v1930 = vadd.f32 %v1929, 1.0
  %v1931 = vrcp.pop %v1930
  %v1932 = vmul.f32 1.0, %v1931
  %v1933 = vtanh.pop %v1926
  %v1934 = vmul.f32 %v1932, %v1698
  %1936 = vrot.lane.b32.xlu0 %v1933, 64
  %v1937 = vpop.permute.xlu0 %1936
  %v1939 = vmul.f32 %v1932, %v1937
  %1941 = vrot.lane.b32.xlu0 %v1939, 32
  %v1942 = vpop.permute.xlu0 %1941
  %v1944 = vadd.f32 %v1934, %v1942
  %v1945 = vtanh.pop %v1944
  %1947 = vrot.lane.b32.xlu0 %v1945, 64
  %v1948 = vpop.permute.xlu0 %1947
  %v1950 = vmul.f32 %v1932, %v1948
  %v1951 = vld [vmem:[#allocation3] sm:$0xff]
  %v1952 = vld [vmem:[#allocation3 + $0x8] sm:$0xff]
  %v1955 = vunpack.c.l.s4 1966171168
  %v1956 = vunpack.c.0.s8 %v1955
  %v1957 = vlaneseq
  %v1958 = vshrl.u32 %v1957, 7
  %v1959 = vsub.s32 %v1956, %v1958
  %v1960 = vrot.slane %v1950, %v1959
  %v1961 = vcombine.high %v1960, %v1960
  %v1963 = vunpack.c.l.s4 1966171168
  %v1964 = vunpack.c.0.s8 %v1963
  %v1965 = vlaneseq
  %v1966 = vshrl.u32 %v1965, 7
  %v1967 = vsub.s32 %v1964, %v1966
  %v1968 = vrot.slane %v1960, %v1967
  %v1970 = vunpack.c.l.s4 1966171168
  %v1971 = vunpack.c.0.s8 %v1970
  %v1972 = vlaneseq
  %v1973 = vshrl.u32 %v1972, 7
  %v1974 = vsub.s32 %v1971, %v1973
  %v1975 = vrot.slane %v1961, %v1974
  %v1976 = vlaneseq
  %v1977 = vshrl.u32 %v1976, 7
  %v1978 = vsub.s32 0, %v1977
  %v1979 = vrot.slane %v1968, %v1978
  %v1980 = vlaneseq
  %v1981 = vshrl.u32 %v1980, 7
  %v1982 = vsub.s32 0, %v1981
  %v1983 = vrot.slane %v1975, %v1982
  %1984 = vrot.lane.b32.xlu0 %v1979, 32
  %v1985 = vpop.permute.xlu0 %1984
  %1986 = vrot.lane.b32.xlu0 %v1983, 32
  %v1987 = vpop.permute.xlu0 %1986
  %v1990 = vmul.f32 %v1951, %v1985
  %v1991 = vmul.f32 %v1952, %v1987
  %v1992 = vsel %vm126, %v1990, 0.0
  %1993 = vadd.xlane.f32.xlu0 %v1992
  %v1994 = vpop.xlane.xlu0 %1993
  %v1995 = vsel %vm126, %v1991, 0.0
  %1996 = vadd.xlane.f32.xlu0 %v1995
  %v1997 = vpop.xlane.xlu0 %1996
  %vm1998 = vcmp.gt.f32.partialorder %v1792, 0.0
  %v2001 = vlaneseq
  %v2002 = vshrl.u32 %v2001, 7
  %v2003 = vsub.s32 %v50, %v2002
  %v2004 = vrot.slane %v1994, %v2003
  %v2005 = vlaneseq
  %v2006 = vshrl.u32 %v2005, 7
  %v2007 = vsub.s32 %v50, %v2006
  %v2008 = vrot.slane %v1997, %v2007
  %v2009 = vsel %vm1241, %v2008, %v2004
  %v2011 = vsel %vm1998, -1e+30, %v2009
  %s2012 = scalar_lea.vmem %s1, 6
  %v2013 = vld [vmem:[%s2012] sm:$0x3]
  %v2014 = vadd.f32 %v2011, %v2013
  %v2015 = vsel %vm1244, %v2014, -inf
  %2016 = vmax.xlane.f32.xlu0 %v2015
  %v2017 = vpop.xlane.xlu0 %2016
  %vm2018 = vcmp.ge.f32.partialorder %v2014, %v2017
  %v2019 = vsel %vm2018, %v50, 8
  %v2020 = vsel %vm1244, %v2019, 2147483647
  %v2021 = vand.u32 %v2020, 65535
  %v2022 = vshra.s32 %v2020, 16
  %v2023 = vcvt.s32.f32 %v2021
  %v2024 = vcvt.s32.f32 %v2022
  %2025 = vmin.xlane.f32.xlu0 %v2024
  %v2026 = vpop.xlane.xlu0 %2025
  %vm2027 = vcmp.eq.f32.partialorder %v2024, %v2026
  %v2028 = vsel %vm2027, %v2023, inf
  %2029 = vmin.xlane.f32.xlu0 %v2028
  %v2030 = vpop.xlane.xlu0 %2029
  %v2031 = vcvt.f32.s32 %v2030
  %v2032 = vcvt.f32.s32 %v2026
  %v2033 = vshll.u32 %v2032, 16
  %v2034 = vadd.s32 %v2033, %v2031
  %vm2035 = vcmp.eq.s32.totalorder %v50, %v2034
  %v2036 = vsel %vm2035, 1, 0
  %v2037 = vcvt.s32.f32 %v2036
  %v2038 = vmax.f32 %v1792, %v2037
  %v2039 = vlaneseq
  %v2040 = vshrl.u32 %v2039, 7
  %v2041 = vsub.s32 0, %v2040
  %v2042 = vrot.slane %v2037, %v2041
  %2044 = vbcast.lane.b32.xlu0 %v2042, 256
  %v2045 = vpop.permute.xlu0 %2044
  %v2046 = vlaneseq
  %v2047 = vshrl.u32 %v2046, 7
  %v2048 = vsub.s32 1, %v2047
  %v2049 = vrot.slane %v2037, %v2048
  %2051 = vbcast.lane.b32.xlu0 %v2049, 256
  %v2052 = vpop.permute.xlu0 %2051
  %v2053 = vmul.f32 %v2045, %v1951
  %v2054 = vmul.f32 %v2052, %v1952
  %v2055 = vsel %vm126, %v2053, 0.0
  %v2056 = vrot.slane %v2055, 4
  %v2057 = vadd.f32 %v2055, %v2056
  %v2058 = vrot.slane %v2057, 2
  %v2059 = vadd.f32 %v2057, %v2058
  %v2060 = vrot.slane %v2059, 1
  %v2061 = vadd.f32 %v2059, %v2060
  %v2062 = vsel %vm126, %v2054, 0.0
  %v2063 = vrot.slane %v2062, 4
  %v2064 = vadd.f32 %v2062, %v2063
  %v2065 = vrot.slane %v2064, 2
  %v2066 = vadd.f32 %v2064, %v2065
  %v2067 = vrot.slane %v2066, 1
  %v2068 = vadd.f32 %v2066, %v2067
  %v2069 = vlaneseq
  %v2070 = vshrl.u32 %v2069, 7
  %v2071 = vsub.s32 %v50, %v2070
  %v2072 = vrot.slane %v2034, %v2071
  %2073 = vst.msk [vmem:[%s8 + $0x3] sm:$0x1] %vm1334, %v2072
  %v2074 = vpack.c.bf16 %v2061, %v2061
  %v2075 = vpack.c.bf16 %v2068, %v2068
  %v2076 = vpack.c.bf16 %v1950, %v1950
  %2078 = vrot.lane.b32.xlu0 %v2076, 32
  %v2079 = vpop.permute.xlu0 %2078
  %v2081 = vsel %vm126, %v2079, 0
  %2083 = vmatprep.subr.bf16.mxu0 0
  %2084 = vmatpush1.bf16.msra.mxu0 %v1031
  %2085 = vmatprep.subr.bf16.mxu0 0
  %2086 = vmatpush1.bf16.msra.mxu0 %v1032
  %2087 = vmatprep.subr.bf16.mxu0 0
  %2088 = vmatpush1.bf16.msra.mxu0 0
  %2089 = vmatprep.subr.bf16.mxu0 0
  %2090 = vmatpush1.bf16.msra.mxu0 0
  %2091 = vmatprep.subr.bf16.mxu0 0
  %2092 = vmatpush1.bf16.msra.mxu0 0
  %2093 = vmatprep.subr.bf16.mxu0 0
  %2094 = vmatpush1.bf16.msra.mxu0 0
  %2095 = vmatprep.subr.bf16.mxu0 0
  %2096 = vmatpush1.bf16.msra.mxu0 0
  %2097 = vmatprep.subr.bf16.mxu0 0
  %2098 = vmatpush1.bf16.msra.mxu0 0
  %2099 = vmatprep.subr.bf16.mxu0 0
  %2100 = vmatpush1.bf16.msra.mxu0 0
  %2101 = vmatprep.subr.bf16.mxu0 0
  %2102 = vmatpush1.bf16.msra.mxu0 0
  %2103 = vmatprep.subr.bf16.mxu0 0
  %2104 = vmatpush1.bf16.msra.mxu0 0
  %2105 = vmatprep.subr.bf16.mxu0 0
  %2106 = vmatpush1.bf16.msra.mxu0 0
  %2107 = vmatprep.subr.bf16.mxu0 0
  %2108 = vmatpush1.bf16.msra.mxu0 0
  %2109 = vmatprep.subr.bf16.mxu0 0
  %2110 = vmatpush1.bf16.msra.mxu0 0
  %2111 = vmatprep.subr.bf16.mxu0 0
  %2112 = vmatpush1.bf16.msra.mxu0 0
  %2113 = vmatprep.subr.bf16.mxu0 0
  %2114 = vmatpush1.bf16.msra.mxu0 0
  %2115 = vmatprep.mubr.bf16.mxu0 0
  %2116 = vmatmul.mubr.bf16.gmra.mrb[0].mxu0 %v2081
  %v2117 = vpop.f32.mrb[0].mxu0
  %v2118 = vadd.f32 0.0, %v2117
  %v2119 = vpop.f32.mrb[0].mxu0
  %v2120 = vpop.f32.mrb[0].mxu0
  %v2121 = vpop.f32.mrb[0].mxu0
  %2122 = vdwg.mxu0
  %v2125 = vunpack.c.l.b16 %v2074
  %v2126 = vunpack.c.l.b16 %v2075
  %v2127 = vsel %vm1241, %v2126, %v2125
  %v2128 = vpack.c.b16 %v2127, %v2127
  %v2130 = vsel %vm126, %v2128, 0
  %2132 = vmatprep.subr.bf16.mxu0 0
  %2133 = vmatpush1.bf16.msra.mxu0 %v1086
  %2134 = vmatprep.subr.bf16.mxu0 0
  %2135 = vmatpush1.bf16.msra.mxu0 %v1087
  %2136 = vmatprep.subr.bf16.mxu0 0
  %2137 = vmatpush1.bf16.msra.mxu0 0
  %2138 = vmatprep.subr.bf16.mxu0 0
  %2139 = vmatpush1.bf16.msra.mxu0 0
  %2140 = vmatprep.subr.bf16.mxu0 0
  %2141 = vmatpush1.bf16.msra.mxu0 0
  %2142 = vmatprep.subr.bf16.mxu0 0
  %2143 = vmatpush1.bf16.msra.mxu0 0
  %2144 = vmatprep.subr.bf16.mxu0 0
  %2145 = vmatpush1.bf16.msra.mxu0 0
  %2146 = vmatprep.subr.bf16.mxu0 0
  %2147 = vmatpush1.bf16.msra.mxu0 0
  %2148 = vmatprep.subr.bf16.mxu0 0
  %2149 = vmatpush1.bf16.msra.mxu0 0
  %2150 = vmatprep.subr.bf16.mxu0 0
  %2151 = vmatpush1.bf16.msra.mxu0 0
  %2152 = vmatprep.subr.bf16.mxu0 0
  %2153 = vmatpush1.bf16.msra.mxu0 0
  %2154 = vmatprep.subr.bf16.mxu0 0
  %2155 = vmatpush1.bf16.msra.mxu0 0
  %2156 = vmatprep.subr.bf16.mxu0 0
  %2157 = vmatpush1.bf16.msra.mxu0 0
  %2158 = vmatprep.subr.bf16.mxu0 0
  %2159 = vmatpush1.bf16.msra.mxu0 0
  %2160 = vmatprep.subr.bf16.mxu0 0
  %2161 = vmatpush1.bf16.msra.mxu0 0
  %2162 = vmatprep.subr.bf16.mxu0 0
  %2163 = vmatpush1.bf16.msra.mxu0 0
  %2164 = vmatprep.mubr.bf16.mxu0 0
  %2165 = vmatmul.mubr.bf16.gmra.mrb[0].mxu0 %v2130
  %v2166 = vpop.f32.mrb[0].mxu0
  %v2167 = vadd.f32 %v2118, %v2166
  %v2168 = vpop.f32.mrb[0].mxu0
  %v2169 = vpop.f32.mrb[0].mxu0
  %v2170 = vpop.f32.mrb[0].mxu0
  %2171 = vdwg.mxu0
  %v2172 = vadd.f32 %v2167, %v47
  %v2173 = vxor.u32 %v2172, 2147483648
  %v2174 = vmul.f32 %v2173, 1.442695
  %v2175 = vpow.pop %v2174
  %v2176 = vadd.f32 %v2175, 1.0
  %v2177 = vrcp.pop %v2176
  %v2178 = vmul.f32 1.0, %v2177
  %v2179 = vtanh.pop %v2172
  %v2180 = vmul.f32 %v2178, %v1944
  %2182 = vrot.lane.b32.xlu0 %v2179, 64
  %v2183 = vpop.permute.xlu0 %2182
  %v2185 = vmul.f32 %v2178, %v2183
  %2187 = vrot.lane.b32.xlu0 %v2185, 32
  %v2188 = vpop.permute.xlu0 %2187
  %v2190 = vadd.f32 %v2180, %v2188
  %v2191 = vtanh.pop %v2190
  %2193 = vrot.lane.b32.xlu0 %v2191, 64
  %v2194 = vpop.permute.xlu0 %2193
  %v2196 = vmul.f32 %v2178, %v2194
  %v2197 = vld [vmem:[#allocation3] sm:$0xff]
  %v2198 = vld [vmem:[#allocation3 + $0x8] sm:$0xff]
  %v2201 = vunpack.c.l.s4 1966171168
  %v2202 = vunpack.c.0.s8 %v2201
  %v2203 = vlaneseq
  %v2204 = vshrl.u32 %v2203, 7
  %v2205 = vsub.s32 %v2202, %v2204
  %v2206 = vrot.slane %v2196, %v2205
  %v2207 = vcombine.high %v2206, %v2206
  %v2209 = vunpack.c.l.s4 1966171168
  %v2210 = vunpack.c.0.s8 %v2209
  %v2211 = vlaneseq
  %v2212 = vshrl.u32 %v2211, 7
  %v2213 = vsub.s32 %v2210, %v2212
  %v2214 = vrot.slane %v2206, %v2213
  %v2216 = vunpack.c.l.s4 1966171168
  %v2217 = vunpack.c.0.s8 %v2216
  %v2218 = vlaneseq
  %v2219 = vshrl.u32 %v2218, 7
  %v2220 = vsub.s32 %v2217, %v2219
  %v2221 = vrot.slane %v2207, %v2220
  %v2222 = vlaneseq
  %v2223 = vshrl.u32 %v2222, 7
  %v2224 = vsub.s32 0, %v2223
  %v2225 = vrot.slane %v2214, %v2224
  %v2226 = vlaneseq
  %v2227 = vshrl.u32 %v2226, 7
  %v2228 = vsub.s32 0, %v2227
  %v2229 = vrot.slane %v2221, %v2228
  %2230 = vrot.lane.b32.xlu0 %v2225, 32
  %v2231 = vpop.permute.xlu0 %2230
  %2232 = vrot.lane.b32.xlu0 %v2229, 32
  %v2233 = vpop.permute.xlu0 %2232
  %v2236 = vmul.f32 %v2197, %v2231
  %v2237 = vmul.f32 %v2198, %v2233
  %v2238 = vsel %vm126, %v2236, 0.0
  %2239 = vadd.xlane.f32.xlu0 %v2238
  %v2240 = vpop.xlane.xlu0 %2239
  %v2241 = vsel %vm126, %v2237, 0.0
  %2242 = vadd.xlane.f32.xlu0 %v2241
  %v2243 = vpop.xlane.xlu0 %2242
  %vm2244 = vcmp.gt.f32.partialorder %v2038, 0.0
  %v2247 = vlaneseq
  %v2248 = vshrl.u32 %v2247, 7
  %v2249 = vsub.s32 %v50, %v2248
  %v2250 = vrot.slane %v2240, %v2249
  %v2251 = vlaneseq
  %v2252 = vshrl.u32 %v2251, 7
  %v2253 = vsub.s32 %v50, %v2252
  %v2254 = vrot.slane %v2243, %v2253
  %v2255 = vsel %vm1241, %v2254, %v2250
  %v2257 = vsel %vm2244, -1e+30, %v2255
  %s2258 = scalar_lea.vmem %s1, 8
  %v2259 = vld [vmem:[%s2258] sm:$0x3]
  %v2260 = vadd.f32 %v2257, %v2259
  %v2261 = vsel %vm1244, %v2260, -inf
  %2262 = vmax.xlane.f32.xlu0 %v2261
  %v2263 = vpop.xlane.xlu0 %2262
  %vm2264 = vcmp.ge.f32.partialorder %v2260, %v2263
  %v2265 = vsel %vm2264, %v50, 8
  %v2266 = vsel %vm1244, %v2265, 2147483647
  %v2267 = vand.u32 %v2266, 65535
  %v2268 = vshra.s32 %v2266, 16
  %v2269 = vcvt.s32.f32 %v2267
  %v2270 = vcvt.s32.f32 %v2268
  %2271 = vmin.xlane.f32.xlu0 %v2270
  %v2272 = vpop.xlane.xlu0 %2271
  %vm2273 = vcmp.eq.f32.partialorder %v2270, %v2272
  %v2274 = vsel %vm2273, %v2269, inf
  %2275 = vmin.xlane.f32.xlu0 %v2274
  %v2276 = vpop.xlane.xlu0 %2275
  %v2277 = vcvt.f32.s32 %v2276
  %v2278 = vcvt.f32.s32 %v2272
  %v2279 = vshll.u32 %v2278, 16
  %v2280 = vadd.s32 %v2279, %v2277
  %vm2281 = vcmp.eq.s32.totalorder %v50, %v2280
  %v2282 = vsel %vm2281, 1, 0
  %v2283 = vcvt.s32.f32 %v2282
  %v2284 = vmax.f32 %v2038, %v2283
  %v2285 = vlaneseq
  %v2286 = vshrl.u32 %v2285, 7
  %v2287 = vsub.s32 0, %v2286
  %v2288 = vrot.slane %v2283, %v2287
  %2290 = vbcast.lane.b32.xlu0 %v2288, 256
  %v2291 = vpop.permute.xlu0 %2290
  %v2292 = vlaneseq
  %v2293 = vshrl.u32 %v2292, 7
  %v2294 = vsub.s32 1, %v2293
  %v2295 = vrot.slane %v2283, %v2294
  %2297 = vbcast.lane.b32.xlu0 %v2295, 256
  %v2298 = vpop.permute.xlu0 %2297
  %v2299 = vmul.f32 %v2291, %v2197
  %v2300 = vmul.f32 %v2298, %v2198
  %v2301 = vsel %vm126, %v2299, 0.0
  %v2302 = vrot.slane %v2301, 4
  %v2303 = vadd.f32 %v2301, %v2302
  %v2304 = vrot.slane %v2303, 2
  %v2305 = vadd.f32 %v2303, %v2304
  %v2306 = vrot.slane %v2305, 1
  %v2307 = vadd.f32 %v2305, %v2306
  %v2308 = vsel %vm126, %v2300, 0.0
  %v2309 = vrot.slane %v2308, 4
  %v2310 = vadd.f32 %v2308, %v2309
  %v2311 = vrot.slane %v2310, 2
  %v2312 = vadd.f32 %v2310, %v2311
  %v2313 = vrot.slane %v2312, 1
  %v2314 = vadd.f32 %v2312, %v2313
  %v2315 = vlaneseq
  %v2316 = vshrl.u32 %v2315, 7
  %v2317 = vsub.s32 %v50, %v2316
  %v2318 = vrot.slane %v2280, %v2317
  %2319 = vst.msk [vmem:[%s8 + $0x4] sm:$0x1] %vm1334, %v2318
  %v2320 = vpack.c.bf16 %v2307, %v2307
  %v2321 = vpack.c.bf16 %v2314, %v2314
  %v2322 = vpack.c.bf16 %v2196, %v2196
  %2324 = vrot.lane.b32.xlu0 %v2322, 32
  %v2325 = vpop.permute.xlu0 %2324
  %v2327 = vsel %vm126, %v2325, 0
  %2329 = vmatprep.subr.bf16.mxu0 0
  %2330 = vmatpush1.bf16.msra.mxu0 %v1031
  %2331 = vmatprep.subr.bf16.mxu0 0
  %2332 = vmatpush1.bf16.msra.mxu0 %v1032
  %2333 = vmatprep.subr.bf16.mxu0 0
  %2334 = vmatpush1.bf16.msra.mxu0 0
  %2335 = vmatprep.subr.bf16.mxu0 0
  %2336 = vmatpush1.bf16.msra.mxu0 0
  %2337 = vmatprep.subr.bf16.mxu0 0
  %2338 = vmatpush1.bf16.msra.mxu0 0
  %2339 = vmatprep.subr.bf16.mxu0 0
  %2340 = vmatpush1.bf16.msra.mxu0 0
  %2341 = vmatprep.subr.bf16.mxu0 0
  %2342 = vmatpush1.bf16.msra.mxu0 0
  %2343 = vmatprep.subr.bf16.mxu0 0
  %2344 = vmatpush1.bf16.msra.mxu0 0
  %2345 = vmatprep.subr.bf16.mxu0 0
  %2346 = vmatpush1.bf16.msra.mxu0 0
  %2347 = vmatprep.subr.bf16.mxu0 0
  %2348 = vmatpush1.bf16.msra.mxu0 0
  %2349 = vmatprep.subr.bf16.mxu0 0
  %2350 = vmatpush1.bf16.msra.mxu0 0
  %2351 = vmatprep.subr.bf16.mxu0 0
  %2352 = vmatpush1.bf16.msra.mxu0 0
  %2353 = vmatprep.subr.bf16.mxu0 0
  %2354 = vmatpush1.bf16.msra.mxu0 0
  %2355 = vmatprep.subr.bf16.mxu0 0
  %2356 = vmatpush1.bf16.msra.mxu0 0
  %2357 = vmatprep.subr.bf16.mxu0 0
  %2358 = vmatpush1.bf16.msra.mxu0 0
  %2359 = vmatprep.subr.bf16.mxu0 0
  %2360 = vmatpush1.bf16.msra.mxu0 0
  %2361 = vmatprep.mubr.bf16.mxu0 0
  %2362 = vmatmul.mubr.bf16.gmra.mrb[0].mxu0 %v2327
  %v2363 = vpop.f32.mrb[0].mxu0
  %v2364 = vadd.f32 0.0, %v2363
  %v2365 = vpop.f32.mrb[0].mxu0
  %v2366 = vpop.f32.mrb[0].mxu0
  %v2367 = vpop.f32.mrb[0].mxu0
  %2368 = vdwg.mxu0
  %v2371 = vunpack.c.l.b16 %v2320
  %v2372 = vunpack.c.l.b16 %v2321
  %v2373 = vsel %vm1241, %v2372, %v2371
  %v2374 = vpack.c.b16 %v2373, %v2373
  %v2376 = vsel %vm126, %v2374, 0
  %2378 = vmatprep.subr.bf16.mxu0 0
  %2379 = vmatpush1.bf16.msra.mxu0 %v1086
  %2380 = vmatprep.subr.bf16.mxu0 0
  %2381 = vmatpush1.bf16.msra.mxu0 %v1087
  %2382 = vmatprep.subr.bf16.mxu0 0
  %2383 = vmatpush1.bf16.msra.mxu0 0
  %2384 = vmatprep.subr.bf16.mxu0 0
  %2385 = vmatpush1.bf16.msra.mxu0 0
  %2386 = vmatprep.subr.bf16.mxu0 0
  %2387 = vmatpush1.bf16.msra.mxu0 0
  %2388 = vmatprep.subr.bf16.mxu0 0
  %2389 = vmatpush1.bf16.msra.mxu0 0
  %2390 = vmatprep.subr.bf16.mxu0 0
  %2391 = vmatpush1.bf16.msra.mxu0 0
  %2392 = vmatprep.subr.bf16.mxu0 0
  %2393 = vmatpush1.bf16.msra.mxu0 0
  %2394 = vmatprep.subr.bf16.mxu0 0
  %2395 = vmatpush1.bf16.msra.mxu0 0
  %2396 = vmatprep.subr.bf16.mxu0 0
  %2397 = vmatpush1.bf16.msra.mxu0 0
  %2398 = vmatprep.subr.bf16.mxu0 0
  %2399 = vmatpush1.bf16.msra.mxu0 0
  %2400 = vmatprep.subr.bf16.mxu0 0
  %2401 = vmatpush1.bf16.msra.mxu0 0
  %2402 = vmatprep.subr.bf16.mxu0 0
  %2403 = vmatpush1.bf16.msra.mxu0 0
  %2404 = vmatprep.subr.bf16.mxu0 0
  %2405 = vmatpush1.bf16.msra.mxu0 0
  %2406 = vmatprep.subr.bf16.mxu0 0
  %2407 = vmatpush1.bf16.msra.mxu0 0
  %2408 = vmatprep.subr.bf16.mxu0 0
  %2409 = vmatpush1.bf16.msra.mxu0 0
  %2410 = vmatprep.mubr.bf16.mxu0 0
  %2411 = vmatmul.mubr.bf16.gmra.mrb[0].mxu0 %v2376
  %v2412 = vpop.f32.mrb[0].mxu0
  %v2413 = vadd.f32 %v2364, %v2412
  %v2414 = vpop.f32.mrb[0].mxu0
  %v2415 = vpop.f32.mrb[0].mxu0
  %v2416 = vpop.f32.mrb[0].mxu0
  %2417 = vdwg.mxu0
  %v2418 = vadd.f32 %v2413, %v47
  %v2419 = vxor.u32 %v2418, 2147483648
  %v2420 = vmul.f32 %v2419, 1.442695
  %v2421 = vpow.pop %v2420
  %v2422 = vadd.f32 %v2421, 1.0
  %v2423 = vrcp.pop %v2422
  %v2424 = vmul.f32 1.0, %v2423
  %v2425 = vtanh.pop %v2418
  %v2426 = vmul.f32 %v2424, %v2190
  %2428 = vrot.lane.b32.xlu0 %v2425, 64
  %v2429 = vpop.permute.xlu0 %2428
  %v2431 = vmul.f32 %v2424, %v2429
  %2433 = vrot.lane.b32.xlu0 %v2431, 32
  %v2434 = vpop.permute.xlu0 %2433
  %v2436 = vadd.f32 %v2426, %v2434
  %v2437 = vtanh.pop %v2436
  %2439 = vrot.lane.b32.xlu0 %v2437, 64
  %v2440 = vpop.permute.xlu0 %2439
  %v2442 = vmul.f32 %v2424, %v2440
  %v2443 = vld [vmem:[#allocation3] sm:$0xff]
  %v2444 = vld [vmem:[#allocation3 + $0x8] sm:$0xff]
  %v2447 = vunpack.c.l.s4 1966171168
  %v2448 = vunpack.c.0.s8 %v2447
  %v2449 = vlaneseq
  %v2450 = vshrl.u32 %v2449, 7
  %v2451 = vsub.s32 %v2448, %v2450
  %v2452 = vrot.slane %v2442, %v2451
  %v2453 = vcombine.high %v2452, %v2452
  %v2455 = vunpack.c.l.s4 1966171168
  %v2456 = vunpack.c.0.s8 %v2455
  %v2457 = vlaneseq
  %v2458 = vshrl.u32 %v2457, 7
  %v2459 = vsub.s32 %v2456, %v2458
  %v2460 = vrot.slane %v2452, %v2459
  %v2462 = vunpack.c.l.s4 1966171168
  %v2463 = vunpack.c.0.s8 %v2462
  %v2464 = vlaneseq
  %v2465 = vshrl.u32 %v2464, 7
  %v2466 = vsub.s32 %v2463, %v2465
  %v2467 = vrot.slane %v2453, %v2466
  %v2468 = vlaneseq
  %v2469 = vshrl.u32 %v2468, 7
  %v2470 = vsub.s32 0, %v2469
  %v2471 = vrot.slane %v2460, %v2470
  %v2472 = vlaneseq
  %v2473 = vshrl.u32 %v2472, 7
  %v2474 = vsub.s32 0, %v2473
  %v2475 = vrot.slane %v2467, %v2474
  %2476 = vrot.lane.b32.xlu0 %v2471, 32
  %v2477 = vpop.permute.xlu0 %2476
  %2478 = vrot.lane.b32.xlu0 %v2475, 32
  %v2479 = vpop.permute.xlu0 %2478
  %v2482 = vmul.f32 %v2443, %v2477
  %v2483 = vmul.f32 %v2444, %v2479
  %v2484 = vsel %vm126, %v2482, 0.0
  %2485 = vadd.xlane.f32.xlu0 %v2484
  %v2486 = vpop.xlane.xlu0 %2485
  %v2487 = vsel %vm126, %v2483, 0.0
  %2488 = vadd.xlane.f32.xlu0 %v2487
  %v2489 = vpop.xlane.xlu0 %2488
  %vm2490 = vcmp.gt.f32.partialorder %v2284, 0.0
  %v2493 = vlaneseq
  %v2494 = vshrl.u32 %v2493, 7
  %v2495 = vsub.s32 %v50, %v2494
  %v2496 = vrot.slane %v2486, %v2495
  %v2497 = vlaneseq
  %v2498 = vshrl.u32 %v2497, 7
  %v2499 = vsub.s32 %v50, %v2498
  %v2500 = vrot.slane %v2489, %v2499
  %v2501 = vsel %vm1241, %v2500, %v2496
  %v2503 = vsel %vm2490, -1e+30, %v2501
  %s2504 = scalar_lea.vmem %s1, 10
  %v2505 = vld [vmem:[%s2504] sm:$0x3]
  %v2506 = vadd.f32 %v2503, %v2505
  %v2507 = vsel %vm1244, %v2506, -inf
  %2508 = vmax.xlane.f32.xlu0 %v2507
  %v2509 = vpop.xlane.xlu0 %2508
  %vm2510 = vcmp.ge.f32.partialorder %v2506, %v2509
  %v2511 = vsel %vm2510, %v50, 8
  %v2512 = vsel %vm1244, %v2511, 2147483647
  %v2513 = vand.u32 %v2512, 65535
  %v2514 = vshra.s32 %v2512, 16
  %v2515 = vcvt.s32.f32 %v2513
  %v2516 = vcvt.s32.f32 %v2514
  %2517 = vmin.xlane.f32.xlu0 %v2516
  %v2518 = vpop.xlane.xlu0 %2517
  %vm2519 = vcmp.eq.f32.partialorder %v2516, %v2518
  %v2520 = vsel %vm2519, %v2515, inf
  %2521 = vmin.xlane.f32.xlu0 %v2520
  %v2522 = vpop.xlane.xlu0 %2521
  %v2523 = vcvt.f32.s32 %v2522
  %v2524 = vcvt.f32.s32 %v2518
  %v2525 = vshll.u32 %v2524, 16
  %v2526 = vadd.s32 %v2525, %v2523
  %vm2527 = vcmp.eq.s32.totalorder %v50, %v2526
  %v2528 = vsel %vm2527, 1, 0
  %v2529 = vcvt.s32.f32 %v2528
  %v2530 = vmax.f32 %v2284, %v2529
  %v2531 = vlaneseq
  %v2532 = vshrl.u32 %v2531, 7
  %v2533 = vsub.s32 0, %v2532
  %v2534 = vrot.slane %v2529, %v2533
  %2536 = vbcast.lane.b32.xlu0 %v2534, 256
  %v2537 = vpop.permute.xlu0 %2536
  %v2538 = vlaneseq
  %v2539 = vshrl.u32 %v2538, 7
  %v2540 = vsub.s32 1, %v2539
  %v2541 = vrot.slane %v2529, %v2540
  %2543 = vbcast.lane.b32.xlu0 %v2541, 256
  %v2544 = vpop.permute.xlu0 %2543
  %v2545 = vmul.f32 %v2537, %v2443
  %v2546 = vmul.f32 %v2544, %v2444
  %v2547 = vsel %vm126, %v2545, 0.0
  %v2548 = vrot.slane %v2547, 4
  %v2549 = vadd.f32 %v2547, %v2548
  %v2550 = vrot.slane %v2549, 2
  %v2551 = vadd.f32 %v2549, %v2550
  %v2552 = vrot.slane %v2551, 1
  %v2553 = vadd.f32 %v2551, %v2552
  %v2554 = vsel %vm126, %v2546, 0.0
  %v2555 = vrot.slane %v2554, 4
  %v2556 = vadd.f32 %v2554, %v2555
  %v2557 = vrot.slane %v2556, 2
  %v2558 = vadd.f32 %v2556, %v2557
  %v2559 = vrot.slane %v2558, 1
  %v2560 = vadd.f32 %v2558, %v2559
  %v2561 = vlaneseq
  %v2562 = vshrl.u32 %v2561, 7
  %v2563 = vsub.s32 %v50, %v2562
  %v2564 = vrot.slane %v2526, %v2563
  %2565 = vst.msk [vmem:[%s8 + $0x5] sm:$0x1] %vm1334, %v2564
  %v2566 = vpack.c.bf16 %v2553, %v2553
  %v2567 = vpack.c.bf16 %v2560, %v2560
  %v2568 = vpack.c.bf16 %v2442, %v2442
  %2570 = vrot.lane.b32.xlu0 %v2568, 32
  %v2571 = vpop.permute.xlu0 %2570
  %v2573 = vsel %vm126, %v2571, 0
  %2575 = vmatprep.subr.bf16.mxu0 0
  %2576 = vmatpush1.bf16.msra.mxu0 %v1031
  %2577 = vmatprep.subr.bf16.mxu0 0
  %2578 = vmatpush1.bf16.msra.mxu0 %v1032
  %2579 = vmatprep.subr.bf16.mxu0 0
  %2580 = vmatpush1.bf16.msra.mxu0 0
  %2581 = vmatprep.subr.bf16.mxu0 0
  %2582 = vmatpush1.bf16.msra.mxu0 0
  %2583 = vmatprep.subr.bf16.mxu0 0
  %2584 = vmatpush1.bf16.msra.mxu0 0
  %2585 = vmatprep.subr.bf16.mxu0 0
  %2586 = vmatpush1.bf16.msra.mxu0 0
  %2587 = vmatprep.subr.bf16.mxu0 0
  %2588 = vmatpush1.bf16.msra.mxu0 0
  %2589 = vmatprep.subr.bf16.mxu0 0
  %2590 = vmatpush1.bf16.msra.mxu0 0
  %2591 = vmatprep.subr.bf16.mxu0 0
  %2592 = vmatpush1.bf16.msra.mxu0 0
  %2593 = vmatprep.subr.bf16.mxu0 0
  %2594 = vmatpush1.bf16.msra.mxu0 0
  %2595 = vmatprep.subr.bf16.mxu0 0
  %2596 = vmatpush1.bf16.msra.mxu0 0
  %2597 = vmatprep.subr.bf16.mxu0 0
  %2598 = vmatpush1.bf16.msra.mxu0 0
  %2599 = vmatprep.subr.bf16.mxu0 0
  %2600 = vmatpush1.bf16.msra.mxu0 0
  %2601 = vmatprep.subr.bf16.mxu0 0
  %2602 = vmatpush1.bf16.msra.mxu0 0
  %2603 = vmatprep.subr.bf16.mxu0 0
  %2604 = vmatpush1.bf16.msra.mxu0 0
  %2605 = vmatprep.subr.bf16.mxu0 0
  %2606 = vmatpush1.bf16.msra.mxu0 0
  %2607 = vmatprep.mubr.bf16.mxu0 0
  %2608 = vmatmul.mubr.bf16.gmra.mrb[0].mxu0 %v2573
  %v2609 = vpop.f32.mrb[0].mxu0
  %v2610 = vadd.f32 0.0, %v2609
  %v2611 = vpop.f32.mrb[0].mxu0
  %v2612 = vpop.f32.mrb[0].mxu0
  %v2613 = vpop.f32.mrb[0].mxu0
  %2614 = vdwg.mxu0
  %v2617 = vunpack.c.l.b16 %v2566
  %v2618 = vunpack.c.l.b16 %v2567
  %v2619 = vsel %vm1241, %v2618, %v2617
  %v2620 = vpack.c.b16 %v2619, %v2619
  %v2622 = vsel %vm126, %v2620, 0
  %2624 = vmatprep.subr.bf16.mxu0 0
  %2625 = vmatpush1.bf16.msra.mxu0 %v1086
  %2626 = vmatprep.subr.bf16.mxu0 0
  %2627 = vmatpush1.bf16.msra.mxu0 %v1087
  %2628 = vmatprep.subr.bf16.mxu0 0
  %2629 = vmatpush1.bf16.msra.mxu0 0
  %2630 = vmatprep.subr.bf16.mxu0 0
  %2631 = vmatpush1.bf16.msra.mxu0 0
  %2632 = vmatprep.subr.bf16.mxu0 0
  %2633 = vmatpush1.bf16.msra.mxu0 0
  %2634 = vmatprep.subr.bf16.mxu0 0
  %2635 = vmatpush1.bf16.msra.mxu0 0
  %2636 = vmatprep.subr.bf16.mxu0 0
  %2637 = vmatpush1.bf16.msra.mxu0 0
  %2638 = vmatprep.subr.bf16.mxu0 0
  %2639 = vmatpush1.bf16.msra.mxu0 0
  %2640 = vmatprep.subr.bf16.mxu0 0
  %2641 = vmatpush1.bf16.msra.mxu0 0
  %2642 = vmatprep.subr.bf16.mxu0 0
  %2643 = vmatpush1.bf16.msra.mxu0 0
  %2644 = vmatprep.subr.bf16.mxu0 0
  %2645 = vmatpush1.bf16.msra.mxu0 0
  %2646 = vmatprep.subr.bf16.mxu0 0
  %2647 = vmatpush1.bf16.msra.mxu0 0
  %2648 = vmatprep.subr.bf16.mxu0 0
  %2649 = vmatpush1.bf16.msra.mxu0 0
  %2650 = vmatprep.subr.bf16.mxu0 0
  %2651 = vmatpush1.bf16.msra.mxu0 0
  %2652 = vmatprep.subr.bf16.mxu0 0
  %2653 = vmatpush1.bf16.msra.mxu0 0
  %2654 = vmatprep.subr.bf16.mxu0 0
  %2655 = vmatpush1.bf16.msra.mxu0 0
  %2656 = vmatprep.mubr.bf16.mxu0 0
  %2657 = vmatmul.mubr.bf16.gmra.mrb[0].mxu0 %v2622
  %v2658 = vpop.f32.mrb[0].mxu0
  %v2659 = vadd.f32 %v2610, %v2658
  %v2660 = vpop.f32.mrb[0].mxu0
  %v2661 = vpop.f32.mrb[0].mxu0
  %v2662 = vpop.f32.mrb[0].mxu0
  %2663 = vdwg.mxu0
  %v2664 = vadd.f32 %v2659, %v47
  %v2665 = vxor.u32 %v2664, 2147483648
  %v2666 = vmul.f32 %v2665, 1.442695
  %v2667 = vpow.pop %v2666
  %v2668 = vadd.f32 %v2667, 1.0
  %v2669 = vrcp.pop %v2668
  %v2670 = vmul.f32 1.0, %v2669
  %v2671 = vtanh.pop %v2664
  %v2672 = vmul.f32 %v2670, %v2436
  %2674 = vrot.lane.b32.xlu0 %v2671, 64
  %v2675 = vpop.permute.xlu0 %2674
  %v2677 = vmul.f32 %v2670, %v2675
  %2679 = vrot.lane.b32.xlu0 %v2677, 32
  %v2680 = vpop.permute.xlu0 %2679
  %v2682 = vadd.f32 %v2672, %v2680
  %v2683 = vtanh.pop %v2682
  %2685 = vrot.lane.b32.xlu0 %v2683, 64
  %v2686 = vpop.permute.xlu0 %2685
  %v2688 = vmul.f32 %v2670, %v2686
  %v2689 = vld [vmem:[#allocation3] sm:$0xff]
  %v2690 = vld [vmem:[#allocation3 + $0x8] sm:$0xff]
  %v2693 = vunpack.c.l.s4 1966171168
  %v2694 = vunpack.c.0.s8 %v2693
  %v2695 = vlaneseq
  %v2696 = vshrl.u32 %v2695, 7
  %v2697 = vsub.s32 %v2694, %v2696
  %v2698 = vrot.slane %v2688, %v2697
  %v2699 = vcombine.high %v2698, %v2698
  %v2701 = vunpack.c.l.s4 1966171168
  %v2702 = vunpack.c.0.s8 %v2701
  %v2703 = vlaneseq
  %v2704 = vshrl.u32 %v2703, 7
  %v2705 = vsub.s32 %v2702, %v2704
  %v2706 = vrot.slane %v2698, %v2705
  %v2708 = vunpack.c.l.s4 1966171168
  %v2709 = vunpack.c.0.s8 %v2708
  %v2710 = vlaneseq
  %v2711 = vshrl.u32 %v2710, 7
  %v2712 = vsub.s32 %v2709, %v2711
  %v2713 = vrot.slane %v2699, %v2712
  %v2714 = vlaneseq
  %v2715 = vshrl.u32 %v2714, 7
  %v2716 = vsub.s32 0, %v2715
  %v2717 = vrot.slane %v2706, %v2716
  %v2718 = vlaneseq
  %v2719 = vshrl.u32 %v2718, 7
  %v2720 = vsub.s32 0, %v2719
  %v2721 = vrot.slane %v2713, %v2720
  %2722 = vrot.lane.b32.xlu0 %v2717, 32
  %v2723 = vpop.permute.xlu0 %2722
  %2724 = vrot.lane.b32.xlu0 %v2721, 32
  %v2725 = vpop.permute.xlu0 %2724
  %v2728 = vmul.f32 %v2689, %v2723
  %v2729 = vmul.f32 %v2690, %v2725
  %v2730 = vsel %vm126, %v2728, 0.0
  %2731 = vadd.xlane.f32.xlu0 %v2730
  %v2732 = vpop.xlane.xlu0 %2731
  %v2733 = vsel %vm126, %v2729, 0.0
  %2734 = vadd.xlane.f32.xlu0 %v2733
  %v2735 = vpop.xlane.xlu0 %2734
  %vm2736 = vcmp.gt.f32.partialorder %v2530, 0.0
  %v2739 = vlaneseq
  %v2740 = vshrl.u32 %v2739, 7
  %v2741 = vsub.s32 %v50, %v2740
  %v2742 = vrot.slane %v2732, %v2741
  %v2743 = vlaneseq
  %v2744 = vshrl.u32 %v2743, 7
  %v2745 = vsub.s32 %v50, %v2744
  %v2746 = vrot.slane %v2735, %v2745
  %v2747 = vsel %vm1241, %v2746, %v2742
  %v2749 = vsel %vm2736, -1e+30, %v2747
  %s2750 = scalar_lea.vmem %s1, 12
  %v2751 = vld [vmem:[%s2750] sm:$0x3]
  %v2752 = vadd.f32 %v2749, %v2751
  %v2753 = vsel %vm1244, %v2752, -inf
  %2754 = vmax.xlane.f32.xlu0 %v2753
  %v2755 = vpop.xlane.xlu0 %2754
  %vm2756 = vcmp.ge.f32.partialorder %v2752, %v2755
  %v2757 = vsel %vm2756, %v50, 8
  %v2758 = vsel %vm1244, %v2757, 2147483647
  %v2759 = vand.u32 %v2758, 65535
  %v2760 = vshra.s32 %v2758, 16
  %v2761 = vcvt.s32.f32 %v2759
  %v2762 = vcvt.s32.f32 %v2760
  %2763 = vmin.xlane.f32.xlu0 %v2762
  %v2764 = vpop.xlane.xlu0 %2763
  %vm2765 = vcmp.eq.f32.partialorder %v2762, %v2764
  %v2766 = vsel %vm2765, %v2761, inf
  %2767 = vmin.xlane.f32.xlu0 %v2766
  %v2768 = vpop.xlane.xlu0 %2767
  %v2769 = vcvt.f32.s32 %v2768
  %v2770 = vcvt.f32.s32 %v2764
  %v2771 = vshll.u32 %v2770, 16
  %v2772 = vadd.s32 %v2771, %v2769
  %vm2773 = vcmp.eq.s32.totalorder %v50, %v2772
  %v2774 = vsel %vm2773, 1, 0
  %v2775 = vcvt.s32.f32 %v2774
  %v2776 = vmax.f32 %v2530, %v2775
  %v2777 = vlaneseq
  %v2778 = vshrl.u32 %v2777, 7
  %v2779 = vsub.s32 0, %v2778
  %v2780 = vrot.slane %v2775, %v2779
  %2782 = vbcast.lane.b32.xlu0 %v2780, 256
  %v2783 = vpop.permute.xlu0 %2782
  %v2784 = vlaneseq
  %v2785 = vshrl.u32 %v2784, 7
  %v2786 = vsub.s32 1, %v2785
  %v2787 = vrot.slane %v2775, %v2786
  %2789 = vbcast.lane.b32.xlu0 %v2787, 256
  %v2790 = vpop.permute.xlu0 %2789
  %v2791 = vmul.f32 %v2783, %v2689
  %v2792 = vmul.f32 %v2790, %v2690
  %v2793 = vsel %vm126, %v2791, 0.0
  %v2794 = vrot.slane %v2793, 4
  %v2795 = vadd.f32 %v2793, %v2794
  %v2796 = vrot.slane %v2795, 2
  %v2797 = vadd.f32 %v2795, %v2796
  %v2798 = vrot.slane %v2797, 1
  %v2799 = vadd.f32 %v2797, %v2798
  %v2800 = vsel %vm126, %v2792, 0.0
  %v2801 = vrot.slane %v2800, 4
  %v2802 = vadd.f32 %v2800, %v2801
  %v2803 = vrot.slane %v2802, 2
  %v2804 = vadd.f32 %v2802, %v2803
  %v2805 = vrot.slane %v2804, 1
  %v2806 = vadd.f32 %v2804, %v2805
  %v2807 = vlaneseq
  %v2808 = vshrl.u32 %v2807, 7
  %v2809 = vsub.s32 %v50, %v2808
  %v2810 = vrot.slane %v2772, %v2809
  %2811 = vst.msk [vmem:[%s8 + $0x6] sm:$0x1] %vm1334, %v2810
  %v2812 = vpack.c.bf16 %v2799, %v2799
  %v2813 = vpack.c.bf16 %v2806, %v2806
  %v2814 = vpack.c.bf16 %v2688, %v2688
  %2816 = vrot.lane.b32.xlu0 %v2814, 32
  %v2817 = vpop.permute.xlu0 %2816
  %v2819 = vsel %vm126, %v2817, 0
  %2821 = vmatprep.subr.bf16.mxu0 0
  %2822 = vmatpush1.bf16.msra.mxu0 %v1031
  %2823 = vmatprep.subr.bf16.mxu0 0
  %2824 = vmatpush1.bf16.msra.mxu0 %v1032
  %2825 = vmatprep.subr.bf16.mxu0 0
  %2826 = vmatpush1.bf16.msra.mxu0 0
  %2827 = vmatprep.subr.bf16.mxu0 0
  %2828 = vmatpush1.bf16.msra.mxu0 0
  %2829 = vmatprep.subr.bf16.mxu0 0
  %2830 = vmatpush1.bf16.msra.mxu0 0
  %2831 = vmatprep.subr.bf16.mxu0 0
  %2832 = vmatpush1.bf16.msra.mxu0 0
  %2833 = vmatprep.subr.bf16.mxu0 0
  %2834 = vmatpush1.bf16.msra.mxu0 0
  %2835 = vmatprep.subr.bf16.mxu0 0
  %2836 = vmatpush1.bf16.msra.mxu0 0
  %2837 = vmatprep.subr.bf16.mxu0 0
  %2838 = vmatpush1.bf16.msra.mxu0 0
  %2839 = vmatprep.subr.bf16.mxu0 0
  %2840 = vmatpush1.bf16.msra.mxu0 0
  %2841 = vmatprep.subr.bf16.mxu0 0
  %2842 = vmatpush1.bf16.msra.mxu0 0
  %2843 = vmatprep.subr.bf16.mxu0 0
  %2844 = vmatpush1.bf16.msra.mxu0 0
  %2845 = vmatprep.subr.bf16.mxu0 0
  %2846 = vmatpush1.bf16.msra.mxu0 0
  %2847 = vmatprep.subr.bf16.mxu0 0
  %2848 = vmatpush1.bf16.msra.mxu0 0
  %2849 = vmatprep.subr.bf16.mxu0 0
  %2850 = vmatpush1.bf16.msra.mxu0 0
  %2851 = vmatprep.subr.bf16.mxu0 0
  %2852 = vmatpush1.bf16.msra.mxu0 0
  %2853 = vmatprep.mubr.bf16.mxu0 0
  %2854 = vmatmul.mubr.bf16.gmra.mrb[0].mxu0 %v2819
  %v2855 = vpop.f32.mrb[0].mxu0
  %v2856 = vadd.f32 0.0, %v2855
  %v2857 = vpop.f32.mrb[0].mxu0
  %v2858 = vpop.f32.mrb[0].mxu0
  %v2859 = vpop.f32.mrb[0].mxu0
  %2860 = vdwg.mxu0
  %v2863 = vunpack.c.l.b16 %v2812
  %v2864 = vunpack.c.l.b16 %v2813
  %v2865 = vsel %vm1241, %v2864, %v2863
  %v2866 = vpack.c.b16 %v2865, %v2865
  %v2868 = vsel %vm126, %v2866, 0
  %2870 = vmatprep.subr.bf16.mxu0 0
  %2871 = vmatpush1.bf16.msra.mxu0 %v1086
  %2872 = vmatprep.subr.bf16.mxu0 0
  %2873 = vmatpush1.bf16.msra.mxu0 %v1087
  %2874 = vmatprep.subr.bf16.mxu0 0
  %2875 = vmatpush1.bf16.msra.mxu0 0
  %2876 = vmatprep.subr.bf16.mxu0 0
  %2877 = vmatpush1.bf16.msra.mxu0 0
  %2878 = vmatprep.subr.bf16.mxu0 0
  %2879 = vmatpush1.bf16.msra.mxu0 0
  %2880 = vmatprep.subr.bf16.mxu0 0
  %2881 = vmatpush1.bf16.msra.mxu0 0
  %2882 = vmatprep.subr.bf16.mxu0 0
  %2883 = vmatpush1.bf16.msra.mxu0 0
  %2884 = vmatprep.subr.bf16.mxu0 0
  %2885 = vmatpush1.bf16.msra.mxu0 0
  %2886 = vmatprep.subr.bf16.mxu0 0
  %2887 = vmatpush1.bf16.msra.mxu0 0
  %2888 = vmatprep.subr.bf16.mxu0 0
  %2889 = vmatpush1.bf16.msra.mxu0 0
  %2890 = vmatprep.subr.bf16.mxu0 0
  %2891 = vmatpush1.bf16.msra.mxu0 0
  %2892 = vmatprep.subr.bf16.mxu0 0
  %2893 = vmatpush1.bf16.msra.mxu0 0
  %2894 = vmatprep.subr.bf16.mxu0 0
  %2895 = vmatpush1.bf16.msra.mxu0 0
  %2896 = vmatprep.subr.bf16.mxu0 0
  %2897 = vmatpush1.bf16.msra.mxu0 0
  %2898 = vmatprep.subr.bf16.mxu0 0
  %2899 = vmatpush1.bf16.msra.mxu0 0
  %2900 = vmatprep.subr.bf16.mxu0 0
  %2901 = vmatpush1.bf16.msra.mxu0 0
  %2902 = vmatprep.mubr.bf16.mxu0 0
  %2903 = vmatmul.mubr.bf16.gmra.mrb[0].mxu0 %v2868
  %v2904 = vpop.f32.mrb[0].mxu0
  %v2905 = vadd.f32 %v2856, %v2904
  %v2906 = vpop.f32.mrb[0].mxu0
  %v2907 = vpop.f32.mrb[0].mxu0
  %v2908 = vpop.f32.mrb[0].mxu0
  %2909 = vdwg.mxu0
  %v2910 = vadd.f32 %v2905, %v47
  %v2911 = vxor.u32 %v2910, 2147483648
  %v2912 = vmul.f32 %v2911, 1.442695
  %v2913 = vpow.pop %v2912
  %v2914 = vadd.f32 %v2913, 1.0
  %v2915 = vrcp.pop %v2914
  %v2916 = vmul.f32 1.0, %v2915
  %v2917 = vtanh.pop %v2910
  %v2918 = vmul.f32 %v2916, %v2682
  %2920 = vrot.lane.b32.xlu0 %v2917, 64
  %v2921 = vpop.permute.xlu0 %2920
  %v2923 = vmul.f32 %v2916, %v2921
  %2925 = vrot.lane.b32.xlu0 %v2923, 32
  %v2926 = vpop.permute.xlu0 %2925
  %v2928 = vadd.f32 %v2918, %v2926
  %v2929 = vtanh.pop %v2928
  %2931 = vrot.lane.b32.xlu0 %v2929, 64
  %v2932 = vpop.permute.xlu0 %2931
  %v2934 = vmul.f32 %v2916, %v2932
  %v2935 = vld [vmem:[#allocation3] sm:$0xff]
  %v2936 = vld [vmem:[#allocation3 + $0x8] sm:$0xff]
  %v2939 = vunpack.c.l.s4 1966171168
  %v2940 = vunpack.c.0.s8 %v2939
  %v2941 = vlaneseq
  %v2942 = vshrl.u32 %v2941, 7
  %v2943 = vsub.s32 %v2940, %v2942
  %v2944 = vrot.slane %v2934, %v2943
  %v2945 = vcombine.high %v2944, %v2944
  %v2947 = vunpack.c.l.s4 1966171168
  %v2948 = vunpack.c.0.s8 %v2947
  %v2949 = vlaneseq
  %v2950 = vshrl.u32 %v2949, 7
  %v2951 = vsub.s32 %v2948, %v2950
  %v2952 = vrot.slane %v2944, %v2951
  %v2954 = vunpack.c.l.s4 1966171168
  %v2955 = vunpack.c.0.s8 %v2954
  %v2956 = vlaneseq
  %v2957 = vshrl.u32 %v2956, 7
  %v2958 = vsub.s32 %v2955, %v2957
  %v2959 = vrot.slane %v2945, %v2958
  %v2960 = vlaneseq
  %v2961 = vshrl.u32 %v2960, 7
  %v2962 = vsub.s32 0, %v2961
  %v2963 = vrot.slane %v2952, %v2962
  %v2964 = vlaneseq
  %v2965 = vshrl.u32 %v2964, 7
  %v2966 = vsub.s32 0, %v2965
  %v2967 = vrot.slane %v2959, %v2966
  %2968 = vrot.lane.b32.xlu0 %v2963, 32
  %v2969 = vpop.permute.xlu0 %2968
  %2970 = vrot.lane.b32.xlu0 %v2967, 32
  %v2971 = vpop.permute.xlu0 %2970
  %v2974 = vmul.f32 %v2935, %v2969
  %v2975 = vmul.f32 %v2936, %v2971
  %v2976 = vsel %vm126, %v2974, 0.0
  %2977 = vadd.xlane.f32.xlu0 %v2976
  %v2978 = vpop.xlane.xlu0 %2977
  %v2979 = vsel %vm126, %v2975, 0.0
  %2980 = vadd.xlane.f32.xlu0 %v2979
  %v2981 = vpop.xlane.xlu0 %2980
  %vm2982 = vcmp.gt.f32.partialorder %v2776, 0.0
  %v2985 = vlaneseq
  %v2986 = vshrl.u32 %v2985, 7
  %v2987 = vsub.s32 %v50, %v2986
  %v2988 = vrot.slane %v2978, %v2987
  %v2989 = vlaneseq
  %v2990 = vshrl.u32 %v2989, 7
  %v2991 = vsub.s32 %v50, %v2990
  %v2992 = vrot.slane %v2981, %v2991
  %v2993 = vsel %vm1241, %v2992, %v2988
  %v2995 = vsel %vm2982, -1e+30, %v2993
  %s2996 = scalar_lea.vmem %s1, 14
  %v2997 = vld [vmem:[%s2996] sm:$0x3]
  %v2998 = vadd.f32 %v2995, %v2997
  %v2999 = vsel %vm1244, %v2998, -inf
  %3000 = vmax.xlane.f32.xlu0 %v2999
  %v3001 = vpop.xlane.xlu0 %3000
  %vm3002 = vcmp.ge.f32.partialorder %v2998, %v3001
  %v3003 = vsel %vm3002, %v50, 8
  %v3004 = vsel %vm1244, %v3003, 2147483647
  %v3005 = vand.u32 %v3004, 65535
  %v3006 = vshra.s32 %v3004, 16
  %v3007 = vcvt.s32.f32 %v3005
  %v3008 = vcvt.s32.f32 %v3006
  %3009 = vmin.xlane.f32.xlu0 %v3008
  %v3010 = vpop.xlane.xlu0 %3009
  %vm3011 = vcmp.eq.f32.partialorder %v3008, %v3010
  %v3012 = vsel %vm3011, %v3007, inf
  %3013 = vmin.xlane.f32.xlu0 %v3012
  %v3014 = vpop.xlane.xlu0 %3013
  %v3015 = vcvt.f32.s32 %v3014
  %v3016 = vcvt.f32.s32 %v3010
  %v3017 = vshll.u32 %v3016, 16
  %v3018 = vadd.s32 %v3017, %v3015
  %v3019 = vlaneseq
  %v3020 = vshrl.u32 %v3019, 7
  %v3021 = vsub.s32 %v50, %v3020
  %v3022 = vrot.slane %v3018, %v3021
  %3023 = vst.msk [vmem:[%s8 + $0x7] sm:$0x1] %vm1334, %v3022
  // Predicated region
  $region34: #{pointer_net_forward.1} parent=0 // pred_check
    _
  $region35: #{pointer_net_forward.1} parent=0 // pred_check_branch
    %3025 = sbr.rel (0) target = $region37
  $region36: #{pointer_net_forward.1} parent=0 // pred_region
    _
  $region37: #{pointer_net_forward.1} parent=0 // pred_fallthru
    _
  // Predicated region
  $region38: #{pointer_net_forward.1} parent=0 // pred_check
    _
  $region39: #{pointer_net_forward.1} parent=0 // pred_check_branch
    %3027 = sbr.rel (0) target = $region41
  $region40: #{pointer_net_forward.1} parent=0 // pred_region
    _
  $region41: #{pointer_net_forward.1} parent=0 // pred_fallthru
    _

</llo_original>
